<compile_context>
chip_gen: v6e
topology: v6e:2x2x1
jax: 0.10.0
libtpu: 0.0.40
codegen_flags: <defaults>
</compile_context>

<pallas_src>
import functools

import jax
import jax.numpy as jnp
from jax.experimental import pallas as pl
from jax.experimental.pallas import tpu as pltpu


def _round_up(x, m):
    return ((x + m - 1) // m) * m


# Tap groups: group g+1's im2col build overlaps group g's MXU GEMM.
_GROUPS = ((0, 14), (14, 27))


def _res_block_kernel(x_ref, w_ref, b_ref, mask_ref, o_ref, xcol_ref, *,
                      n_stages, C, P, K_total, shifts, col_off):
    """Fused ResidualConvBlock for one batch element.

    x_ref    : (C, P)  f32   zero-padded, flattened-spatial input
    w_ref    : (n_stages, C, K_total) bf16  group-packed per-stage weights
    b_ref    : (n_stages, C, 1) f32         per-stage bias
    mask_ref : (1, P)  f32   1.0 at interior voxels, 0.0 at halo/tail pad
    o_ref    : (C, P)  f32   output slab (interior extracted by wrapper)
    xcol_ref : (K_total, P) bf16  VMEM scratch for the im2col matrix
    """
    interior = mask_ref[...] > 0.0                      # (1, P) bool

    def stage(src, s):
        """One conv stage: rolls -> grouped GEMMs (interleaved) -> + bias."""
        w_s = w_ref[s]                                   # (C, K_total) bf16, tiny
        acc = None
        for g, (t_lo, t_hi) in enumerate(_GROUPS):
            base = col_off[g]
            cap = col_off[g + 1] if g + 1 < len(col_off) else K_total
            r = base
            t = t_lo
            while t < t_hi:
                if t + 1 < t_hi:
                    # Two taps packed into one full (2C, P) bf16 tile store:
                    # half the vst count vs per-tap f32 stores.
                    pair = jnp.concatenate(
                        [pltpu.roll(src, shifts[t], axis=1),
                         pltpu.roll(src, shifts[t + 1], axis=1)], axis=0)
                    xcol_ref[r:r + 2 * C, :] = pair.astype(jnp.bfloat16)
                    t += 2
                    r += 2 * C
                else:
                    rolled = pltpu.roll(src, shifts[t], axis=1)
                    if r + 2 * C <= cap:
                        # Duplicate the lone tap so the store stays a full,
                        # tile-aligned packed store; the GEMM below only reads
                        # the first copy (contraction width excludes the dup).
                        xcol_ref[r:r + 2 * C, :] = jnp.concatenate(
                            [rolled, rolled], axis=0).astype(jnp.bfloat16)
                    else:
                        xcol_ref[r:r + C, :] = rolled.astype(jnp.bfloat16)
                    t += 1
                    r += C
            # Group GEMM over exactly the rows written above (never padding):
            # (C, width) @ (width, P) -> (C, P), f32 accumulate on the MXU.
            width = (t_hi - t_lo) * C
            part = jnp.dot(w_s[:, base:base + width],
                           xcol_ref[base:base + width, :],
                           preferred_element_type=jnp.float32)
            acc = part if acc is None else acc + part
        return acc + b_ref[s]                            # (C,1) bias, VPU add

    # Stage 0 reads the input (halo already exact zeros from the wrapper pad).
    acc = stage(x_ref[...].astype(jnp.float32), 0)
    for s in range(1, n_stages):
        # Inter-stage ReLU + restore exact-zero 'SAME' halo for the next conv.
        acc = stage(jnp.where(interior, jnp.maximum(acc, 0.0), 0.0), s)
    # Residual add (re-read x_ref, keeps its live range short) + final ReLU.
    acc = acc + x_ref[...].astype(jnp.float32)
    o_ref[...] = jnp.maximum(acc, 0.0).astype(o_ref.dtype)


@jax.jit
def residual_conv_block(x_ncdhw, params):
    """Forward of ResidualConvBlock (normalization='none').

    x_ncdhw : (N, C, D, H, W)  (PyTorch NCDHW convention, kept end-to-end).
    params  : list of (w (3,3,3,cin,cout), b (cout,)) per stage.
    """
    N, C, D, H, W = x_ncdhw.shape
    n_stages = len(params)
    assert n_stages >= 1
    cout = params[0][0].shape[-1]
    assert C == cout, "residual add requires n_filters_in == n_filters_out"

    Cp = _round_up(C, 8)                        # sublane-aligned channel count
    Dp, Hp, Wp = D + 2, H + 2, W + 2
    P_raw = Dp * Hp * Wp
    P = _round_up(P_raw, 128)                   # lane-dense flattened spatial

    # Group layout along the contraction axis: each group's region starts at a
    # 128-aligned column/row offset; padding rows/cols are never touched.
    widths = [(hi - lo) * Cp for lo, hi in _GROUPS]
    col_off, off = [], 0
    for wdt in widths:
        col_off.append(off)
        off += _round_up(wdt, 128)
    K_total = off

    # ---- layout plumbing (plain XLA glue, done once for the whole block) ----
    x_p = jnp.pad(x_ncdhw.astype(jnp.float32),
                  ((0, 0), (0, Cp - C), (1, 1), (1, 1), (1, 1)))
    x_flat = jnp.pad(x_p.reshape(N, Cp, P_raw),
                     ((0, 0), (0, 0), (0, P - P_raw)))

    # weights: (3,3,3,cin,cout) -> (Cp, 27*Cp), split per tap group into a
    # group-padded (Cp, K_total) tile.  bf16 for the MXU's native path; the
    # accumulation stays f32 inside the kernel.  Bias stays f32.
    w_stages, b_stages = [], []
    for (w, b) in params:
        assert w.shape == (3, 3, 3, C, C) and b.shape == (C,)
        w_p = jnp.pad(w.astype(jnp.float32),
                      ((0, 0), (0, 0), (0, 0), (0, Cp - C), (0, Cp - C)))
        wt = jnp.transpose(w_p.reshape(27 * Cp, Cp))        # (Cp, 27*Cp)
        w_stage = jnp.zeros((Cp, K_total), jnp.float32)
        for g, (lo, hi) in enumerate(_GROUPS):
            w_stage = w_stage.at[:, col_off[g]:col_off[g] + (hi - lo) * Cp].set(
                wt[:, lo * Cp:hi * Cp])
        w_stages.append(w_stage)
        b_stages.append(jnp.pad(b.astype(jnp.float32),
                                (0, Cp - C)).reshape(Cp, 1))
    w_all = jnp.stack(w_stages).astype(jnp.bfloat16)   # (n_stages, Cp, K_total)
    b_all = jnp.stack(b_stages)                        # (n_stages, Cp, 1) f32

    # interior-voxel mask in the padded-flat index space.
    ids = jnp.arange(P)
    dpi = ids // (Hp * Wp)
    rem = ids % (Hp * Wp)
    hpi = rem // Wp
    wpi = rem % Wp
    interior = ((ids < P_raw)
                & (dpi >= 1) & (dpi <= D)
                & (hpi >= 1) & (hpi <= H)
                & (wpi >= 1) & (wpi <= W))
    mask = interior.astype(jnp.float32).reshape(1, P)

    # static lane shifts for the 27 taps (output voxel p reads input p + s).
    shifts = []
    for kd in range(3):
        for kh in range(3):
            for kw in range(3):
                s = (kd - 1) * (Hp * Wp) + (kh - 1) * Wp + (kw - 1)
                shifts.append((-s) % P)

    kernel = functools.partial(
        _res_block_kernel, n_stages=n_stages, C=Cp, P=P, K_total=K_total,
        shifts=tuple(shifts), col_off=tuple(col_off))

    out_flat = pl.pallas_call(
        kernel,
        out_shape=jax.ShapeDtypeStruct((N, Cp, P), jnp.float32),
        grid=(N,),
        in_specs=[
            pl.BlockSpec((None, Cp, P), lambda n: (n, 0, 0)),
            pl.BlockSpec((n_stages, Cp, K_total), lambda n: (0, 0, 0)),
            pl.BlockSpec((n_stages, Cp, 1), lambda n: (0, 0, 0)),
            pl.BlockSpec((1, P), lambda n: (0, 0)),
        ],
        out_specs=pl.BlockSpec((None, Cp, P), lambda n: (n, 0, 0)),
        scratch_shapes=[pltpu.VMEM((K_total, P), jnp.bfloat16)],
        compiler_params=pltpu.CompilerParams(
            dimension_semantics=("parallel",),
            vmem_limit_bytes=32 * 1024 * 1024),
    )(x_flat, w_all, b_all, mask)

    # drop tail pad + channel pad, keep interior voxels; already NCDHW.
    out = out_flat[:, :C, :P_raw].reshape(N, C, Dp, Hp, Wp)
    return out[:, :, 1:1 + D, 1:1 + H, 1:1 + W].astype(x_ncdhw.dtype)


def ref_residual_conv_block(x_ncdhw, params):
    """Pure-JAX reference (lax conv, f32) for correctness checking."""
    x = jnp.transpose(x_ncdhw, (0, 2, 3, 4, 1))
    h = x
    n_stages = len(params)
    for i, (w, b) in enumerate(params):
        h = jax.lax.conv_general_dilated(
            h, w, window_strides=(1, 1, 1), padding='SAME',
            dimension_numbers=('NDHWC', 'DHWIO', 'NDHWC')) + b
        if i != n_stages - 1:
            h = jax.nn.relu(h)
    h = jax.nn.relu(h + x)
    return jnp.transpose(h, (0, 4, 1, 2, 3))


if __name__ == "__main__":
    # Module config: n_stages=2, n_filters_in = n_filters_out = 4 (residual add
    # requires matching channel counts), normalization='none'.
    n_stages = 2
    n_filters_in = n_filters_out = 4
    N, D, H, W = 2, 8, 8, 8

    key = jax.random.PRNGKey(0)
    kx, *kp = jax.random.split(key, 1 + 2 * n_stages)

    x = jax.random.normal(kx, (N, n_filters_in, D, H, W), dtype=jnp.float32)

    params = []
    for i in range(n_stages):
        cin = n_filters_in if i == 0 else n_filters_out
        cout = n_filters_out
        fan_in = cin * 27
        bound = 1.0 / (fan_in ** 0.5)  # PyTorch Conv3d default init range
        w = jax.random.uniform(kp[2 * i], (3, 3, 3, cin, cout),
                               minval=-bound, maxval=bound, dtype=jnp.float32)
        b = jax.random.uniform(kp[2 * i + 1], (cout,),
                               minval=-bound, maxval=bound, dtype=jnp.float32)
        params.append((w, b))

    out = residual_conv_block(x, params)
    out = jax.block_until_ready(out)

    ref = ref_residual_conv_block(x, params)
    assert out.shape == (N, n_filters_out, D, H, W)
    # bf16 im2col/weights (f32 accumulation) -> tolerance loosened vs pure-f32.
    assert jnp.allclose(out, ref, atol=5e-2, rtol=5e-2), "mismatch vs reference"

    print("KERNEL_OK")
</pallas_src>

<mosaic_0001>
module attributes {stable_mosaic.version = 11 : i64} {
  func.func @_res_block_kernel(%arg0: i32, %arg1: memref<1x8x1024xf32, #tpu.memory_space<vmem>>, %arg2: memref<2x8x256xbf16, #tpu.memory_space<vmem>>, %arg3: memref<2x8x1xf32, #tpu.memory_space<vmem>>, %arg4: memref<1x1024xf32, #tpu.memory_space<vmem>>, %arg5: memref<1x8x1024xf32, #tpu.memory_space<vmem>>, %arg6: memref<256x1024xbf16, #tpu.memory_space<vmem>>) attributes {dimension_semantics = [#tpu.dimension_semantics<parallel>], iteration_bounds = array<i64: 2>, scalar_prefetch = 0 : i64, scratch_operands = 1 : i64, tpu.core_type = #tpu.core_type<tc>, window_params = [{transform_indices = @transform_0, window_bounds = array<i64: 1, 8, 1024>}, {pipeline_mode = #tpu.pipeline_mode<synchronous>, transform_indices = @transform_1, window_bounds = array<i64: 2, 8, 256>}, {pipeline_mode = #tpu.pipeline_mode<synchronous>, transform_indices = @transform_2, window_bounds = array<i64: 2, 8, 1>}, {pipeline_mode = #tpu.pipeline_mode<synchronous>, transform_indices = @transform_3, window_bounds = array<i64: 1, 1024>}, {transform_indices = @transform_4, window_bounds = array<i64: 1, 8, 1024>}]} {
    %c0 = arith.constant 0 : index
    %c0_0 = arith.constant 0 : index
    %0 = vector.load %arg4[%c0, %c0_0] : memref<1x1024xf32, #tpu.memory_space<vmem>>, vector<1x1024xf32>
    %cst = arith.constant 0.000000e+00 : f32
    %1 = vector.broadcast %cst : f32 to vector<1x1024xf32>
    %2 = arith.cmpf ogt, %0, %1 : vector<1x1024xf32>
    %c0_1 = arith.constant 0 : index
    %c0_2 = arith.constant 0 : index
    %c0_3 = arith.constant 0 : index
    %3 = vector.load %arg1[%c0_1, %c0_2, %c0_3] : memref<1x8x1024xf32, #tpu.memory_space<vmem>>, vector<1x8x1024xf32>
    %4 = vector.shape_cast %3 : vector<1x8x1024xf32> to vector<8x1024xf32>
    %c0_4 = arith.constant 0 : index
    %c0_5 = arith.constant 0 : index
    %c0_6 = arith.constant 0 : index
    %5 = vector.load %arg2[%c0_4, %c0_5, %c0_6] : memref<2x8x256xbf16, #tpu.memory_space<vmem>>, vector<1x8x256xbf16>
    %6 = vector.shape_cast %5 : vector<1x8x256xbf16> to vector<8x256xbf16>
    %c111_i32 = arith.constant 111 : i32
    %7 = tpu.dynamic_rotate %4 by %c111_i32 dim 1 : vector<8x1024xf32>, i32 -> vector<8x1024xf32>
    %c110_i32 = arith.constant 110 : i32
    %8 = tpu.dynamic_rotate %4 by %c110_i32 dim 1 : vector<8x1024xf32>, i32 -> vector<8x1024xf32>
    %9 = tpu.concatenate %7, %8 in 0 : vector<8x1024xf32>, vector<8x1024xf32> -> vector<16x1024xf32>
    %10 = arith.truncf %9 : vector<16x1024xf32> to vector<16x1024xbf16>
    %c0_7 = arith.constant 0 : index
    %c0_8 = arith.constant 0 : index
    %11 = vector.load %arg6[%c0_7, %c0_8] : memref<256x1024xbf16, #tpu.memory_space<vmem>>, vector<16x1024xbf16>
    tpu.vector_store %arg6[%c0_7, %c0_8], %10 {strides = array<i32>} : memref<256x1024xbf16, #tpu.memory_space<vmem>>, vector<16x1024xbf16>,
    %c109_i32 = arith.constant 109 : i32
    %12 = tpu.dynamic_rotate %4 by %c109_i32 dim 1 : vector<8x1024xf32>, i32 -> vector<8x1024xf32>
    %c101_i32 = arith.constant 101 : i32
    %13 = tpu.dynamic_rotate %4 by %c101_i32 dim 1 : vector<8x1024xf32>, i32 -> vector<8x1024xf32>
    %14 = tpu.concatenate %12, %13 in 0 : vector<8x1024xf32>, vector<8x1024xf32> -> vector<16x1024xf32>
    %15 = arith.truncf %14 : vector<16x1024xf32> to vector<16x1024xbf16>
    %c16 = arith.constant 16 : index
    %c0_9 = arith.constant 0 : index
    %16 = vector.load %arg6[%c16, %c0_9] : memref<256x1024xbf16, #tpu.memory_space<vmem>>, vector<16x1024xbf16>
    tpu.vector_store %arg6[%c16, %c0_9], %15 {strides = array<i32>} : memref<256x1024xbf16, #tpu.memory_space<vmem>>, vector<16x1024xbf16>,
    %c100_i32 = arith.constant 100 : i32
    %17 = tpu.dynamic_rotate %4 by %c100_i32 dim 1 : vector<8x1024xf32>, i32 -> vector<8x1024xf32>
    %c99_i32 = arith.constant 99 : i32
    %18 = tpu.dynamic_rotate %4 by %c99_i32 dim 1 : vector<8x1024xf32>, i32 -> vector<8x1024xf32>
    %19 = tpu.concatenate %17, %18 in 0 : vector<8x1024xf32>, vector<8x1024xf32> -> vector<16x1024xf32>
    %20 = arith.truncf %19 : vector<16x1024xf32> to vector<16x1024xbf16>
    %c32 = arith.constant 32 : index
    %c0_10 = arith.constant 0 : index
    %21 = vector.load %arg6[%c32, %c0_10] : memref<256x1024xbf16, #tpu.memory_space<vmem>>, vector<16x1024xbf16>
    tpu.vector_store %arg6[%c32, %c0_10], %20 {strides = array<i32>} : memref<256x1024xbf16, #tpu.memory_space<vmem>>, vector<16x1024xbf16>,
    %c91_i32 = arith.constant 91 : i32
    %22 = tpu.dynamic_rotate %4 by %c91_i32 dim 1 : vector<8x1024xf32>, i32 -> vector<8x1024xf32>
    %c90_i32 = arith.constant 90 : i32
    %23 = tpu.dynamic_rotate %4 by %c90_i32 dim 1 : vector<8x1024xf32>, i32 -> vector<8x1024xf32>
    %24 = tpu.concatenate %22, %23 in 0 : vector<8x1024xf32>, vector<8x1024xf32> -> vector<16x1024xf32>
    %25 = arith.truncf %24 : vector<16x1024xf32> to vector<16x1024xbf16>
    %c48 = arith.constant 48 : index
    %c0_11 = arith.constant 0 : index
    %26 = vector.load %arg6[%c48, %c0_11] : memref<256x1024xbf16, #tpu.memory_space<vmem>>, vector<16x1024xbf16>
    tpu.vector_store %arg6[%c48, %c0_11], %25 {strides = array<i32>} : memref<256x1024xbf16, #tpu.memory_space<vmem>>, vector<16x1024xbf16>,
    %c89_i32 = arith.constant 89 : i32
    %27 = tpu.dynamic_rotate %4 by %c89_i32 dim 1 : vector<8x1024xf32>, i32 -> vector<8x1024xf32>
    %c11_i32 = arith.constant 11 : i32
    %28 = tpu.dynamic_rotate %4 by %c11_i32 dim 1 : vector<8x1024xf32>, i32 -> vector<8x1024xf32>
    %29 = tpu.concatenate %27, %28 in 0 : vector<8x1024xf32>, vector<8x1024xf32> -> vector<16x1024xf32>
    %30 = arith.truncf %29 : vector<16x1024xf32> to vector<16x1024xbf16>
    %c64 = arith.constant 64 : index
    %c0_12 = arith.constant 0 : index
    %31 = vector.load %arg6[%c64, %c0_12] : memref<256x1024xbf16, #tpu.memory_space<vmem>>, vector<16x1024xbf16>
    tpu.vector_store %arg6[%c64, %c0_12], %30 {strides = array<i32>} : memref<256x1024xbf16, #tpu.memory_space<vmem>>, vector<16x1024xbf16>,
    %c10_i32 = arith.constant 10 : i32
    %32 = tpu.dynamic_rotate %4 by %c10_i32 dim 1 : vector<8x1024xf32>, i32 -> vector<8x1024xf32>
    %c9_i32 = arith.constant 9 : i32
    %33 = tpu.dynamic_rotate %4 by %c9_i32 dim 1 : vector<8x1024xf32>, i32 -> vector<8x1024xf32>
    %34 = tpu.concatenate %32, %33 in 0 : vector<8x1024xf32>, vector<8x1024xf32> -> vector<16x1024xf32>
    %35 = arith.truncf %34 : vector<16x1024xf32> to vector<16x1024xbf16>
    %c80 = arith.constant 80 : index
    %c0_13 = arith.constant 0 : index
    %36 = vector.load %arg6[%c80, %c0_13] : memref<256x1024xbf16, #tpu.memory_space<vmem>>, vector<16x1024xbf16>
    tpu.vector_store %arg6[%c80, %c0_13], %35 {strides = array<i32>} : memref<256x1024xbf16, #tpu.memory_space<vmem>>, vector<16x1024xbf16>,
    %c1_i32 = arith.constant 1 : i32
    %37 = tpu.dynamic_rotate %4 by %c1_i32 dim 1 : vector<8x1024xf32>, i32 -> vector<8x1024xf32>
    %c0_i32 = arith.constant 0 : i32
    %38 = tpu.dynamic_rotate %4 by %c0_i32 dim 1 : vector<8x1024xf32>, i32 -> vector<8x1024xf32>
    %39 = tpu.concatenate %37, %38 in 0 : vector<8x1024xf32>, vector<8x1024xf32> -> vector<16x1024xf32>
    %40 = arith.truncf %39 : vector<16x1024xf32> to vector<16x1024xbf16>
    %c96 = arith.constant 96 : index
    %c0_14 = arith.constant 0 : index
    %41 = vector.load %arg6[%c96, %c0_14] : memref<256x1024xbf16, #tpu.memory_space<vmem>>, vector<16x1024xbf16>
    tpu.vector_store %arg6[%c96, %c0_14], %40 {strides = array<i32>} : memref<256x1024xbf16, #tpu.memory_space<vmem>>, vector<16x1024xbf16>,
    %42 = vector.extract_strided_slice %6 {offsets = [0, 0], sizes = [8, 112], strides = [1, 1]} : vector<8x256xbf16> to vector<8x112xbf16>
    %c0_15 = arith.constant 0 : index
    %c0_16 = arith.constant 0 : index
    %43 = vector.load %arg6[%c0_15, %c0_16] : memref<256x1024xbf16, #tpu.memory_space<vmem>>, vector<112x1024xbf16>
    %cst_17 = arith.constant dense<0.000000e+00> : vector<8x1024xf32>
    %44 = tpu.matmul %42, %43, %cst_17 {dimension_numbers = #tpu.dot_dimension_numbers<[1], [0], [0], [1], [0, 0, 1, 1], [], []>} : vector<8x112xbf16>, vector<112x1024xbf16>, vector<8x1024xf32> -> vector<8x1024xf32>
    %c1023_i32 = arith.constant 1023 : i32
    %45 = tpu.dynamic_rotate %4 by %c1023_i32 dim 1 : vector<8x1024xf32>, i32 -> vector<8x1024xf32>
    %c1015_i32 = arith.constant 1015 : i32
    %46 = tpu.dynamic_rotate %4 by %c1015_i32 dim 1 : vector<8x1024xf32>, i32 -> vector<8x1024xf32>
    %47 = tpu.concatenate %45, %46 in 0 : vector<8x1024xf32>, vector<8x1024xf32> -> vector<16x1024xf32>
    %48 = arith.truncf %47 : vector<16x1024xf32> to vector<16x1024xbf16>
    %c128 = arith.constant 128 : index
    %c0_18 = arith.constant 0 : index
    %49 = vector.load %arg6[%c128, %c0_18] : memref<256x1024xbf16, #tpu.memory_space<vmem>>, vector<16x1024xbf16>
    tpu.vector_store %arg6[%c128, %c0_18], %48 {strides = array<i32>} : memref<256x1024xbf16, #tpu.memory_space<vmem>>, vector<16x1024xbf16>,
    %c1014_i32 = arith.constant 1014 : i32
    %50 = tpu.dynamic_rotate %4 by %c1014_i32 dim 1 : vector<8x1024xf32>, i32 -> vector<8x1024xf32>
    %c1013_i32 = arith.constant 1013 : i32
    %51 = tpu.dynamic_rotate %4 by %c1013_i32 dim 1 : vector<8x1024xf32>, i32 -> vector<8x1024xf32>
    %52 = tpu.concatenate %50, %51 in 0 : vector<8x1024xf32>, vector<8x1024xf32> -> vector<16x1024xf32>
    %53 = arith.truncf %52 : vector<16x1024xf32> to vector<16x1024xbf16>
    %c144 = arith.constant 144 : index
    %c0_19 = arith.constant 0 : index
    %54 = vector.load %arg6[%c144, %c0_19] : memref<256x1024xbf16, #tpu.memory_space<vmem>>, vector<16x1024xbf16>
    tpu.vector_store %arg6[%c144, %c0_19], %53 {strides = array<i32>} : memref<256x1024xbf16, #tpu.memory_space<vmem>>, vector<16x1024xbf16>,
    %c935_i32 = arith.constant 935 : i32
    %55 = tpu.dynamic_rotate %4 by %c935_i32 dim 1 : vector<8x1024xf32>, i32 -> vector<8x1024xf32>
    %c934_i32 = arith.constant 934 : i32
    %56 = tpu.dynamic_rotate %4 by %c934_i32 dim 1 : vector<8x1024xf32>, i32 -> vector<8x1024xf32>
    %57 = tpu.concatenate %55, %56 in 0 : vector<8x1024xf32>, vector<8x1024xf32> -> vector<16x1024xf32>
    %58 = arith.truncf %57 : vector<16x1024xf32> to vector<16x1024xbf16>
    %c160 = arith.constant 160 : index
    %c0_20 = arith.constant 0 : index
    %59 = vector.load %arg6[%c160, %c0_20] : memref<256x1024xbf16, #tpu.memory_space<vmem>>, vector<16x1024xbf16>
    tpu.vector_store %arg6[%c160, %c0_20], %58 {strides = array<i32>} : memref<256x1024xbf16, #tpu.memory_space<vmem>>, vector<16x1024xbf16>,
    %c933_i32 = arith.constant 933 : i32
    %60 = tpu.dynamic_rotate %4 by %c933_i32 dim 1 : vector<8x1024xf32>, i32 -> vector<8x1024xf32>
    %c925_i32 = arith.constant 925 : i32
    %61 = tpu.dynamic_rotate %4 by %c925_i32 dim 1 : vector<8x1024xf32>, i32 -> vector<8x1024xf32>
    %62 = tpu.concatenate %60, %61 in 0 : vector<8x1024xf32>, vector<8x1024xf32> -> vector<16x1024xf32>
    %63 = arith.truncf %62 : vector<16x1024xf32> to vector<16x1024xbf16>
    %c176 = arith.constant 176 : index
    %c0_21 = arith.constant 0 : index
    %64 = vector.load %arg6[%c176, %c0_21] : memref<256x1024xbf16, #tpu.memory_space<vmem>>, vector<16x1024xbf16>
    tpu.vector_store %arg6[%c176, %c0_21], %63 {strides = array<i32>} : memref<256x1024xbf16, #tpu.memory_space<vmem>>, vector<16x1024xbf16>,
    %c924_i32 = arith.constant 924 : i32
    %65 = tpu.dynamic_rotate %4 by %c924_i32 dim 1 : vector<8x1024xf32>, i32 -> vector<8x1024xf32>
    %c923_i32 = arith.constant 923 : i32
    %66 = tpu.dynamic_rotate %4 by %c923_i32 dim 1 : vector<8x1024xf32>, i32 -> vector<8x1024xf32>
    %67 = tpu.concatenate %65, %66 in 0 : vector<8x1024xf32>, vector<8x1024xf32> -> vector<16x1024xf32>
    %68 = arith.truncf %67 : vector<16x1024xf32> to vector<16x1024xbf16>
    %c192 = arith.constant 192 : index
    %c0_22 = arith.constant 0 : index
    %69 = vector.load %arg6[%c192, %c0_22] : memref<256x1024xbf16, #tpu.memory_space<vmem>>, vector<16x1024xbf16>
    tpu.vector_store %arg6[%c192, %c0_22], %68 {strides = array<i32>} : memref<256x1024xbf16, #tpu.memory_space<vmem>>, vector<16x1024xbf16>,
    %c915_i32 = arith.constant 915 : i32
    %70 = tpu.dynamic_rotate %4 by %c915_i32 dim 1 : vector<8x1024xf32>, i32 -> vector<8x1024xf32>
    %c914_i32 = arith.constant 914 : i32
    %71 = tpu.dynamic_rotate %4 by %c914_i32 dim 1 : vector<8x1024xf32>, i32 -> vector<8x1024xf32>
    %72 = tpu.concatenate %70, %71 in 0 : vector<8x1024xf32>, vector<8x1024xf32> -> vector<16x1024xf32>
    %73 = arith.truncf %72 : vector<16x1024xf32> to vector<16x1024xbf16>
    %c208 = arith.constant 208 : index
    %c0_23 = arith.constant 0 : index
    %74 = vector.load %arg6[%c208, %c0_23] : memref<256x1024xbf16, #tpu.memory_space<vmem>>, vector<16x1024xbf16>
    tpu.vector_store %arg6[%c208, %c0_23], %73 {strides = array<i32>} : memref<256x1024xbf16, #tpu.memory_space<vmem>>, vector<16x1024xbf16>,
    %c913_i32 = arith.constant 913 : i32
    %75 = tpu.dynamic_rotate %4 by %c913_i32 dim 1 : vector<8x1024xf32>, i32 -> vector<8x1024xf32>
    %76 = tpu.concatenate %75, %75 in 0 : vector<8x1024xf32>, vector<8x1024xf32> -> vector<16x1024xf32>
    %77 = arith.truncf %76 : vector<16x1024xf32> to vector<16x1024xbf16>
    %c224 = arith.constant 224 : index
    %c0_24 = arith.constant 0 : index
    %78 = vector.load %arg6[%c224, %c0_24] : memref<256x1024xbf16, #tpu.memory_space<vmem>>, vector<16x1024xbf16>
    tpu.vector_store %arg6[%c224, %c0_24], %77 {strides = array<i32>} : memref<256x1024xbf16, #tpu.memory_space<vmem>>, vector<16x1024xbf16>,
    %79 = vector.extract_strided_slice %6 {offsets = [0, 128], sizes = [8, 104], strides = [1, 1]} : vector<8x256xbf16> to vector<8x104xbf16>
    %c128_25 = arith.constant 128 : index
    %c0_26 = arith.constant 0 : index
    %80 = vector.load %arg6[%c128_25, %c0_26] : memref<256x1024xbf16, #tpu.memory_space<vmem>>, vector<104x1024xbf16>
    %cst_27 = arith.constant dense<0.000000e+00> : vector<8x1024xf32>
    %81 = tpu.matmul %79, %80, %cst_27 {dimension_numbers = #tpu.dot_dimension_numbers<[1], [0], [0], [1], [0, 0, 1, 1], [], []>} : vector<8x104xbf16>, vector<104x1024xbf16>, vector<8x1024xf32> -> vector<8x1024xf32>
    %82 = arith.addf %44, %81 : vector<8x1024xf32>
    %c0_28 = arith.constant 0 : index
    %c0_29 = arith.constant 0 : index
    %c0_30 = arith.constant 0 : index
    %83 = vector.load %arg3[%c0_28, %c0_29, %c0_30] : memref<2x8x1xf32, #tpu.memory_space<vmem>>, vector<1x8x1xf32>
    %84 = vector.shape_cast %83 : vector<1x8x1xf32> to vector<8x1xf32>
    %85 = vector.broadcast %84 : vector<8x1xf32> to vector<8x1024xf32>
    %86 = arith.addf %82, %85 : vector<8x1024xf32>
    %cst_31 = arith.constant 0.000000e+00 : f32
    %87 = vector.broadcast %cst_31 : f32 to vector<8x1024xf32>
    %88 = arith.maximumf %86, %87 : vector<8x1024xf32>
    %cst_32 = arith.constant 0.000000e+00 : f32
    %89 = vector.shape_cast %2 : vector<1x1024xi1> to vector<1x1024xi1>
    %90 = vector.broadcast %89 : vector<1x1024xi1> to vector<8x1024xi1>
    %91 = vector.broadcast %cst_32 : f32 to vector<8x1024xf32>
    %92 = arith.select %90, %88, %91 : vector<8x1024xi1>, vector<8x1024xf32>
    %c1 = arith.constant 1 : index
    %c0_33 = arith.constant 0 : index
    %c0_34 = arith.constant 0 : index
    %93 = vector.load %arg2[%c1, %c0_33, %c0_34] : memref<2x8x256xbf16, #tpu.memory_space<vmem>>, vector<1x8x256xbf16>
    %94 = vector.shape_cast %93 : vector<1x8x256xbf16> to vector<8x256xbf16>
    %c111_i32_35 = arith.constant 111 : i32
    %95 = tpu.dynamic_rotate %92 by %c111_i32_35 dim 1 : vector<8x1024xf32>, i32 -> vector<8x1024xf32>
    %c110_i32_36 = arith.constant 110 : i32
    %96 = tpu.dynamic_rotate %92 by %c110_i32_36 dim 1 : vector<8x1024xf32>, i32 -> vector<8x1024xf32>
    %97 = tpu.concatenate %95, %96 in 0 : vector<8x1024xf32>, vector<8x1024xf32> -> vector<16x1024xf32>
    %98 = arith.truncf %97 : vector<16x1024xf32> to vector<16x1024xbf16>
    %c0_37 = arith.constant 0 : index
    %c0_38 = arith.constant 0 : index
    %99 = vector.load %arg6[%c0_37, %c0_38] : memref<256x1024xbf16, #tpu.memory_space<vmem>>, vector<16x1024xbf16>
    tpu.vector_store %arg6[%c0_37, %c0_38], %98 {strides = array<i32>} : memref<256x1024xbf16, #tpu.memory_space<vmem>>, vector<16x1024xbf16>,
    %c109_i32_39 = arith.constant 109 : i32
    %100 = tpu.dynamic_rotate %92 by %c109_i32_39 dim 1 : vector<8x1024xf32>, i32 -> vector<8x1024xf32>
    %c101_i32_40 = arith.constant 101 : i32
    %101 = tpu.dynamic_rotate %92 by %c101_i32_40 dim 1 : vector<8x1024xf32>, i32 -> vector<8x1024xf32>
    %102 = tpu.concatenate %100, %101 in 0 : vector<8x1024xf32>, vector<8x1024xf32> -> vector<16x1024xf32>
    %103 = arith.truncf %102 : vector<16x1024xf32> to vector<16x1024xbf16>
    %c16_41 = arith.constant 16 : index
    %c0_42 = arith.constant 0 : index
    %104 = vector.load %arg6[%c16_41, %c0_42] : memref<256x1024xbf16, #tpu.memory_space<vmem>>, vector<16x1024xbf16>
    tpu.vector_store %arg6[%c16_41, %c0_42], %103 {strides = array<i32>} : memref<256x1024xbf16, #tpu.memory_space<vmem>>, vector<16x1024xbf16>,
    %c100_i32_43 = arith.constant 100 : i32
    %105 = tpu.dynamic_rotate %92 by %c100_i32_43 dim 1 : vector<8x1024xf32>, i32 -> vector<8x1024xf32>
    %c99_i32_44 = arith.constant 99 : i32
    %106 = tpu.dynamic_rotate %92 by %c99_i32_44 dim 1 : vector<8x1024xf32>, i32 -> vector<8x1024xf32>
    %107 = tpu.concatenate %105, %106 in 0 : vector<8x1024xf32>, vector<8x1024xf32> -> vector<16x1024xf32>
    %108 = arith.truncf %107 : vector<16x1024xf32> to vector<16x1024xbf16>
    %c32_45 = arith.constant 32 : index
    %c0_46 = arith.constant 0 : index
    %109 = vector.load %arg6[%c32_45, %c0_46] : memref<256x1024xbf16, #tpu.memory_space<vmem>>, vector<16x1024xbf16>
    tpu.vector_store %arg6[%c32_45, %c0_46], %108 {strides = array<i32>} : memref<256x1024xbf16, #tpu.memory_space<vmem>>, vector<16x1024xbf16>,
    %c91_i32_47 = arith.constant 91 : i32
    %110 = tpu.dynamic_rotate %92 by %c91_i32_47 dim 1 : vector<8x1024xf32>, i32 -> vector<8x1024xf32>
    %c90_i32_48 = arith.constant 90 : i32
    %111 = tpu.dynamic_rotate %92 by %c90_i32_48 dim 1 : vector<8x1024xf32>, i32 -> vector<8x1024xf32>
    %112 = tpu.concatenate %110, %111 in 0 : vector<8x1024xf32>, vector<8x1024xf32> -> vector<16x1024xf32>
    %113 = arith.truncf %112 : vector<16x1024xf32> to vector<16x1024xbf16>
    %c48_49 = arith.constant 48 : index
    %c0_50 = arith.constant 0 : index
    %114 = vector.load %arg6[%c48_49, %c0_50] : memref<256x1024xbf16, #tpu.memory_space<vmem>>, vector<16x1024xbf16>
    tpu.vector_store %arg6[%c48_49, %c0_50], %113 {strides = array<i32>} : memref<256x1024xbf16, #tpu.memory_space<vmem>>, vector<16x1024xbf16>,
    %c89_i32_51 = arith.constant 89 : i32
    %115 = tpu.dynamic_rotate %92 by %c89_i32_51 dim 1 : vector<8x1024xf32>, i32 -> vector<8x1024xf32>
    %c11_i32_52 = arith.constant 11 : i32
    %116 = tpu.dynamic_rotate %92 by %c11_i32_52 dim 1 : vector<8x1024xf32>, i32 -> vector<8x1024xf32>
    %117 = tpu.concatenate %115, %116 in 0 : vector<8x1024xf32>, vector<8x1024xf32> -> vector<16x1024xf32>
    %118 = arith.truncf %117 : vector<16x1024xf32> to vector<16x1024xbf16>
    %c64_53 = arith.constant 64 : index
    %c0_54 = arith.constant 0 : index
    %119 = vector.load %arg6[%c64_53, %c0_54] : memref<256x1024xbf16, #tpu.memory_space<vmem>>, vector<16x1024xbf16>
    tpu.vector_store %arg6[%c64_53, %c0_54], %118 {strides = array<i32>} : memref<256x1024xbf16, #tpu.memory_space<vmem>>, vector<16x1024xbf16>,
    %c10_i32_55 = arith.constant 10 : i32
    %120 = tpu.dynamic_rotate %92 by %c10_i32_55 dim 1 : vector<8x1024xf32>, i32 -> vector<8x1024xf32>
    %c9_i32_56 = arith.constant 9 : i32
    %121 = tpu.dynamic_rotate %92 by %c9_i32_56 dim 1 : vector<8x1024xf32>, i32 -> vector<8x1024xf32>
    %122 = tpu.concatenate %120, %121 in 0 : vector<8x1024xf32>, vector<8x1024xf32> -> vector<16x1024xf32>
    %123 = arith.truncf %122 : vector<16x1024xf32> to vector<16x1024xbf16>
    %c80_57 = arith.constant 80 : index
    %c0_58 = arith.constant 0 : index
    %124 = vector.load %arg6[%c80_57, %c0_58] : memref<256x1024xbf16, #tpu.memory_space<vmem>>, vector<16x1024xbf16>
    tpu.vector_store %arg6[%c80_57, %c0_58], %123 {strides = array<i32>} : memref<256x1024xbf16, #tpu.memory_space<vmem>>, vector<16x1024xbf16>,
    %c1_i32_59 = arith.constant 1 : i32
    %125 = tpu.dynamic_rotate %92 by %c1_i32_59 dim 1 : vector<8x1024xf32>, i32 -> vector<8x1024xf32>
    %c0_i32_60 = arith.constant 0 : i32
    %126 = tpu.dynamic_rotate %92 by %c0_i32_60 dim 1 : vector<8x1024xf32>, i32 -> vector<8x1024xf32>
    %127 = tpu.concatenate %125, %126 in 0 : vector<8x1024xf32>, vector<8x1024xf32> -> vector<16x1024xf32>
    %128 = arith.truncf %127 : vector<16x1024xf32> to vector<16x1024xbf16>
    %c96_61 = arith.constant 96 : index
    %c0_62 = arith.constant 0 : index
    %129 = vector.load %arg6[%c96_61, %c0_62] : memref<256x1024xbf16, #tpu.memory_space<vmem>>, vector<16x1024xbf16>
    tpu.vector_store %arg6[%c96_61, %c0_62], %128 {strides = array<i32>} : memref<256x1024xbf16, #tpu.memory_space<vmem>>, vector<16x1024xbf16>,
    %130 = vector.extract_strided_slice %94 {offsets = [0, 0], sizes = [8, 112], strides = [1, 1]} : vector<8x256xbf16> to vector<8x112xbf16>
    %c0_63 = arith.constant 0 : index
    %c0_64 = arith.constant 0 : index
    %131 = vector.load %arg6[%c0_63, %c0_64] : memref<256x1024xbf16, #tpu.memory_space<vmem>>, vector<112x1024xbf16>
    %cst_65 = arith.constant dense<0.000000e+00> : vector<8x1024xf32>
    %132 = tpu.matmul %130, %131, %cst_65 {dimension_numbers = #tpu.dot_dimension_numbers<[1], [0], [0], [1], [0, 0, 1, 1], [], []>} : vector<8x112xbf16>, vector<112x1024xbf16>, vector<8x1024xf32> -> vector<8x1024xf32>
    %c1023_i32_66 = arith.constant 1023 : i32
    %133 = tpu.dynamic_rotate %92 by %c1023_i32_66 dim 1 : vector<8x1024xf32>, i32 -> vector<8x1024xf32>
    %c1015_i32_67 = arith.constant 1015 : i32
    %134 = tpu.dynamic_rotate %92 by %c1015_i32_67 dim 1 : vector<8x1024xf32>, i32 -> vector<8x1024xf32>
    %135 = tpu.concatenate %133, %134 in 0 : vector<8x1024xf32>, vector<8x1024xf32> -> vector<16x1024xf32>
    %136 = arith.truncf %135 : vector<16x1024xf32> to vector<16x1024xbf16>
    %c128_68 = arith.constant 128 : index
    %c0_69 = arith.constant 0 : index
    %137 = vector.load %arg6[%c128_68, %c0_69] : memref<256x1024xbf16, #tpu.memory_space<vmem>>, vector<16x1024xbf16>
    tpu.vector_store %arg6[%c128_68, %c0_69], %136 {strides = array<i32>} : memref<256x1024xbf16, #tpu.memory_space<vmem>>, vector<16x1024xbf16>,
    %c1014_i32_70 = arith.constant 1014 : i32
    %138 = tpu.dynamic_rotate %92 by %c1014_i32_70 dim 1 : vector<8x1024xf32>, i32 -> vector<8x1024xf32>
    %c1013_i32_71 = arith.constant 1013 : i32
    %139 = tpu.dynamic_rotate %92 by %c1013_i32_71 dim 1 : vector<8x1024xf32>, i32 -> vector<8x1024xf32>
    %140 = tpu.concatenate %138, %139 in 0 : vector<8x1024xf32>, vector<8x1024xf32> -> vector<16x1024xf32>
    %141 = arith.truncf %140 : vector<16x1024xf32> to vector<16x1024xbf16>
    %c144_72 = arith.constant 144 : index
    %c0_73 = arith.constant 0 : index
    %142 = vector.load %arg6[%c144_72, %c0_73] : memref<256x1024xbf16, #tpu.memory_space<vmem>>, vector<16x1024xbf16>
    tpu.vector_store %arg6[%c144_72, %c0_73], %141 {strides = array<i32>} : memref<256x1024xbf16, #tpu.memory_space<vmem>>, vector<16x1024xbf16>,
    %c935_i32_74 = arith.constant 935 : i32
    %143 = tpu.dynamic_rotate %92 by %c935_i32_74 dim 1 : vector<8x1024xf32>, i32 -> vector<8x1024xf32>
    %c934_i32_75 = arith.constant 934 : i32
    %144 = tpu.dynamic_rotate %92 by %c934_i32_75 dim 1 : vector<8x1024xf32>, i32 -> vector<8x1024xf32>
    %145 = tpu.concatenate %143, %144 in 0 : vector<8x1024xf32>, vector<8x1024xf32> -> vector<16x1024xf32>
    %146 = arith.truncf %145 : vector<16x1024xf32> to vector<16x1024xbf16>
    %c160_76 = arith.constant 160 : index
    %c0_77 = arith.constant 0 : index
    %147 = vector.load %arg6[%c160_76, %c0_77] : memref<256x1024xbf16, #tpu.memory_space<vmem>>, vector<16x1024xbf16>
    tpu.vector_store %arg6[%c160_76, %c0_77], %146 {strides = array<i32>} : memref<256x1024xbf16, #tpu.memory_space<vmem>>, vector<16x1024xbf16>,
    %c933_i32_78 = arith.constant 933 : i32
    %148 = tpu.dynamic_rotate %92 by %c933_i32_78 dim 1 : vector<8x1024xf32>, i32 -> vector<8x1024xf32>
    %c925_i32_79 = arith.constant 925 : i32
    %149 = tpu.dynamic_rotate %92 by %c925_i32_79 dim 1 : vector<8x1024xf32>, i32 -> vector<8x1024xf32>
    %150 = tpu.concatenate %148, %149 in 0 : vector<8x1024xf32>, vector<8x1024xf32> -> vector<16x1024xf32>
    %151 = arith.truncf %150 : vector<16x1024xf32> to vector<16x1024xbf16>
    %c176_80 = arith.constant 176 : index
    %c0_81 = arith.constant 0 : index
    %152 = vector.load %arg6[%c176_80, %c0_81] : memref<256x1024xbf16, #tpu.memory_space<vmem>>, vector<16x1024xbf16>
    tpu.vector_store %arg6[%c176_80, %c0_81], %151 {strides = array<i32>} : memref<256x1024xbf16, #tpu.memory_space<vmem>>, vector<16x1024xbf16>,
    %c924_i32_82 = arith.constant 924 : i32
    %153 = tpu.dynamic_rotate %92 by %c924_i32_82 dim 1 : vector<8x1024xf32>, i32 -> vector<8x1024xf32>
    %c923_i32_83 = arith.constant 923 : i32
    %154 = tpu.dynamic_rotate %92 by %c923_i32_83 dim 1 : vector<8x1024xf32>, i32 -> vector<8x1024xf32>
    %155 = tpu.concatenate %153, %154 in 0 : vector<8x1024xf32>, vector<8x1024xf32> -> vector<16x1024xf32>
    %156 = arith.truncf %155 : vector<16x1024xf32> to vector<16x1024xbf16>
    %c192_84 = arith.constant 192 : index
    %c0_85 = arith.constant 0 : index
    %157 = vector.load %arg6[%c192_84, %c0_85] : memref<256x1024xbf16, #tpu.memory_space<vmem>>, vector<16x1024xbf16>
    tpu.vector_store %arg6[%c192_84, %c0_85], %156 {strides = array<i32>} : memref<256x1024xbf16, #tpu.memory_space<vmem>>, vector<16x1024xbf16>,
    %c915_i32_86 = arith.constant 915 : i32
    %158 = tpu.dynamic_rotate %92 by %c915_i32_86 dim 1 : vector<8x1024xf32>, i32 -> vector<8x1024xf32>
    %c914_i32_87 = arith.constant 914 : i32
    %159 = tpu.dynamic_rotate %92 by %c914_i32_87 dim 1 : vector<8x1024xf32>, i32 -> vector<8x1024xf32>
    %160 = tpu.concatenate %158, %159 in 0 : vector<8x1024xf32>, vector<8x1024xf32> -> vector<16x1024xf32>
    %161 = arith.truncf %160 : vector<16x1024xf32> to vector<16x1024xbf16>
    %c208_88 = arith.constant 208 : index
    %c0_89 = arith.constant 0 : index
    %162 = vector.load %arg6[%c208_88, %c0_89] : memref<256x1024xbf16, #tpu.memory_space<vmem>>, vector<16x1024xbf16>
    tpu.vector_store %arg6[%c208_88, %c0_89], %161 {strides = array<i32>} : memref<256x1024xbf16, #tpu.memory_space<vmem>>, vector<16x1024xbf16>,
    %c913_i32_90 = arith.constant 913 : i32
    %163 = tpu.dynamic_rotate %92 by %c913_i32_90 dim 1 : vector<8x1024xf32>, i32 -> vector<8x1024xf32>
    %164 = tpu.concatenate %163, %163 in 0 : vector<8x1024xf32>, vector<8x1024xf32> -> vector<16x1024xf32>
    %165 = arith.truncf %164 : vector<16x1024xf32> to vector<16x1024xbf16>
    %c224_91 = arith.constant 224 : index
    %c0_92 = arith.constant 0 : index
    %166 = vector.load %arg6[%c224_91, %c0_92] : memref<256x1024xbf16, #tpu.memory_space<vmem>>, vector<16x1024xbf16>
    tpu.vector_store %arg6[%c224_91, %c0_92], %165 {strides = array<i32>} : memref<256x1024xbf16, #tpu.memory_space<vmem>>, vector<16x1024xbf16>,
    %167 = vector.extract_strided_slice %94 {offsets = [0, 128], sizes = [8, 104], strides = [1, 1]} : vector<8x256xbf16> to vector<8x104xbf16>
    %c128_93 = arith.constant 128 : index
    %c0_94 = arith.constant 0 : index
    %168 = vector.load %arg6[%c128_93, %c0_94] : memref<256x1024xbf16, #tpu.memory_space<vmem>>, vector<104x1024xbf16>
    %cst_95 = arith.constant dense<0.000000e+00> : vector<8x1024xf32>
    %169 = tpu.matmul %167, %168, %cst_95 {dimension_numbers = #tpu.dot_dimension_numbers<[1], [0], [0], [1], [0, 0, 1, 1], [], []>} : vector<8x104xbf16>, vector<104x1024xbf16>, vector<8x1024xf32> -> vector<8x1024xf32>
    %170 = arith.addf %132, %169 : vector<8x1024xf32>
    %c1_96 = arith.constant 1 : index
    %c0_97 = arith.constant 0 : index
    %c0_98 = arith.constant 0 : index
    %171 = vector.load %arg3[%c1_96, %c0_97, %c0_98] : memref<2x8x1xf32, #tpu.memory_space<vmem>>, vector<1x8x1xf32>
    %172 = vector.shape_cast %171 : vector<1x8x1xf32> to vector<8x1xf32>
    %173 = vector.broadcast %172 : vector<8x1xf32> to vector<8x1024xf32>
    %174 = arith.addf %170, %173 : vector<8x1024xf32>
    %c0_99 = arith.constant 0 : index
    %c0_100 = arith.constant 0 : index
    %c0_101 = arith.constant 0 : index
    %175 = vector.load %arg1[%c0_99, %c0_100, %c0_101] : memref<1x8x1024xf32, #tpu.memory_space<vmem>>, vector<1x8x1024xf32>
    %176 = vector.shape_cast %175 : vector<1x8x1024xf32> to vector<8x1024xf32>
    %177 = arith.addf %174, %176 : vector<8x1024xf32>
    %cst_102 = arith.constant 0.000000e+00 : f32
    %178 = vector.broadcast %cst_102 : f32 to vector<8x1024xf32>
    %179 = arith.maximumf %177, %178 : vector<8x1024xf32>
    %c0_103 = arith.constant 0 : index
    %c0_104 = arith.constant 0 : index
    %c0_105 = arith.constant 0 : index
    %180 = vector.load %arg5[%c0_103, %c0_104, %c0_105] : memref<1x8x1024xf32, #tpu.memory_space<vmem>>, vector<1x8x1024xf32>
    %181 = vector.shape_cast %180 : vector<1x8x1024xf32> to vector<8x1024xf32>
    %182 = vector.shape_cast %179 : vector<8x1024xf32> to vector<1x8x1024xf32>
    tpu.vector_store %arg5[%c0_103, %c0_104, %c0_105], %182 {strides = array<i32>} : memref<1x8x1024xf32, #tpu.memory_space<vmem>>, vector<1x8x1024xf32>,
    return
  }
  func.func @transform_0(%arg0: i32) -> (i32, i32, i32) {
    %c0_i32 = arith.constant 0 : i32
    %c0_i32_0 = arith.constant 0 : i32
    %c0_i32_1 = arith.constant 0 : i32
    return %arg0, %c0_i32, %c0_i32_0 : i32, i32, i32
  }
  func.func @transform_1(%arg0: i32) -> (i32, i32, i32) {
    %c0_i32 = arith.constant 0 : i32
    %c0_i32_0 = arith.constant 0 : i32
    %c0_i32_1 = arith.constant 0 : i32
    %c0_i32_2 = arith.constant 0 : i32
    return %c0_i32, %c0_i32_0, %c0_i32_1 : i32, i32, i32
  }
  func.func @transform_2(%arg0: i32) -> (i32, i32, i32) {
    %c0_i32 = arith.constant 0 : i32
    %c0_i32_0 = arith.constant 0 : i32
    %c0_i32_1 = arith.constant 0 : i32
    %c0_i32_2 = arith.constant 0 : i32
    return %c0_i32, %c0_i32_0, %c0_i32_1 : i32, i32, i32
  }
  func.func @transform_3(%arg0: i32) -> (i32, i32) {
    %c0_i32 = arith.constant 0 : i32
    %c0_i32_0 = arith.constant 0 : i32
    %c0_i32_1 = arith.constant 0 : i32
    return %c0_i32, %c0_i32_0 : i32, i32
  }
  func.func @transform_4(%arg0: i32) -> (i32, i32, i32) {
    %c0_i32 = arith.constant 0 : i32
    %c0_i32_0 = arith.constant 0 : i32
    %c0_i32_1 = arith.constant 0 : i32
    return %arg0, %c0_i32, %c0_i32_0 : i32, i32, i32
  }
}

</mosaic_0001>

<llo_original>
// kernel: residual_conv_block.1
$region0: #{residual_conv_block.1}
  #allocation0 [shape = 'u32[]', space=smem, size = 0x4, offset = 0x4, fixed_abs, tag = 'smem constant byte address 0x4 - core index']
  #allocation1 [shape = 'u32[144,128]{1,0:T(1,128)}', space=vmem, size = 0x12000, scoped, tag = 'internal scratch']
  #allocation2 [shape = 'bf16[256,1024]{1,0:T(8,128)(2,1)}', space=vmem, size = 0x80000, scoped, tag = 'scratch operand']
  %s0 = inlined_call_operand.vmem [shape: f32[2,8,1024], index: 0, kind: input, shape index: {}]
  %s1 = inlined_call_operand.vmem [shape: bf16[2,8,256], index: 1, kind: input, shape index: {}]
  %s2 = inlined_call_operand.vmem [shape: f32[2,8,1], index: 2, kind: input, shape index: {}]
  %s3 = inlined_call_operand.vmem [shape: f32[1,1024], index: 3, kind: input, shape index: {}]
  %s4 = inlined_call_operand.vmem [shape: f32[2,8,1024], index: 4, kind: output, shape index: {}]
  %s5 = sld [smem:[#allocation0]]
  $region49: #{residual_conv_block.1} parent=0
    _
  %s7 = ssub.s32 1, %s5
  %s8 = scalar_select 0, %s7, %s5
  loop: start=0, step=1, limit=4
  $region2: #{residual_conv_block.1} parent=0 // loop_pre_header
    _
  $region3: #{residual_conv_block.1} parent=0 // loop_header
    %s10 = sphi 0, %s14
    %p11 = scmp.ge.s32.totalorder %s10, 4
    %s20 = sphi 0, %s22
    %s23 = sphi 0, %s20
    %s24 = sphi 0, %s23
    %s40 = sphi 0, %s24
    %s44 = sphi 0, %s44
    %s46 = sphi 0, %s44
    %s47 = sphi 0, %s46
    %s61 = sphi 0, %s47
    %s65 = sphi 0, %s65
    %s67 = sphi 0, %s65
    %s68 = sphi 0, %s67
    %s82 = sphi 0, %s68
    %s86 = sphi 0, %s86
    %s88 = sphi 0, %s86
    %s89 = sphi 0, %s88
    %s103 = sphi 0, %s89
    %s109 = sphi 0, %s111
    %s112 = sphi 0, %s109
    %s113 = sphi 0, %s112
    %s129 = sphi 0, %s113
  $region4: #{residual_conv_block.1} parent=0 // loop_header_branch
    %13 = sbr.rel (%p11) target = $region8
  $region5: #{residual_conv_block.1} parent=0 // loop_body
    %s15 = ssub.s32 %s10, 1
    %s16 = ssub.s32 %s10, 2
    %s17 = sadd.s32 %s10, 1
    %s18 = ssub.s32 %s10, %s17
    %p19 = scmp.eq.s32.totalorder %s18, 0
    %s21 = sadd.s32 %s20, 1
    %s22 = scalar_select %p19, %s20, %s21
    %p25 = pneg %p19
    %p26 = scmp.eq.s32.totalorder %s10, 1
    %p27 = por %p25, %p26
    %p28 = scmp.ne.s32.totalorder %s20, %s23
    %p29 = scmp.eq.s32.totalorder %s10, 0
    %p30 = por %p28, %p29
    %p31 = scmp.ne.s32.totalorder %s20, %s23
    %p32 = scmp.eq.s32.totalorder %s15, 1
    %p33 = por %p31, %p32
    %p34 = scmp.ne.s32.totalorder %s23, %s24
    %p35 = scmp.eq.s32.totalorder %s15, 0
    %p36 = por %p34, %p35
    %p37 = scmp.ne.s32.totalorder %s23, %s24
    %p38 = scmp.eq.s32.totalorder %s16, 1
    %p39 = por %p37, %p38
    %p41 = scmp.ne.s32.totalorder %s24, %s40
    %p42 = scmp.eq.s32.totalorder %s16, 0
    %p43 = por %p41, %p42
    %s45 = sadd.s32 %s44, 1
    %p48 = scmp.eq.s32.totalorder %s10, 1
    %p49 = scmp.ne.s32.totalorder %s44, %s46
    %p50 = scmp.eq.s32.totalorder %s10, 0
    %p51 = por %p49, %p50
    %p52 = scmp.ne.s32.totalorder %s44, %s46
    %p53 = scmp.eq.s32.totalorder %s15, 1
    %p54 = por %p52, %p53
    %p55 = scmp.ne.s32.totalorder %s46, %s47
    %p56 = scmp.eq.s32.totalorder %s15, 0
    %p57 = por %p55, %p56
    %p58 = scmp.ne.s32.totalorder %s46, %s47
    %p59 = scmp.eq.s32.totalorder %s16, 1
    %p60 = por %p58, %p59
    %p62 = scmp.ne.s32.totalorder %s47, %s61
    %p63 = scmp.eq.s32.totalorder %s16, 0
    %p64 = por %p62, %p63
    %s66 = sadd.s32 %s65, 1
    %p69 = scmp.eq.s32.totalorder %s10, 1
    %p70 = scmp.ne.s32.totalorder %s65, %s67
    %p71 = scmp.eq.s32.totalorder %s10, 0
    %p72 = por %p70, %p71
    %p73 = scmp.ne.s32.totalorder %s65, %s67
    %p74 = scmp.eq.s32.totalorder %s15, 1
    %p75 = por %p73, %p74
    %p76 = scmp.ne.s32.totalorder %s67, %s68
    %p77 = scmp.eq.s32.totalorder %s15, 0
    %p78 = por %p76, %p77
    %p79 = scmp.ne.s32.totalorder %s67, %s68
    %p80 = scmp.eq.s32.totalorder %s16, 1
    %p81 = por %p79, %p80
    %p83 = scmp.ne.s32.totalorder %s68, %s82
    %p84 = scmp.eq.s32.totalorder %s16, 0
    %p85 = por %p83, %p84
    %s87 = sadd.s32 %s86, 1
    %p90 = scmp.eq.s32.totalorder %s10, 1
    %p91 = scmp.ne.s32.totalorder %s86, %s88
    %p92 = scmp.eq.s32.totalorder %s10, 0
    %p93 = por %p91, %p92
    %p94 = scmp.ne.s32.totalorder %s86, %s88
    %p95 = scmp.eq.s32.totalorder %s15, 1
    %p96 = por %p94, %p95
    %p97 = scmp.ne.s32.totalorder %s88, %s89
    %p98 = scmp.eq.s32.totalorder %s15, 0
    %p99 = por %p97, %p98
    %p100 = scmp.ne.s32.totalorder %s88, %s89
    %p101 = scmp.eq.s32.totalorder %s16, 1
    %p102 = por %p100, %p101
    %p104 = scmp.ne.s32.totalorder %s89, %s103
    %p105 = scmp.eq.s32.totalorder %s16, 0
    %p106 = por %p104, %p105
    %s107 = ssub.s32 %s10, %s17
    %p108 = scmp.eq.s32.totalorder %s107, 0
    %s110 = sadd.s32 %s109, 1
    %s111 = scalar_select %p108, %s109, %s110
    %p114 = pneg %p108
    %p115 = scmp.eq.s32.totalorder %s10, 1
    %p116 = por %p114, %p115
    %p117 = scmp.ne.s32.totalorder %s109, %s112
    %p118 = scmp.eq.s32.totalorder %s10, 0
    %p119 = por %p117, %p118
    %p120 = scmp.ne.s32.totalorder %s109, %s112
    %p121 = scmp.eq.s32.totalorder %s15, 1
    %p122 = por %p120, %p121
    %p123 = scmp.ne.s32.totalorder %s112, %s113
    %p124 = scmp.eq.s32.totalorder %s15, 0
    %p125 = por %p123, %p124
    %p126 = scmp.ne.s32.totalorder %s112, %s113
    %p127 = scmp.eq.s32.totalorder %s16, 1
    %p128 = por %p126, %p127
    %p130 = scmp.ne.s32.totalorder %s113, %s129
    %p131 = scmp.eq.s32.totalorder %s16, 0
    %p132 = por %p130, %p131
    %p133 = scmp.le.s32.totalorder 1, %s10
    %p134 = scmp.lt.s32.totalorder %s10, 3
    %p135 = pnand %p133, %p134
    %p136 = pneg %p135
    // Predicated region
    $region9: #{residual_conv_block.1} parent=5 // pred_check
      _
    $region10: #{residual_conv_block.1} parent=5 // pred_check_branch
      %138 = sbr.rel (%p135) target = $region12
    $region11: #{residual_conv_block.1} parent=5 // pred_region
      %s139 = ssub.s32 %s10, 1
      // Predicated region
      $region13: #{residual_conv_block.1} parent=11 // pred_check
        %p140 = pneg %p57
      $region14: #{residual_conv_block.1} parent=11 // pred_check_branch
        %142 = sbr.rel (%p140) target = $region16
      $region15: #{residual_conv_block.1} parent=11 // pred_region
        _
      $region16: #{residual_conv_block.1} parent=11 // pred_fallthru
        _
      // Predicated region
      $region17: #{residual_conv_block.1} parent=11 // pred_check
        %p143 = pneg %p78
      $region18: #{residual_conv_block.1} parent=11 // pred_check_branch
        %145 = sbr.rel (%p143) target = $region20
      $region19: #{residual_conv_block.1} parent=11 // pred_region
        _
      $region20: #{residual_conv_block.1} parent=11 // pred_fallthru
        _
      // Predicated region
      $region21: #{residual_conv_block.1} parent=11 // pred_check
        %p146 = pneg %p99
      $region22: #{residual_conv_block.1} parent=11 // pred_check_branch
        %148 = sbr.rel (%p146) target = $region24
      $region23: #{residual_conv_block.1} parent=11 // pred_region
        _
      $region24: #{residual_conv_block.1} parent=11 // pred_fallthru
        _
    $region12: #{residual_conv_block.1} parent=5 // pred_fallthru
      _
    %p149 = scmp.lt.s32.totalorder %s10, 2
    // Predicated region
    $region25: #{residual_conv_block.1} parent=5 // pred_check
      %p150 = pneg %p149
    $region26: #{residual_conv_block.1} parent=5 // pred_check_branch
      %152 = sbr.rel (%p150) target = $region28
    $region27: #{residual_conv_block.1} parent=5 // pred_region
      // Predicated region
      $region29: #{residual_conv_block.1} parent=27 // pred_check
        %p153 = pneg %p30
      $region30: #{residual_conv_block.1} parent=27 // pred_check_branch
        %155 = sbr.rel (%p153) target = $region32
      $region31: #{residual_conv_block.1} parent=27 // pred_region
        %p156 = scmp.lt.s32.totalorder %s10, 1
        %s157 = scalar_select %p156, %s10, 1
        %s158 = smul.addr %s157, 8
        %s159 = smul.addr %s158, 8
        %s160 = scalar_lea.vmem %s0, %s159
      $region32: #{residual_conv_block.1} parent=27 // pred_fallthru
        _
    $region28: #{residual_conv_block.1} parent=5 // pred_fallthru
      _
    %p161 = scmp.le.s32.totalorder 1, %s10
    %p162 = scmp.lt.s32.totalorder %s10, 3
    %p163 = pnand %p161, %p162
    %p164 = pneg %p163
    // Predicated region
    $region33: #{residual_conv_block.1} parent=5 // pred_check
      _
    $region34: #{residual_conv_block.1} parent=5 // pred_check_branch
      %166 = sbr.rel (%p163) target = $region36
    $region35: #{residual_conv_block.1} parent=5 // pred_region
      %s167 = ssub.s32 %s10, 1
      %p168 = scmp.lt.s32.totalorder %s15, 1
      %s169 = scalar_select %p168, %s15, 1
      %s170 = smul.addr %s169, 8
      %s171 = smul.addr %s170, 8
      %s172 = scalar_lea.vmem %s0, %s171
      %p173 = pneg %p36
      %p174 = pneg %p33
      %p175 = pneg %p57
      %p176 = pneg %p54
      %p177 = pneg %p78
      %p178 = pneg %p75
      %p179 = pneg %p99
      %p180 = pneg %p96
      %p181 = pneg %p125
      %p182 = pneg %p122
      %p183 = scmp.lt.s32.totalorder %s15, 1
      %s184 = scalar_select %p183, %s15, 1
      %s185 = smul.addr %s184, 8
      %s186 = smul.addr %s185, 8
      %s187 = scalar_lea.vmem %s4, %s186
      %p188 = scmp.lt.s32.totalorder %s15, 1
      %s189 = scalar_select %p188, %s15, 1
      %s190 = smul.addr %s189, 8
      %s191 = smul.addr %s190, 8
      %s192 = scalar_lea.vmem %s0, %s191
      %p193 = scmp.lt.s32.totalorder %s15, 1
      %s194 = scalar_select %p193, %s15, 1
      %s195 = smul.addr %s194, 8
      %s196 = smul.addr %s195, 8
      %s197 = scalar_lea.vmem %s4, %s196
      %v199 = vld [vmem:[%s3] sm:$0xff]
      %vm200 = vcmp.gt.f32.partialorder %v199, 0.0
      %v201 = vld [vmem:[%s192] sm:$0xff]
      %v202 = vld [vmem:[%s192 + $0x8] sm:$0xff]
      %v203 = vld [vmem:[%s192 + $0x10] sm:$0xff]
      %v204 = vld [vmem:[%s192 + $0x18] sm:$0xff]
      %v205 = vld [vmem:[%s192 + $0x20] sm:$0xff]
      %v206 = vld [vmem:[%s192 + $0x28] sm:$0xff]
      %v207 = vld [vmem:[%s192 + $0x30] sm:$0xff]
      %v208 = vld [vmem:[%s192 + $0x38] sm:$0xff]
      %v209 = vld [vmem:[%s1] sm:$0xff]
      %210 = vrot.lane.b32.xlu0 %v201, 111
      %v211 = vpop.permute.xlu0 %210
      %212 = vrot.lane.b32.xlu0 %v202, 111
      %v213 = vpop.permute.xlu0 %212
      %214 = vrot.lane.b32.xlu0 %v203, 111
      %v215 = vpop.permute.xlu0 %214
      %216 = vrot.lane.b32.xlu0 %v204, 111
      %v217 = vpop.permute.xlu0 %216
      %218 = vrot.lane.b32.xlu0 %v205, 111
      %v219 = vpop.permute.xlu0 %218
      %220 = vrot.lane.b32.xlu0 %v206, 111
      %v221 = vpop.permute.xlu0 %220
      %222 = vrot.lane.b32.xlu0 %v207, 111
      %v223 = vpop.permute.xlu0 %222
      %224 = vrot.lane.b32.xlu0 %v208, 111
      %v225 = vpop.permute.xlu0 %224
      %v226 = vlaneseq
      %v227 = vand.u32 %v226, 127
      %vm228 = vcmp.lt.s32.totalorder %v227, 111
      %v229 = vsel %vm228, %v223, %v225
      %v230 = vsel %vm228, %v221, %v223
      %v231 = vsel %vm228, %v219, %v221
      %v232 = vsel %vm228, %v217, %v219
      %v233 = vsel %vm228, %v215, %v217
      %v234 = vsel %vm228, %v213, %v215
      %v235 = vsel %vm228, %v211, %v213
      %v236 = vsel %vm228, %v225, %v211
      %237 = vrot.lane.b32.xlu0 %v201, 110
      %v238 = vpop.permute.xlu0 %237
      %239 = vrot.lane.b32.xlu0 %v202, 110
      %v240 = vpop.permute.xlu0 %239
      %241 = vrot.lane.b32.xlu0 %v203, 110
      %v242 = vpop.permute.xlu0 %241
      %243 = vrot.lane.b32.xlu0 %v204, 110
      %v244 = vpop.permute.xlu0 %243
      %245 = vrot.lane.b32.xlu0 %v205, 110
      %v246 = vpop.permute.xlu0 %245
      %247 = vrot.lane.b32.xlu0 %v206, 110
      %v248 = vpop.permute.xlu0 %247
      %249 = vrot.lane.b32.xlu0 %v207, 110
      %v250 = vpop.permute.xlu0 %249
      %251 = vrot.lane.b32.xlu0 %v208, 110
      %v252 = vpop.permute.xlu0 %251
      %vm253 = vcmp.lt.s32.totalorder %v227, 110
      %v254 = vsel %vm253, %v250, %v252
      %v255 = vsel %vm253, %v248, %v250
      %v256 = vsel %vm253, %v246, %v248
      %v257 = vsel %vm253, %v244, %v246
      %v258 = vsel %vm253, %v242, %v244
      %v259 = vsel %vm253, %v240, %v242
      %v260 = vsel %vm253, %v238, %v240
      %v261 = vsel %vm253, %v252, %v238
      %v262 = vpack.c.bf16 %v261, %v236
      %v263 = vpack.c.bf16 %v260, %v235
      %v264 = vpack.c.bf16 %v259, %v234
      %v265 = vpack.c.bf16 %v258, %v233
      %v266 = vpack.c.bf16 %v257, %v232
      %v267 = vpack.c.bf16 %v256, %v231
      %v268 = vpack.c.bf16 %v255, %v230
      %v269 = vpack.c.bf16 %v254, %v229
      %v278 = vunpack.c.l.b16 %v262
      %v279 = vunpack.c.l.b16 %v263
      %v280 = vunpack.c.l.b16 %v264
      %v281 = vunpack.c.l.b16 %v265
      %v282 = vunpack.c.l.b16 %v266
      %v283 = vunpack.c.l.b16 %v267
      %v284 = vunpack.c.l.b16 %v268
      %v285 = vunpack.c.l.b16 %v269
      %v286 = vunpack.c.h.b16 %v262
      %v287 = vunpack.c.h.b16 %v263
      %v288 = vunpack.c.h.b16 %v264
      %v289 = vunpack.c.h.b16 %v265
      %v290 = vunpack.c.h.b16 %v266
      %v291 = vunpack.c.h.b16 %v267
      %v292 = vunpack.c.h.b16 %v268
      %v293 = vunpack.c.h.b16 %v269
      %v294 = vpack.c.b16 %v279, %v278
      %v295 = vpack.c.b16 %v281, %v280
      %v296 = vpack.c.b16 %v283, %v282
      %v297 = vpack.c.b16 %v285, %v284
      %v298 = vpack.c.b16 %v287, %v286
      %v299 = vpack.c.b16 %v289, %v288
      %v300 = vpack.c.b16 %v291, %v290
      %v301 = vpack.c.b16 %v293, %v292
      %310 = vst [vmem:[#allocation2] sm:$0xff] %v294
      %311 = vst [vmem:[#allocation2 + $0x8] sm:$0xff] %v295
      %312 = vst [vmem:[#allocation2 + $0x10] sm:$0xff] %v296
      %313 = vst [vmem:[#allocation2 + $0x18] sm:$0xff] %v297
      %314 = vst [vmem:[#allocation2 + $0x20] sm:$0xff] %v298
      %315 = vst [vmem:[#allocation2 + $0x28] sm:$0xff] %v299
      %316 = vst [vmem:[#allocation2 + $0x30] sm:$0xff] %v300
      %317 = vst [vmem:[#allocation2 + $0x38] sm:$0xff] %v301
      %318 = vrot.lane.b32.xlu0 %v201, 109
      %v319 = vpop.permute.xlu0 %318
      %320 = vrot.lane.b32.xlu0 %v202, 109
      %v321 = vpop.permute.xlu0 %320
      %322 = vrot.lane.b32.xlu0 %v203, 109
      %v323 = vpop.permute.xlu0 %322
      %324 = vrot.lane.b32.xlu0 %v204, 109
      %v325 = vpop.permute.xlu0 %324
      %326 = vrot.lane.b32.xlu0 %v205, 109
      %v327 = vpop.permute.xlu0 %326
      %328 = vrot.lane.b32.xlu0 %v206, 109
      %v329 = vpop.permute.xlu0 %328
      %330 = vrot.lane.b32.xlu0 %v207, 109
      %v331 = vpop.permute.xlu0 %330
      %332 = vrot.lane.b32.xlu0 %v208, 109
      %v333 = vpop.permute.xlu0 %332
      %vm334 = vcmp.lt.s32.totalorder %v227, 109
      %v335 = vsel %vm334, %v331, %v333
      %v336 = vsel %vm334, %v329, %v331
      %v337 = vsel %vm334, %v327, %v329
      %v338 = vsel %vm334, %v325, %v327
      %v339 = vsel %vm334, %v323, %v325
      %v340 = vsel %vm334, %v321, %v323
      %v341 = vsel %vm334, %v319, %v321
      %v342 = vsel %vm334, %v333, %v319
      %343 = vrot.lane.b32.xlu0 %v201, 101
      %v344 = vpop.permute.xlu0 %343
      %345 = vrot.lane.b32.xlu0 %v202, 101
      %v346 = vpop.permute.xlu0 %345
      %347 = vrot.lane.b32.xlu0 %v203, 101
      %v348 = vpop.permute.xlu0 %347
      %349 = vrot.lane.b32.xlu0 %v204, 101
      %v350 = vpop.permute.xlu0 %349
      %351 = vrot.lane.b32.xlu0 %v205, 101
      %v352 = vpop.permute.xlu0 %351
      %353 = vrot.lane.b32.xlu0 %v206, 101
      %v354 = vpop.permute.xlu0 %353
      %355 = vrot.lane.b32.xlu0 %v207, 101
      %v356 = vpop.permute.xlu0 %355
      %357 = vrot.lane.b32.xlu0 %v208, 101
      %v358 = vpop.permute.xlu0 %357
      %vm359 = vcmp.lt.s32.totalorder %v227, 101
      %v360 = vsel %vm359, %v356, %v358
      %v361 = vsel %vm359, %v354, %v356
      %v362 = vsel %vm359, %v352, %v354
      %v363 = vsel %vm359, %v350, %v352
      %v364 = vsel %vm359, %v348, %v350
      %v365 = vsel %vm359, %v346, %v348
      %v366 = vsel %vm359, %v344, %v346
      %v367 = vsel %vm359, %v358, %v344
      %v368 = vpack.c.bf16 %v367, %v342
      %v369 = vpack.c.bf16 %v366, %v341
      %v370 = vpack.c.bf16 %v365, %v340
      %v371 = vpack.c.bf16 %v364, %v339
      %v372 = vpack.c.bf16 %v363, %v338
      %v373 = vpack.c.bf16 %v362, %v337
      %v374 = vpack.c.bf16 %v361, %v336
      %v375 = vpack.c.bf16 %v360, %v335
      %v384 = vunpack.c.l.b16 %v368
      %v385 = vunpack.c.l.b16 %v369
      %v386 = vunpack.c.l.b16 %v370
      %v387 = vunpack.c.l.b16 %v371
      %v388 = vunpack.c.l.b16 %v372
      %v389 = vunpack.c.l.b16 %v373
      %v390 = vunpack.c.l.b16 %v374
      %v391 = vunpack.c.l.b16 %v375
      %v392 = vunpack.c.h.b16 %v368
      %v393 = vunpack.c.h.b16 %v369
      %v394 = vunpack.c.h.b16 %v370
      %v395 = vunpack.c.h.b16 %v371
      %v396 = vunpack.c.h.b16 %v372
      %v397 = vunpack.c.h.b16 %v373
      %v398 = vunpack.c.h.b16 %v374
      %v399 = vunpack.c.h.b16 %v375
      %v400 = vpack.c.b16 %v385, %v384
      %v401 = vpack.c.b16 %v387, %v386
      %v402 = vpack.c.b16 %v389, %v388
      %v403 = vpack.c.b16 %v391, %v390
      %v404 = vpack.c.b16 %v393, %v392
      %v405 = vpack.c.b16 %v395, %v394
      %v406 = vpack.c.b16 %v397, %v396
      %v407 = vpack.c.b16 %v399, %v398
      %416 = vst [vmem:[#allocation2 + $0x40] sm:$0xff] %v400
      %417 = vst [vmem:[#allocation2 + $0x48] sm:$0xff] %v401
      %418 = vst [vmem:[#allocation2 + $0x50] sm:$0xff] %v402
      %419 = vst [vmem:[#allocation2 + $0x58] sm:$0xff] %v403
      %420 = vst [vmem:[#allocation2 + $0x60] sm:$0xff] %v404
      %421 = vst [vmem:[#allocation2 + $0x68] sm:$0xff] %v405
      %422 = vst [vmem:[#allocation2 + $0x70] sm:$0xff] %v406
      %423 = vst [vmem:[#allocation2 + $0x78] sm:$0xff] %v407
      %424 = vrot.lane.b32.xlu0 %v201, 100
      %v425 = vpop.permute.xlu0 %424
      %426 = vrot.lane.b32.xlu0 %v202, 100
      %v427 = vpop.permute.xlu0 %426
      %428 = vrot.lane.b32.xlu0 %v203, 100
      %v429 = vpop.permute.xlu0 %428
      %430 = vrot.lane.b32.xlu0 %v204, 100
      %v431 = vpop.permute.xlu0 %430
      %432 = vrot.lane.b32.xlu0 %v205, 100
      %v433 = vpop.permute.xlu0 %432
      %434 = vrot.lane.b32.xlu0 %v206, 100
      %v435 = vpop.permute.xlu0 %434
      %436 = vrot.lane.b32.xlu0 %v207, 100
      %v437 = vpop.permute.xlu0 %436
      %438 = vrot.lane.b32.xlu0 %v208, 100
      %v439 = vpop.permute.xlu0 %438
      %vm440 = vcmp.lt.s32.totalorder %v227, 100
      %v441 = vsel %vm440, %v437, %v439
      %v442 = vsel %vm440, %v435, %v437
      %v443 = vsel %vm440, %v433, %v435
      %v444 = vsel %vm440, %v431, %v433
      %v445 = vsel %vm440, %v429, %v431
      %v446 = vsel %vm440, %v427, %v429
      %v447 = vsel %vm440, %v425, %v427
      %v448 = vsel %vm440, %v439, %v425
      %449 = vrot.lane.b32.xlu0 %v201, 99
      %v450 = vpop.permute.xlu0 %449
      %451 = vrot.lane.b32.xlu0 %v202, 99
      %v452 = vpop.permute.xlu0 %451
      %453 = vrot.lane.b32.xlu0 %v203, 99
      %v454 = vpop.permute.xlu0 %453
      %455 = vrot.lane.b32.xlu0 %v204, 99
      %v456 = vpop.permute.xlu0 %455
      %457 = vrot.lane.b32.xlu0 %v205, 99
      %v458 = vpop.permute.xlu0 %457
      %459 = vrot.lane.b32.xlu0 %v206, 99
      %v460 = vpop.permute.xlu0 %459
      %461 = vrot.lane.b32.xlu0 %v207, 99
      %v462 = vpop.permute.xlu0 %461
      %463 = vrot.lane.b32.xlu0 %v208, 99
      %v464 = vpop.permute.xlu0 %463
      %vm465 = vcmp.lt.s32.totalorder %v227, 99
      %v466 = vsel %vm465, %v462, %v464
      %v467 = vsel %vm465, %v460, %v462
      %v468 = vsel %vm465, %v458, %v460
      %v469 = vsel %vm465, %v456, %v458
      %v470 = vsel %vm465, %v454, %v456
      %v471 = vsel %vm465, %v452, %v454
      %v472 = vsel %vm465, %v450, %v452
      %v473 = vsel %vm465, %v464, %v450
      %v474 = vpack.c.bf16 %v473, %v448
      %v475 = vpack.c.bf16 %v472, %v447
      %v476 = vpack.c.bf16 %v471, %v446
      %v477 = vpack.c.bf16 %v470, %v445
      %v478 = vpack.c.bf16 %v469, %v444
      %v479 = vpack.c.bf16 %v468, %v443
      %v480 = vpack.c.bf16 %v467, %v442
      %v481 = vpack.c.bf16 %v466, %v441
      %v490 = vunpack.c.l.b16 %v474
      %v491 = vunpack.c.l.b16 %v475
      %v492 = vunpack.c.l.b16 %v476
      %v493 = vunpack.c.l.b16 %v477
      %v494 = vunpack.c.l.b16 %v478
      %v495 = vunpack.c.l.b16 %v479
      %v496 = vunpack.c.l.b16 %v480
      %v497 = vunpack.c.l.b16 %v481
      %v498 = vunpack.c.h.b16 %v474
      %v499 = vunpack.c.h.b16 %v475
      %v500 = vunpack.c.h.b16 %v476
      %v501 = vunpack.c.h.b16 %v477
      %v502 = vunpack.c.h.b16 %v478
      %v503 = vunpack.c.h.b16 %v479
      %v504 = vunpack.c.h.b16 %v480
      %v505 = vunpack.c.h.b16 %v481
      %v506 = vpack.c.b16 %v491, %v490
      %v507 = vpack.c.b16 %v493, %v492
      %v508 = vpack.c.b16 %v495, %v494
      %v509 = vpack.c.b16 %v497, %v496
      %v510 = vpack.c.b16 %v499, %v498
      %v511 = vpack.c.b16 %v501, %v500
      %v512 = vpack.c.b16 %v503, %v502
      %v513 = vpack.c.b16 %v505, %v504
      %522 = vst [vmem:[#allocation2 + $0x80] sm:$0xff] %v506
      %523 = vst [vmem:[#allocation2 + $0x88] sm:$0xff] %v507
      %524 = vst [vmem:[#allocation2 + $0x90] sm:$0xff] %v508
      %525 = vst [vmem:[#allocation2 + $0x98] sm:$0xff] %v509
      %526 = vst [vmem:[#allocation2 + $0xa0] sm:$0xff] %v510
      %527 = vst [vmem:[#allocation2 + $0xa8] sm:$0xff] %v511
      %528 = vst [vmem:[#allocation2 + $0xb0] sm:$0xff] %v512
      %529 = vst [vmem:[#allocation2 + $0xb8] sm:$0xff] %v513
      %530 = vrot.lane.b32.xlu0 %v201, 91
      %v531 = vpop.permute.xlu0 %530
      %532 = vrot.lane.b32.xlu0 %v202, 91
      %v533 = vpop.permute.xlu0 %532
      %534 = vrot.lane.b32.xlu0 %v203, 91
      %v535 = vpop.permute.xlu0 %534
      %536 = vrot.lane.b32.xlu0 %v204, 91
      %v537 = vpop.permute.xlu0 %536
      %538 = vrot.lane.b32.xlu0 %v205, 91
      %v539 = vpop.permute.xlu0 %538
      %540 = vrot.lane.b32.xlu0 %v206, 91
      %v541 = vpop.permute.xlu0 %540
      %542 = vrot.lane.b32.xlu0 %v207, 91
      %v543 = vpop.permute.xlu0 %542
      %544 = vrot.lane.b32.xlu0 %v208, 91
      %v545 = vpop.permute.xlu0 %544
      %vm546 = vcmp.lt.s32.totalorder %v227, 91
      %v547 = vsel %vm546, %v543, %v545
      %v548 = vsel %vm546, %v541, %v543
      %v549 = vsel %vm546, %v539, %v541
      %v550 = vsel %vm546, %v537, %v539
      %v551 = vsel %vm546, %v535, %v537
      %v552 = vsel %vm546, %v533, %v535
      %v553 = vsel %vm546, %v531, %v533
      %v554 = vsel %vm546, %v545, %v531
      %555 = vrot.lane.b32.xlu0 %v201, 90
      %v556 = vpop.permute.xlu0 %555
      %557 = vrot.lane.b32.xlu0 %v202, 90
      %v558 = vpop.permute.xlu0 %557
      %559 = vrot.lane.b32.xlu0 %v203, 90
      %v560 = vpop.permute.xlu0 %559
      %561 = vrot.lane.b32.xlu0 %v204, 90
      %v562 = vpop.permute.xlu0 %561
      %563 = vrot.lane.b32.xlu0 %v205, 90
      %v564 = vpop.permute.xlu0 %563
      %565 = vrot.lane.b32.xlu0 %v206, 90
      %v566 = vpop.permute.xlu0 %565
      %567 = vrot.lane.b32.xlu0 %v207, 90
      %v568 = vpop.permute.xlu0 %567
      %569 = vrot.lane.b32.xlu0 %v208, 90
      %v570 = vpop.permute.xlu0 %569
      %vm571 = vcmp.lt.s32.totalorder %v227, 90
      %v572 = vsel %vm571, %v568, %v570
      %v573 = vsel %vm571, %v566, %v568
      %v574 = vsel %vm571, %v564, %v566
      %v575 = vsel %vm571, %v562, %v564
      %v576 = vsel %vm571, %v560, %v562
      %v577 = vsel %vm571, %v558, %v560
      %v578 = vsel %vm571, %v556, %v558
      %v579 = vsel %vm571, %v570, %v556
      %v580 = vpack.c.bf16 %v579, %v554
      %v581 = vpack.c.bf16 %v578, %v553
      %v582 = vpack.c.bf16 %v577, %v552
      %v583 = vpack.c.bf16 %v576, %v551
      %v584 = vpack.c.bf16 %v575, %v550
      %v585 = vpack.c.bf16 %v574, %v549
      %v586 = vpack.c.bf16 %v573, %v548
      %v587 = vpack.c.bf16 %v572, %v547
      %v596 = vunpack.c.l.b16 %v580
      %v597 = vunpack.c.l.b16 %v581
      %v598 = vunpack.c.l.b16 %v582
      %v599 = vunpack.c.l.b16 %v583
      %v600 = vunpack.c.l.b16 %v584
      %v601 = vunpack.c.l.b16 %v585
      %v602 = vunpack.c.l.b16 %v586
      %v603 = vunpack.c.l.b16 %v587
      %v604 = vunpack.c.h.b16 %v580
      %v605 = vunpack.c.h.b16 %v581
      %v606 = vunpack.c.h.b16 %v582
      %v607 = vunpack.c.h.b16 %v583
      %v608 = vunpack.c.h.b16 %v584
      %v609 = vunpack.c.h.b16 %v585
      %v610 = vunpack.c.h.b16 %v586
      %v611 = vunpack.c.h.b16 %v587
      %v612 = vpack.c.b16 %v597, %v596
      %v613 = vpack.c.b16 %v599, %v598
      %v614 = vpack.c.b16 %v601, %v600
      %v615 = vpack.c.b16 %v603, %v602
      %v616 = vpack.c.b16 %v605, %v604
      %v617 = vpack.c.b16 %v607, %v606
      %v618 = vpack.c.b16 %v609, %v608
      %v619 = vpack.c.b16 %v611, %v610
      %628 = vst [vmem:[#allocation2 + $0xc0] sm:$0xff] %v612
      %629 = vst [vmem:[#allocation2 + $0xc8] sm:$0xff] %v613
      %630 = vst [vmem:[#allocation2 + $0xd0] sm:$0xff] %v614
      %631 = vst [vmem:[#allocation2 + $0xd8] sm:$0xff] %v615
      %632 = vst [vmem:[#allocation2 + $0xe0] sm:$0xff] %v616
      %633 = vst [vmem:[#allocation2 + $0xe8] sm:$0xff] %v617
      %634 = vst [vmem:[#allocation2 + $0xf0] sm:$0xff] %v618
      %635 = vst [vmem:[#allocation2 + $0xf8] sm:$0xff] %v619
      %636 = vrot.lane.b32.xlu0 %v201, 89
      %v637 = vpop.permute.xlu0 %636
      %638 = vrot.lane.b32.xlu0 %v202, 89
      %v639 = vpop.permute.xlu0 %638
      %640 = vrot.lane.b32.xlu0 %v203, 89
      %v641 = vpop.permute.xlu0 %640
      %642 = vrot.lane.b32.xlu0 %v204, 89
      %v643 = vpop.permute.xlu0 %642
      %644 = vrot.lane.b32.xlu0 %v205, 89
      %v645 = vpop.permute.xlu0 %644
      %646 = vrot.lane.b32.xlu0 %v206, 89
      %v647 = vpop.permute.xlu0 %646
      %648 = vrot.lane.b32.xlu0 %v207, 89
      %v649 = vpop.permute.xlu0 %648
      %650 = vrot.lane.b32.xlu0 %v208, 89
      %v651 = vpop.permute.xlu0 %650
      %vm652 = vcmp.lt.s32.totalorder %v227, 89
      %v653 = vsel %vm652, %v649, %v651
      %v654 = vsel %vm652, %v647, %v649
      %v655 = vsel %vm652, %v645, %v647
      %v656 = vsel %vm652, %v643, %v645
      %v657 = vsel %vm652, %v641, %v643
      %v658 = vsel %vm652, %v639, %v641
      %v659 = vsel %vm652, %v637, %v639
      %v660 = vsel %vm652, %v651, %v637
      %661 = vrot.lane.b32.xlu0 %v201, 11
      %v662 = vpop.permute.xlu0 %661
      %663 = vrot.lane.b32.xlu0 %v202, 11
      %v664 = vpop.permute.xlu0 %663
      %665 = vrot.lane.b32.xlu0 %v203, 11
      %v666 = vpop.permute.xlu0 %665
      %667 = vrot.lane.b32.xlu0 %v204, 11
      %v668 = vpop.permute.xlu0 %667
      %669 = vrot.lane.b32.xlu0 %v205, 11
      %v670 = vpop.permute.xlu0 %669
      %671 = vrot.lane.b32.xlu0 %v206, 11
      %v672 = vpop.permute.xlu0 %671
      %673 = vrot.lane.b32.xlu0 %v207, 11
      %v674 = vpop.permute.xlu0 %673
      %675 = vrot.lane.b32.xlu0 %v208, 11
      %v676 = vpop.permute.xlu0 %675
      %vm677 = vcmp.lt.s32.totalorder %v227, 11
      %v678 = vsel %vm677, %v674, %v676
      %v679 = vsel %vm677, %v672, %v674
      %v680 = vsel %vm677, %v670, %v672
      %v681 = vsel %vm677, %v668, %v670
      %v682 = vsel %vm677, %v666, %v668
      %v683 = vsel %vm677, %v664, %v666
      %v684 = vsel %vm677, %v662, %v664
      %v685 = vsel %vm677, %v676, %v662
      %v686 = vpack.c.bf16 %v685, %v660
      %v687 = vpack.c.bf16 %v684, %v659
      %v688 = vpack.c.bf16 %v683, %v658
      %v689 = vpack.c.bf16 %v682, %v657
      %v690 = vpack.c.bf16 %v681, %v656
      %v691 = vpack.c.bf16 %v680, %v655
      %v692 = vpack.c.bf16 %v679, %v654
      %v693 = vpack.c.bf16 %v678, %v653
      %v702 = vunpack.c.l.b16 %v686
      %v703 = vunpack.c.l.b16 %v687
      %v704 = vunpack.c.l.b16 %v688
      %v705 = vunpack.c.l.b16 %v689
      %v706 = vunpack.c.l.b16 %v690
      %v707 = vunpack.c.l.b16 %v691
      %v708 = vunpack.c.l.b16 %v692
      %v709 = vunpack.c.l.b16 %v693
      %v710 = vunpack.c.h.b16 %v686
      %v711 = vunpack.c.h.b16 %v687
      %v712 = vunpack.c.h.b16 %v688
      %v713 = vunpack.c.h.b16 %v689
      %v714 = vunpack.c.h.b16 %v690
      %v715 = vunpack.c.h.b16 %v691
      %v716 = vunpack.c.h.b16 %v692
      %v717 = vunpack.c.h.b16 %v693
      %v718 = vpack.c.b16 %v703, %v702
      %v719 = vpack.c.b16 %v705, %v704
      %v720 = vpack.c.b16 %v707, %v706
      %v721 = vpack.c.b16 %v709, %v708
      %v722 = vpack.c.b16 %v711, %v710
      %v723 = vpack.c.b16 %v713, %v712
      %v724 = vpack.c.b16 %v715, %v714
      %v725 = vpack.c.b16 %v717, %v716
      %734 = vst [vmem:[#allocation2 + $0x100] sm:$0xff] %v718
      %735 = vst [vmem:[#allocation2 + $0x108] sm:$0xff] %v719
      %736 = vst [vmem:[#allocation2 + $0x110] sm:$0xff] %v720
      %737 = vst [vmem:[#allocation2 + $0x118] sm:$0xff] %v721
      %738 = vst [vmem:[#allocation2 + $0x120] sm:$0xff] %v722
      %739 = vst [vmem:[#allocation2 + $0x128] sm:$0xff] %v723
      %740 = vst [vmem:[#allocation2 + $0x130] sm:$0xff] %v724
      %741 = vst [vmem:[#allocation2 + $0x138] sm:$0xff] %v725
      %742 = vrot.lane.b32.xlu0 %v201, 10
      %v743 = vpop.permute.xlu0 %742
      %744 = vrot.lane.b32.xlu0 %v202, 10
      %v745 = vpop.permute.xlu0 %744
      %746 = vrot.lane.b32.xlu0 %v203, 10
      %v747 = vpop.permute.xlu0 %746
      %748 = vrot.lane.b32.xlu0 %v204, 10
      %v749 = vpop.permute.xlu0 %748
      %750 = vrot.lane.b32.xlu0 %v205, 10
      %v751 = vpop.permute.xlu0 %750
      %752 = vrot.lane.b32.xlu0 %v206, 10
      %v753 = vpop.permute.xlu0 %752
      %754 = vrot.lane.b32.xlu0 %v207, 10
      %v755 = vpop.permute.xlu0 %754
      %756 = vrot.lane.b32.xlu0 %v208, 10
      %v757 = vpop.permute.xlu0 %756
      %vm758 = vcmp.lt.s32.totalorder %v227, 10
      %v759 = vsel %vm758, %v755, %v757
      %v760 = vsel %vm758, %v753, %v755
      %v761 = vsel %vm758, %v751, %v753
      %v762 = vsel %vm758, %v749, %v751
      %v763 = vsel %vm758, %v747, %v749
      %v764 = vsel %vm758, %v745, %v747
      %v765 = vsel %vm758, %v743, %v745
      %v766 = vsel %vm758, %v757, %v743
      %767 = vrot.lane.b32.xlu0 %v201, 9
      %v768 = vpop.permute.xlu0 %767
      %769 = vrot.lane.b32.xlu0 %v202, 9
      %v770 = vpop.permute.xlu0 %769
      %771 = vrot.lane.b32.xlu0 %v203, 9
      %v772 = vpop.permute.xlu0 %771
      %773 = vrot.lane.b32.xlu0 %v204, 9
      %v774 = vpop.permute.xlu0 %773
      %775 = vrot.lane.b32.xlu0 %v205, 9
      %v776 = vpop.permute.xlu0 %775
      %777 = vrot.lane.b32.xlu0 %v206, 9
      %v778 = vpop.permute.xlu0 %777
      %779 = vrot.lane.b32.xlu0 %v207, 9
      %v780 = vpop.permute.xlu0 %779
      %781 = vrot.lane.b32.xlu0 %v208, 9
      %v782 = vpop.permute.xlu0 %781
      %vm783 = vcmp.lt.s32.totalorder %v227, 9
      %v784 = vsel %vm783, %v780, %v782
      %v785 = vsel %vm783, %v778, %v780
      %v786 = vsel %vm783, %v776, %v778
      %v787 = vsel %vm783, %v774, %v776
      %v788 = vsel %vm783, %v772, %v774
      %v789 = vsel %vm783, %v770, %v772
      %v790 = vsel %vm783, %v768, %v770
      %v791 = vsel %vm783, %v782, %v768
      %v792 = vpack.c.bf16 %v791, %v766
      %v793 = vpack.c.bf16 %v790, %v765
      %v794 = vpack.c.bf16 %v789, %v764
      %v795 = vpack.c.bf16 %v788, %v763
      %v796 = vpack.c.bf16 %v787, %v762
      %v797 = vpack.c.bf16 %v786, %v761
      %v798 = vpack.c.bf16 %v785, %v760
      %v799 = vpack.c.bf16 %v784, %v759
      %v808 = vunpack.c.l.b16 %v792
      %v809 = vunpack.c.l.b16 %v793
      %v810 = vunpack.c.l.b16 %v794
      %v811 = vunpack.c.l.b16 %v795
      %v812 = vunpack.c.l.b16 %v796
      %v813 = vunpack.c.l.b16 %v797
      %v814 = vunpack.c.l.b16 %v798
      %v815 = vunpack.c.l.b16 %v799
      %v816 = vunpack.c.h.b16 %v792
      %v817 = vunpack.c.h.b16 %v793
      %v818 = vunpack.c.h.b16 %v794
      %v819 = vunpack.c.h.b16 %v795
      %v820 = vunpack.c.h.b16 %v796
      %v821 = vunpack.c.h.b16 %v797
      %v822 = vunpack.c.h.b16 %v798
      %v823 = vunpack.c.h.b16 %v799
      %v824 = vpack.c.b16 %v809, %v808
      %v825 = vpack.c.b16 %v811, %v810
      %v826 = vpack.c.b16 %v813, %v812
      %v827 = vpack.c.b16 %v815, %v814
      %v828 = vpack.c.b16 %v817, %v816
      %v829 = vpack.c.b16 %v819, %v818
      %v830 = vpack.c.b16 %v821, %v820
      %v831 = vpack.c.b16 %v823, %v822
      %840 = vst [vmem:[#allocation2 + $0x140] sm:$0xff] %v824
      %841 = vst [vmem:[#allocation2 + $0x148] sm:$0xff] %v825
      %842 = vst [vmem:[#allocation2 + $0x150] sm:$0xff] %v826
      %843 = vst [vmem:[#allocation2 + $0x158] sm:$0xff] %v827
      %844 = vst [vmem:[#allocation2 + $0x160] sm:$0xff] %v828
      %845 = vst [vmem:[#allocation2 + $0x168] sm:$0xff] %v829
      %846 = vst [vmem:[#allocation2 + $0x170] sm:$0xff] %v830
      %847 = vst [vmem:[#allocation2 + $0x178] sm:$0xff] %v831
      %848 = vrot.lane.b32.xlu0 %v201, 1
      %v849 = vpop.permute.xlu0 %848
      %850 = vrot.lane.b32.xlu0 %v202, 1
      %v851 = vpop.permute.xlu0 %850
      %852 = vrot.lane.b32.xlu0 %v203, 1
      %v853 = vpop.permute.xlu0 %852
      %854 = vrot.lane.b32.xlu0 %v204, 1
      %v855 = vpop.permute.xlu0 %854
      %856 = vrot.lane.b32.xlu0 %v205, 1
      %v857 = vpop.permute.xlu0 %856
      %858 = vrot.lane.b32.xlu0 %v206, 1
      %v859 = vpop.permute.xlu0 %858
      %860 = vrot.lane.b32.xlu0 %v207, 1
      %v861 = vpop.permute.xlu0 %860
      %862 = vrot.lane.b32.xlu0 %v208, 1
      %v863 = vpop.permute.xlu0 %862
      %vm864 = vcmp.lt.s32.totalorder %v227, 1
      %v865 = vsel %vm864, %v861, %v863
      %v866 = vsel %vm864, %v859, %v861
      %v867 = vsel %vm864, %v857, %v859
      %v868 = vsel %vm864, %v855, %v857
      %v869 = vsel %vm864, %v853, %v855
      %v870 = vsel %vm864, %v851, %v853
      %v871 = vsel %vm864, %v849, %v851
      %v872 = vsel %vm864, %v863, %v849
      %v873 = vpack.c.bf16 %v201, %v872
      %v874 = vpack.c.bf16 %v202, %v871
      %v875 = vpack.c.bf16 %v203, %v870
      %v876 = vpack.c.bf16 %v204, %v869
      %v877 = vpack.c.bf16 %v205, %v868
      %v878 = vpack.c.bf16 %v206, %v867
      %v879 = vpack.c.bf16 %v207, %v866
      %v880 = vpack.c.bf16 %v208, %v865
      %v889 = vunpack.c.l.b16 %v873
      %v890 = vunpack.c.l.b16 %v874
      %v891 = vunpack.c.l.b16 %v875
      %v892 = vunpack.c.l.b16 %v876
      %v893 = vunpack.c.l.b16 %v877
      %v894 = vunpack.c.l.b16 %v878
      %v895 = vunpack.c.l.b16 %v879
      %v896 = vunpack.c.l.b16 %v880
      %v897 = vunpack.c.h.b16 %v873
      %v898 = vunpack.c.h.b16 %v874
      %v899 = vunpack.c.h.b16 %v875
      %v900 = vunpack.c.h.b16 %v876
      %v901 = vunpack.c.h.b16 %v877
      %v902 = vunpack.c.h.b16 %v878
      %v903 = vunpack.c.h.b16 %v879
      %v904 = vunpack.c.h.b16 %v880
      %v905 = vpack.c.b16 %v890, %v889
      %v906 = vpack.c.b16 %v892, %v891
      %v907 = vpack.c.b16 %v894, %v893
      %v908 = vpack.c.b16 %v896, %v895
      %v909 = vpack.c.b16 %v898, %v897
      %v910 = vpack.c.b16 %v900, %v899
      %v911 = vpack.c.b16 %v902, %v901
      %v912 = vpack.c.b16 %v904, %v903
      %921 = vst [vmem:[#allocation2 + $0x180] sm:$0xff] %v905
      %922 = vst [vmem:[#allocation2 + $0x188] sm:$0xff] %v906
      %923 = vst [vmem:[#allocation2 + $0x190] sm:$0xff] %v907
      %924 = vst [vmem:[#allocation2 + $0x198] sm:$0xff] %v908
      %925 = vst [vmem:[#allocation2 + $0x1a0] sm:$0xff] %v909
      %926 = vst [vmem:[#allocation2 + $0x1a8] sm:$0xff] %v910
      %927 = vst [vmem:[#allocation2 + $0x1b0] sm:$0xff] %v911
      %928 = vst [vmem:[#allocation2 + $0x1b8] sm:$0xff] %v912
      %v929 = vld [vmem:[#allocation2] sm:$0xff]
      %v930 = vld [vmem:[#allocation2 + $0x8] sm:$0xff]
      %v931 = vld [vmem:[#allocation2 + $0x10] sm:$0xff]
      %v932 = vld [vmem:[#allocation2 + $0x18] sm:$0xff]
      %v933 = vld [vmem:[#allocation2 + $0x20] sm:$0xff]
      %v934 = vld [vmem:[#allocation2 + $0x28] sm:$0xff]
      %v935 = vld [vmem:[#allocation2 + $0x30] sm:$0xff]
      %v936 = vld [vmem:[#allocation2 + $0x38] sm:$0xff]
      %v937 = vld [vmem:[#allocation2 + $0x40] sm:$0xff]
      %v938 = vld [vmem:[#allocation2 + $0x48] sm:$0xff]
      %v939 = vld [vmem:[#allocation2 + $0x50] sm:$0xff]
      %v940 = vld [vmem:[#allocation2 + $0x58] sm:$0xff]
      %v941 = vld [vmem:[#allocation2 + $0x60] sm:$0xff]
      %v942 = vld [vmem:[#allocation2 + $0x68] sm:$0xff]
      %v943 = vld [vmem:[#allocation2 + $0x70] sm:$0xff]
      %v944 = vld [vmem:[#allocation2 + $0x78] sm:$0xff]
      %v945 = vld [vmem:[#allocation2 + $0x80] sm:$0xff]
      %v946 = vld [vmem:[#allocation2 + $0x88] sm:$0xff]
      %v947 = vld [vmem:[#allocation2 + $0x90] sm:$0xff]
      %v948 = vld [vmem:[#allocation2 + $0x98] sm:$0xff]
      %v949 = vld [vmem:[#allocation2 + $0xa0] sm:$0xff]
      %v950 = vld [vmem:[#allocation2 + $0xa8] sm:$0xff]
      %v951 = vld [vmem:[#allocation2 + $0xb0] sm:$0xff]
      %v952 = vld [vmem:[#allocation2 + $0xb8] sm:$0xff]
      %v953 = vld [vmem:[#allocation2 + $0xc0] sm:$0xff]
      %v954 = vld [vmem:[#allocation2 + $0xc8] sm:$0xff]
      %v955 = vld [vmem:[#allocation2 + $0xd0] sm:$0xff]
      %v956 = vld [vmem:[#allocation2 + $0xd8] sm:$0xff]
      %v957 = vld [vmem:[#allocation2 + $0xe0] sm:$0xff]
      %v958 = vld [vmem:[#allocation2 + $0xe8] sm:$0xff]
      %v959 = vld [vmem:[#allocation2 + $0xf0] sm:$0xff]
      %v960 = vld [vmem:[#allocation2 + $0xf8] sm:$0xff]
      %v961 = vld [vmem:[#allocation2 + $0x100] sm:$0xff]
      %v962 = vld [vmem:[#allocation2 + $0x108] sm:$0xff]
      %v963 = vld [vmem:[#allocation2 + $0x110] sm:$0xff]
      %v964 = vld [vmem:[#allocation2 + $0x118] sm:$0xff]
      %v965 = vld [vmem:[#allocation2 + $0x120] sm:$0xff]
      %v966 = vld [vmem:[#allocation2 + $0x128] sm:$0xff]
      %v967 = vld [vmem:[#allocation2 + $0x130] sm:$0xff]
      %v968 = vld [vmem:[#allocation2 + $0x138] sm:$0xff]
      %v969 = vld [vmem:[#allocation2 + $0x140] sm:$0xff]
      %v970 = vld [vmem:[#allocation2 + $0x148] sm:$0xff]
      %v971 = vld [vmem:[#allocation2 + $0x150] sm:$0xff]
      %v972 = vld [vmem:[#allocation2 + $0x158] sm:$0xff]
      %v973 = vld [vmem:[#allocation2 + $0x160] sm:$0xff]
      %v974 = vld [vmem:[#allocation2 + $0x168] sm:$0xff]
      %v975 = vld [vmem:[#allocation2 + $0x170] sm:$0xff]
      %v976 = vld [vmem:[#allocation2 + $0x178] sm:$0xff]
      %v977 = vld [vmem:[#allocation2 + $0x180] sm:$0xff]
      %v978 = vld [vmem:[#allocation2 + $0x188] sm:$0xff]
      %v979 = vld [vmem:[#allocation2 + $0x190] sm:$0xff]
      %v980 = vld [vmem:[#allocation2 + $0x198] sm:$0xff]
      %v981 = vld [vmem:[#allocation2 + $0x1a0] sm:$0xff]
      %v982 = vld [vmem:[#allocation2 + $0x1a8] sm:$0xff]
      %v983 = vld [vmem:[#allocation2 + $0x1b0] sm:$0xff]
      %v984 = vld [vmem:[#allocation2 + $0x1b8] sm:$0xff]
      %985 = vrot.lane.b32.xlu0 %v201, 127
      %v986 = vpop.permute.xlu0 %985
      %987 = vrot.lane.b32.xlu0 %v202, 127
      %v988 = vpop.permute.xlu0 %987
      %989 = vrot.lane.b32.xlu0 %v203, 127
      %v990 = vpop.permute.xlu0 %989
      %991 = vrot.lane.b32.xlu0 %v204, 127
      %v992 = vpop.permute.xlu0 %991
      %993 = vrot.lane.b32.xlu0 %v205, 127
      %v994 = vpop.permute.xlu0 %993
      %995 = vrot.lane.b32.xlu0 %v206, 127
      %v996 = vpop.permute.xlu0 %995
      %997 = vrot.lane.b32.xlu0 %v207, 127
      %v998 = vpop.permute.xlu0 %997
      %999 = vrot.lane.b32.xlu0 %v208, 127
      %v1000 = vpop.permute.xlu0 %999
      %vm1001 = vcmp.lt.s32.totalorder %v227, 127
      %v1002 = vsel %vm1001, %v998, %v1000
      %v1003 = vsel %vm1001, %v996, %v998
      %v1004 = vsel %vm1001, %v994, %v996
      %v1005 = vsel %vm1001, %v992, %v994
      %v1006 = vsel %vm1001, %v990, %v992
      %v1007 = vsel %vm1001, %v988, %v990
      %v1008 = vsel %vm1001, %v986, %v988
      %v1009 = vsel %vm1001, %v1000, %v986
      %1010 = vrot.lane.b32.xlu0 %v201, 119
      %v1011 = vpop.permute.xlu0 %1010
      %1012 = vrot.lane.b32.xlu0 %v202, 119
      %v1013 = vpop.permute.xlu0 %1012
      %1014 = vrot.lane.b32.xlu0 %v203, 119
      %v1015 = vpop.permute.xlu0 %1014
      %1016 = vrot.lane.b32.xlu0 %v204, 119
      %v1017 = vpop.permute.xlu0 %1016
      %1018 = vrot.lane.b32.xlu0 %v205, 119
      %v1019 = vpop.permute.xlu0 %1018
      %1020 = vrot.lane.b32.xlu0 %v206, 119
      %v1021 = vpop.permute.xlu0 %1020
      %1022 = vrot.lane.b32.xlu0 %v207, 119
      %v1023 = vpop.permute.xlu0 %1022
      %1024 = vrot.lane.b32.xlu0 %v208, 119
      %v1025 = vpop.permute.xlu0 %1024
      %vm1026 = vcmp.lt.s32.totalorder %v227, 119
      %v1027 = vsel %vm1026, %v1023, %v1025
      %v1028 = vsel %vm1026, %v1021, %v1023
      %v1029 = vsel %vm1026, %v1019, %v1021
      %v1030 = vsel %vm1026, %v1017, %v1019
      %v1031 = vsel %vm1026, %v1015, %v1017
      %v1032 = vsel %vm1026, %v1013, %v1015
      %v1033 = vsel %vm1026, %v1011, %v1013
      %v1034 = vsel %vm1026, %v1025, %v1011
      %v1035 = vpack.c.bf16 %v1033, %v1008
      %v1036 = vpack.c.bf16 %v1032, %v1007
      %v1037 = vpack.c.bf16 %v1031, %v1006
      %v1038 = vpack.c.bf16 %v1030, %v1005
      %v1039 = vpack.c.bf16 %v1029, %v1004
      %v1040 = vpack.c.bf16 %v1028, %v1003
      %v1041 = vpack.c.bf16 %v1027, %v1002
      %v1042 = vpack.c.bf16 %v1034, %v1009
      %v1051 = vunpack.c.l.b16 %v1035
      %v1052 = vunpack.c.l.b16 %v1036
      %v1053 = vunpack.c.l.b16 %v1037
      %v1054 = vunpack.c.l.b16 %v1038
      %v1055 = vunpack.c.l.b16 %v1039
      %v1056 = vunpack.c.l.b16 %v1040
      %v1057 = vunpack.c.l.b16 %v1041
      %v1058 = vunpack.c.l.b16 %v1042
      %v1059 = vunpack.c.h.b16 %v1035
      %v1060 = vunpack.c.h.b16 %v1036
      %v1061 = vunpack.c.h.b16 %v1037
      %v1062 = vunpack.c.h.b16 %v1038
      %v1063 = vunpack.c.h.b16 %v1039
      %v1064 = vunpack.c.h.b16 %v1040
      %v1065 = vunpack.c.h.b16 %v1041
      %v1066 = vunpack.c.h.b16 %v1042
      %v1067 = vpack.c.b16 %v1052, %v1051
      %v1068 = vpack.c.b16 %v1054, %v1053
      %v1069 = vpack.c.b16 %v1056, %v1055
      %v1070 = vpack.c.b16 %v1058, %v1057
      %v1071 = vpack.c.b16 %v1060, %v1059
      %v1072 = vpack.c.b16 %v1062, %v1061
      %v1073 = vpack.c.b16 %v1064, %v1063
      %v1074 = vpack.c.b16 %v1066, %v1065
      %1083 = vst [vmem:[#allocation2 + $0x200] sm:$0xff] %v1067
      %1084 = vst [vmem:[#allocation2 + $0x208] sm:$0xff] %v1068
      %1085 = vst [vmem:[#allocation2 + $0x210] sm:$0xff] %v1069
      %1086 = vst [vmem:[#allocation2 + $0x218] sm:$0xff] %v1070
      %1087 = vst [vmem:[#allocation2 + $0x220] sm:$0xff] %v1071
      %1088 = vst [vmem:[#allocation2 + $0x228] sm:$0xff] %v1072
      %1089 = vst [vmem:[#allocation2 + $0x230] sm:$0xff] %v1073
      %1090 = vst [vmem:[#allocation2 + $0x238] sm:$0xff] %v1074
      %1091 = vrot.lane.b32.xlu0 %v201, 118
      %v1092 = vpop.permute.xlu0 %1091
      %1093 = vrot.lane.b32.xlu0 %v202, 118
      %v1094 = vpop.permute.xlu0 %1093
      %1095 = vrot.lane.b32.xlu0 %v203, 118
      %v1096 = vpop.permute.xlu0 %1095
      %1097 = vrot.lane.b32.xlu0 %v204, 118
      %v1098 = vpop.permute.xlu0 %1097
      %1099 = vrot.lane.b32.xlu0 %v205, 118
      %v1100 = vpop.permute.xlu0 %1099
      %1101 = vrot.lane.b32.xlu0 %v206, 118
      %v1102 = vpop.permute.xlu0 %1101
      %1103 = vrot.lane.b32.xlu0 %v207, 118
      %v1104 = vpop.permute.xlu0 %1103
      %1105 = vrot.lane.b32.xlu0 %v208, 118
      %v1106 = vpop.permute.xlu0 %1105
      %vm1107 = vcmp.lt.s32.totalorder %v227, 118
      %v1108 = vsel %vm1107, %v1104, %v1106
      %v1109 = vsel %vm1107, %v1102, %v1104
      %v1110 = vsel %vm1107, %v1100, %v1102
      %v1111 = vsel %vm1107, %v1098, %v1100
      %v1112 = vsel %vm1107, %v1096, %v1098
      %v1113 = vsel %vm1107, %v1094, %v1096
      %v1114 = vsel %vm1107, %v1092, %v1094
      %v1115 = vsel %vm1107, %v1106, %v1092
      %1116 = vrot.lane.b32.xlu0 %v201, 117
      %v1117 = vpop.permute.xlu0 %1116
      %1118 = vrot.lane.b32.xlu0 %v202, 117
      %v1119 = vpop.permute.xlu0 %1118
      %1120 = vrot.lane.b32.xlu0 %v203, 117
      %v1121 = vpop.permute.xlu0 %1120
      %1122 = vrot.lane.b32.xlu0 %v204, 117
      %v1123 = vpop.permute.xlu0 %1122
      %1124 = vrot.lane.b32.xlu0 %v205, 117
      %v1125 = vpop.permute.xlu0 %1124
      %1126 = vrot.lane.b32.xlu0 %v206, 117
      %v1127 = vpop.permute.xlu0 %1126
      %1128 = vrot.lane.b32.xlu0 %v207, 117
      %v1129 = vpop.permute.xlu0 %1128
      %1130 = vrot.lane.b32.xlu0 %v208, 117
      %v1131 = vpop.permute.xlu0 %1130
      %vm1132 = vcmp.lt.s32.totalorder %v227, 117
      %v1133 = vsel %vm1132, %v1129, %v1131
      %v1134 = vsel %vm1132, %v1127, %v1129
      %v1135 = vsel %vm1132, %v1125, %v1127
      %v1136 = vsel %vm1132, %v1123, %v1125
      %v1137 = vsel %vm1132, %v1121, %v1123
      %v1138 = vsel %vm1132, %v1119, %v1121
      %v1139 = vsel %vm1132, %v1117, %v1119
      %v1140 = vsel %vm1132, %v1131, %v1117
      %v1141 = vpack.c.bf16 %v1139, %v1114
      %v1142 = vpack.c.bf16 %v1138, %v1113
      %v1143 = vpack.c.bf16 %v1137, %v1112
      %v1144 = vpack.c.bf16 %v1136, %v1111
      %v1145 = vpack.c.bf16 %v1135, %v1110
      %v1146 = vpack.c.bf16 %v1134, %v1109
      %v1147 = vpack.c.bf16 %v1133, %v1108
      %v1148 = vpack.c.bf16 %v1140, %v1115
      %v1157 = vunpack.c.l.b16 %v1141
      %v1158 = vunpack.c.l.b16 %v1142
      %v1159 = vunpack.c.l.b16 %v1143
      %v1160 = vunpack.c.l.b16 %v1144
      %v1161 = vunpack.c.l.b16 %v1145
      %v1162 = vunpack.c.l.b16 %v1146
      %v1163 = vunpack.c.l.b16 %v1147
      %v1164 = vunpack.c.l.b16 %v1148
      %v1165 = vunpack.c.h.b16 %v1141
      %v1166 = vunpack.c.h.b16 %v1142
      %v1167 = vunpack.c.h.b16 %v1143
      %v1168 = vunpack.c.h.b16 %v1144
      %v1169 = vunpack.c.h.b16 %v1145
      %v1170 = vunpack.c.h.b16 %v1146
      %v1171 = vunpack.c.h.b16 %v1147
      %v1172 = vunpack.c.h.b16 %v1148
      %v1173 = vpack.c.b16 %v1158, %v1157
      %v1174 = vpack.c.b16 %v1160, %v1159
      %v1175 = vpack.c.b16 %v1162, %v1161
      %v1176 = vpack.c.b16 %v1164, %v1163
      %v1177 = vpack.c.b16 %v1166, %v1165
      %v1178 = vpack.c.b16 %v1168, %v1167
      %v1179 = vpack.c.b16 %v1170, %v1169
      %v1180 = vpack.c.b16 %v1172, %v1171
      %1189 = vst [vmem:[#allocation2 + $0x240] sm:$0xff] %v1173
      %1190 = vst [vmem:[#allocation2 + $0x248] sm:$0xff] %v1174
      %1191 = vst [vmem:[#allocation2 + $0x250] sm:$0xff] %v1175
      %1192 = vst [vmem:[#allocation2 + $0x258] sm:$0xff] %v1176
      %1193 = vst [vmem:[#allocation2 + $0x260] sm:$0xff] %v1177
      %1194 = vst [vmem:[#allocation2 + $0x268] sm:$0xff] %v1178
      %1195 = vst [vmem:[#allocation2 + $0x270] sm:$0xff] %v1179
      %1196 = vst [vmem:[#allocation2 + $0x278] sm:$0xff] %v1180
      %1197 = vrot.lane.b32.xlu0 %v201, 39
      %v1198 = vpop.permute.xlu0 %1197
      %1199 = vrot.lane.b32.xlu0 %v202, 39
      %v1200 = vpop.permute.xlu0 %1199
      %1201 = vrot.lane.b32.xlu0 %v203, 39
      %v1202 = vpop.permute.xlu0 %1201
      %1203 = vrot.lane.b32.xlu0 %v204, 39
      %v1204 = vpop.permute.xlu0 %1203
      %1205 = vrot.lane.b32.xlu0 %v205, 39
      %v1206 = vpop.permute.xlu0 %1205
      %1207 = vrot.lane.b32.xlu0 %v206, 39
      %v1208 = vpop.permute.xlu0 %1207
      %1209 = vrot.lane.b32.xlu0 %v207, 39
      %v1210 = vpop.permute.xlu0 %1209
      %1211 = vrot.lane.b32.xlu0 %v208, 39
      %v1212 = vpop.permute.xlu0 %1211
      %vm1213 = vcmp.lt.s32.totalorder %v227, 39
      %v1214 = vsel %vm1213, %v1210, %v1212
      %v1215 = vsel %vm1213, %v1208, %v1210
      %v1216 = vsel %vm1213, %v1206, %v1208
      %v1217 = vsel %vm1213, %v1204, %v1206
      %v1218 = vsel %vm1213, %v1202, %v1204
      %v1219 = vsel %vm1213, %v1200, %v1202
      %v1220 = vsel %vm1213, %v1198, %v1200
      %v1221 = vsel %vm1213, %v1212, %v1198
      %1222 = vrot.lane.b32.xlu0 %v201, 38
      %v1223 = vpop.permute.xlu0 %1222
      %1224 = vrot.lane.b32.xlu0 %v202, 38
      %v1225 = vpop.permute.xlu0 %1224
      %1226 = vrot.lane.b32.xlu0 %v203, 38
      %v1227 = vpop.permute.xlu0 %1226
      %1228 = vrot.lane.b32.xlu0 %v204, 38
      %v1229 = vpop.permute.xlu0 %1228
      %1230 = vrot.lane.b32.xlu0 %v205, 38
      %v1231 = vpop.permute.xlu0 %1230
      %1232 = vrot.lane.b32.xlu0 %v206, 38
      %v1233 = vpop.permute.xlu0 %1232
      %1234 = vrot.lane.b32.xlu0 %v207, 38
      %v1235 = vpop.permute.xlu0 %1234
      %1236 = vrot.lane.b32.xlu0 %v208, 38
      %v1237 = vpop.permute.xlu0 %1236
      %vm1238 = vcmp.lt.s32.totalorder %v227, 38
      %v1239 = vsel %vm1238, %v1235, %v1237
      %v1240 = vsel %vm1238, %v1233, %v1235
      %v1241 = vsel %vm1238, %v1231, %v1233
      %v1242 = vsel %vm1238, %v1229, %v1231
      %v1243 = vsel %vm1238, %v1227, %v1229
      %v1244 = vsel %vm1238, %v1225, %v1227
      %v1245 = vsel %vm1238, %v1223, %v1225
      %v1246 = vsel %vm1238, %v1237, %v1223
      %v1247 = vpack.c.bf16 %v1245, %v1220
      %v1248 = vpack.c.bf16 %v1244, %v1219
      %v1249 = vpack.c.bf16 %v1243, %v1218
      %v1250 = vpack.c.bf16 %v1242, %v1217
      %v1251 = vpack.c.bf16 %v1241, %v1216
      %v1252 = vpack.c.bf16 %v1240, %v1215
      %v1253 = vpack.c.bf16 %v1239, %v1214
      %v1254 = vpack.c.bf16 %v1246, %v1221
      %v1263 = vunpack.c.l.b16 %v1247
      %v1264 = vunpack.c.l.b16 %v1248
      %v1265 = vunpack.c.l.b16 %v1249
      %v1266 = vunpack.c.l.b16 %v1250
      %v1267 = vunpack.c.l.b16 %v1251
      %v1268 = vunpack.c.l.b16 %v1252
      %v1269 = vunpack.c.l.b16 %v1253
      %v1270 = vunpack.c.l.b16 %v1254
      %v1271 = vunpack.c.h.b16 %v1247
      %v1272 = vunpack.c.h.b16 %v1248
      %v1273 = vunpack.c.h.b16 %v1249
      %v1274 = vunpack.c.h.b16 %v1250
      %v1275 = vunpack.c.h.b16 %v1251
      %v1276 = vunpack.c.h.b16 %v1252
      %v1277 = vunpack.c.h.b16 %v1253
      %v1278 = vunpack.c.h.b16 %v1254
      %v1279 = vpack.c.b16 %v1264, %v1263
      %v1280 = vpack.c.b16 %v1266, %v1265
      %v1281 = vpack.c.b16 %v1268, %v1267
      %v1282 = vpack.c.b16 %v1270, %v1269
      %v1283 = vpack.c.b16 %v1272, %v1271
      %v1284 = vpack.c.b16 %v1274, %v1273
      %v1285 = vpack.c.b16 %v1276, %v1275
      %v1286 = vpack.c.b16 %v1278, %v1277
      %1295 = vst [vmem:[#allocation2 + $0x280] sm:$0xff] %v1279
      %1296 = vst [vmem:[#allocation2 + $0x288] sm:$0xff] %v1280
      %1297 = vst [vmem:[#allocation2 + $0x290] sm:$0xff] %v1281
      %1298 = vst [vmem:[#allocation2 + $0x298] sm:$0xff] %v1282
      %1299 = vst [vmem:[#allocation2 + $0x2a0] sm:$0xff] %v1283
      %1300 = vst [vmem:[#allocation2 + $0x2a8] sm:$0xff] %v1284
      %1301 = vst [vmem:[#allocation2 + $0x2b0] sm:$0xff] %v1285
      %1302 = vst [vmem:[#allocation2 + $0x2b8] sm:$0xff] %v1286
      %1303 = vrot.lane.b32.xlu0 %v201, 37
      %v1304 = vpop.permute.xlu0 %1303
      %1305 = vrot.lane.b32.xlu0 %v202, 37
      %v1306 = vpop.permute.xlu0 %1305
      %1307 = vrot.lane.b32.xlu0 %v203, 37
      %v1308 = vpop.permute.xlu0 %1307
      %1309 = vrot.lane.b32.xlu0 %v204, 37
      %v1310 = vpop.permute.xlu0 %1309
      %1311 = vrot.lane.b32.xlu0 %v205, 37
      %v1312 = vpop.permute.xlu0 %1311
      %1313 = vrot.lane.b32.xlu0 %v206, 37
      %v1314 = vpop.permute.xlu0 %1313
      %1315 = vrot.lane.b32.xlu0 %v207, 37
      %v1316 = vpop.permute.xlu0 %1315
      %1317 = vrot.lane.b32.xlu0 %v208, 37
      %v1318 = vpop.permute.xlu0 %1317
      %vm1319 = vcmp.lt.s32.totalorder %v227, 37
      %v1320 = vsel %vm1319, %v1316, %v1318
      %v1321 = vsel %vm1319, %v1314, %v1316
      %v1322 = vsel %vm1319, %v1312, %v1314
      %v1323 = vsel %vm1319, %v1310, %v1312
      %v1324 = vsel %vm1319, %v1308, %v1310
      %v1325 = vsel %vm1319, %v1306, %v1308
      %v1326 = vsel %vm1319, %v1304, %v1306
      %v1327 = vsel %vm1319, %v1318, %v1304
      %1328 = vrot.lane.b32.xlu0 %v201, 29
      %v1329 = vpop.permute.xlu0 %1328
      %1330 = vrot.lane.b32.xlu0 %v202, 29
      %v1331 = vpop.permute.xlu0 %1330
      %1332 = vrot.lane.b32.xlu0 %v203, 29
      %v1333 = vpop.permute.xlu0 %1332
      %1334 = vrot.lane.b32.xlu0 %v204, 29
      %v1335 = vpop.permute.xlu0 %1334
      %1336 = vrot.lane.b32.xlu0 %v205, 29
      %v1337 = vpop.permute.xlu0 %1336
      %1338 = vrot.lane.b32.xlu0 %v206, 29
      %v1339 = vpop.permute.xlu0 %1338
      %1340 = vrot.lane.b32.xlu0 %v207, 29
      %v1341 = vpop.permute.xlu0 %1340
      %1342 = vrot.lane.b32.xlu0 %v208, 29
      %v1343 = vpop.permute.xlu0 %1342
      %vm1344 = vcmp.lt.s32.totalorder %v227, 29
      %v1345 = vsel %vm1344, %v1341, %v1343
      %v1346 = vsel %vm1344, %v1339, %v1341
      %v1347 = vsel %vm1344, %v1337, %v1339
      %v1348 = vsel %vm1344, %v1335, %v1337
      %v1349 = vsel %vm1344, %v1333, %v1335
      %v1350 = vsel %vm1344, %v1331, %v1333
      %v1351 = vsel %vm1344, %v1329, %v1331
      %v1352 = vsel %vm1344, %v1343, %v1329
      %v1353 = vpack.c.bf16 %v1351, %v1326
      %v1354 = vpack.c.bf16 %v1350, %v1325
      %v1355 = vpack.c.bf16 %v1349, %v1324
      %v1356 = vpack.c.bf16 %v1348, %v1323
      %v1357 = vpack.c.bf16 %v1347, %v1322
      %v1358 = vpack.c.bf16 %v1346, %v1321
      %v1359 = vpack.c.bf16 %v1345, %v1320
      %v1360 = vpack.c.bf16 %v1352, %v1327
      %v1369 = vunpack.c.l.b16 %v1353
      %v1370 = vunpack.c.l.b16 %v1354
      %v1371 = vunpack.c.l.b16 %v1355
      %v1372 = vunpack.c.l.b16 %v1356
      %v1373 = vunpack.c.l.b16 %v1357
      %v1374 = vunpack.c.l.b16 %v1358
      %v1375 = vunpack.c.l.b16 %v1359
      %v1376 = vunpack.c.l.b16 %v1360
      %v1377 = vunpack.c.h.b16 %v1353
      %v1378 = vunpack.c.h.b16 %v1354
      %v1379 = vunpack.c.h.b16 %v1355
      %v1380 = vunpack.c.h.b16 %v1356
      %v1381 = vunpack.c.h.b16 %v1357
      %v1382 = vunpack.c.h.b16 %v1358
      %v1383 = vunpack.c.h.b16 %v1359
      %v1384 = vunpack.c.h.b16 %v1360
      %v1385 = vpack.c.b16 %v1370, %v1369
      %v1386 = vpack.c.b16 %v1372, %v1371
      %v1387 = vpack.c.b16 %v1374, %v1373
      %v1388 = vpack.c.b16 %v1376, %v1375
      %v1389 = vpack.c.b16 %v1378, %v1377
      %v1390 = vpack.c.b16 %v1380, %v1379
      %v1391 = vpack.c.b16 %v1382, %v1381
      %v1392 = vpack.c.b16 %v1384, %v1383
      %1401 = vst [vmem:[#allocation2 + $0x2c0] sm:$0xff] %v1385
      %1402 = vst [vmem:[#allocation2 + $0x2c8] sm:$0xff] %v1386
      %1403 = vst [vmem:[#allocation2 + $0x2d0] sm:$0xff] %v1387
      %1404 = vst [vmem:[#allocation2 + $0x2d8] sm:$0xff] %v1388
      %1405 = vst [vmem:[#allocation2 + $0x2e0] sm:$0xff] %v1389
      %1406 = vst [vmem:[#allocation2 + $0x2e8] sm:$0xff] %v1390
      %1407 = vst [vmem:[#allocation2 + $0x2f0] sm:$0xff] %v1391
      %1408 = vst [vmem:[#allocation2 + $0x2f8] sm:$0xff] %v1392
      %1409 = vrot.lane.b32.xlu0 %v201, 28
      %v1410 = vpop.permute.xlu0 %1409
      %1411 = vrot.lane.b32.xlu0 %v202, 28
      %v1412 = vpop.permute.xlu0 %1411
      %1413 = vrot.lane.b32.xlu0 %v203, 28
      %v1414 = vpop.permute.xlu0 %1413
      %1415 = vrot.lane.b32.xlu0 %v204, 28
      %v1416 = vpop.permute.xlu0 %1415
      %1417 = vrot.lane.b32.xlu0 %v205, 28
      %v1418 = vpop.permute.xlu0 %1417
      %1419 = vrot.lane.b32.xlu0 %v206, 28
      %v1420 = vpop.permute.xlu0 %1419
      %1421 = vrot.lane.b32.xlu0 %v207, 28
      %v1422 = vpop.permute.xlu0 %1421
      %1423 = vrot.lane.b32.xlu0 %v208, 28
      %v1424 = vpop.permute.xlu0 %1423
      %vm1425 = vcmp.lt.s32.totalorder %v227, 28
      %v1426 = vsel %vm1425, %v1422, %v1424
      %v1427 = vsel %vm1425, %v1420, %v1422
      %v1428 = vsel %vm1425, %v1418, %v1420
      %v1429 = vsel %vm1425, %v1416, %v1418
      %v1430 = vsel %vm1425, %v1414, %v1416
      %v1431 = vsel %vm1425, %v1412, %v1414
      %v1432 = vsel %vm1425, %v1410, %v1412
      %v1433 = vsel %vm1425, %v1424, %v1410
      %1434 = vrot.lane.b32.xlu0 %v201, 27
      %v1435 = vpop.permute.xlu0 %1434
      %1436 = vrot.lane.b32.xlu0 %v202, 27
      %v1437 = vpop.permute.xlu0 %1436
      %1438 = vrot.lane.b32.xlu0 %v203, 27
      %v1439 = vpop.permute.xlu0 %1438
      %1440 = vrot.lane.b32.xlu0 %v204, 27
      %v1441 = vpop.permute.xlu0 %1440
      %1442 = vrot.lane.b32.xlu0 %v205, 27
      %v1443 = vpop.permute.xlu0 %1442
      %1444 = vrot.lane.b32.xlu0 %v206, 27
      %v1445 = vpop.permute.xlu0 %1444
      %1446 = vrot.lane.b32.xlu0 %v207, 27
      %v1447 = vpop.permute.xlu0 %1446
      %1448 = vrot.lane.b32.xlu0 %v208, 27
      %v1449 = vpop.permute.xlu0 %1448
      %vm1450 = vcmp.lt.s32.totalorder %v227, 27
      %v1451 = vsel %vm1450, %v1447, %v1449
      %v1452 = vsel %vm1450, %v1445, %v1447
      %v1453 = vsel %vm1450, %v1443, %v1445
      %v1454 = vsel %vm1450, %v1441, %v1443
      %v1455 = vsel %vm1450, %v1439, %v1441
      %v1456 = vsel %vm1450, %v1437, %v1439
      %v1457 = vsel %vm1450, %v1435, %v1437
      %v1458 = vsel %vm1450, %v1449, %v1435
      %v1459 = vpack.c.bf16 %v1457, %v1432
      %v1460 = vpack.c.bf16 %v1456, %v1431
      %v1461 = vpack.c.bf16 %v1455, %v1430
      %v1462 = vpack.c.bf16 %v1454, %v1429
      %v1463 = vpack.c.bf16 %v1453, %v1428
      %v1464 = vpack.c.bf16 %v1452, %v1427
      %v1465 = vpack.c.bf16 %v1451, %v1426
      %v1466 = vpack.c.bf16 %v1458, %v1433
      %v1475 = vunpack.c.l.b16 %v1459
      %v1476 = vunpack.c.l.b16 %v1460
      %v1477 = vunpack.c.l.b16 %v1461
      %v1478 = vunpack.c.l.b16 %v1462
      %v1479 = vunpack.c.l.b16 %v1463
      %v1480 = vunpack.c.l.b16 %v1464
      %v1481 = vunpack.c.l.b16 %v1465
      %v1482 = vunpack.c.l.b16 %v1466
      %v1483 = vunpack.c.h.b16 %v1459
      %v1484 = vunpack.c.h.b16 %v1460
      %v1485 = vunpack.c.h.b16 %v1461
      %v1486 = vunpack.c.h.b16 %v1462
      %v1487 = vunpack.c.h.b16 %v1463
      %v1488 = vunpack.c.h.b16 %v1464
      %v1489 = vunpack.c.h.b16 %v1465
      %v1490 = vunpack.c.h.b16 %v1466
      %v1491 = vpack.c.b16 %v1476, %v1475
      %v1492 = vpack.c.b16 %v1478, %v1477
      %v1493 = vpack.c.b16 %v1480, %v1479
      %v1494 = vpack.c.b16 %v1482, %v1481
      %v1495 = vpack.c.b16 %v1484, %v1483
      %v1496 = vpack.c.b16 %v1486, %v1485
      %v1497 = vpack.c.b16 %v1488, %v1487
      %v1498 = vpack.c.b16 %v1490, %v1489
      %1507 = vst [vmem:[#allocation2 + $0x300] sm:$0xff] %v1491
      %1508 = vst [vmem:[#allocation2 + $0x308] sm:$0xff] %v1492
      %1509 = vst [vmem:[#allocation2 + $0x310] sm:$0xff] %v1493
      %1510 = vst [vmem:[#allocation2 + $0x318] sm:$0xff] %v1494
      %1511 = vst [vmem:[#allocation2 + $0x320] sm:$0xff] %v1495
      %1512 = vst [vmem:[#allocation2 + $0x328] sm:$0xff] %v1496
      %1513 = vst [vmem:[#allocation2 + $0x330] sm:$0xff] %v1497
      %1514 = vst [vmem:[#allocation2 + $0x338] sm:$0xff] %v1498
      %1515 = vrot.lane.b32.xlu0 %v201, 19
      %v1516 = vpop.permute.xlu0 %1515
      %1517 = vrot.lane.b32.xlu0 %v202, 19
      %v1518 = vpop.permute.xlu0 %1517
      %1519 = vrot.lane.b32.xlu0 %v203, 19
      %v1520 = vpop.permute.xlu0 %1519
      %1521 = vrot.lane.b32.xlu0 %v204, 19
      %v1522 = vpop.permute.xlu0 %1521
      %1523 = vrot.lane.b32.xlu0 %v205, 19
      %v1524 = vpop.permute.xlu0 %1523
      %1525 = vrot.lane.b32.xlu0 %v206, 19
      %v1526 = vpop.permute.xlu0 %1525
      %1527 = vrot.lane.b32.xlu0 %v207, 19
      %v1528 = vpop.permute.xlu0 %1527
      %1529 = vrot.lane.b32.xlu0 %v208, 19
      %v1530 = vpop.permute.xlu0 %1529
      %vm1531 = vcmp.lt.s32.totalorder %v227, 19
      %v1532 = vsel %vm1531, %v1528, %v1530
      %v1533 = vsel %vm1531, %v1526, %v1528
      %v1534 = vsel %vm1531, %v1524, %v1526
      %v1535 = vsel %vm1531, %v1522, %v1524
      %v1536 = vsel %vm1531, %v1520, %v1522
      %v1537 = vsel %vm1531, %v1518, %v1520
      %v1538 = vsel %vm1531, %v1516, %v1518
      %v1539 = vsel %vm1531, %v1530, %v1516
      %1540 = vrot.lane.b32.xlu0 %v201, 18
      %v1541 = vpop.permute.xlu0 %1540
      %1542 = vrot.lane.b32.xlu0 %v202, 18
      %v1543 = vpop.permute.xlu0 %1542
      %1544 = vrot.lane.b32.xlu0 %v203, 18
      %v1545 = vpop.permute.xlu0 %1544
      %1546 = vrot.lane.b32.xlu0 %v204, 18
      %v1547 = vpop.permute.xlu0 %1546
      %1548 = vrot.lane.b32.xlu0 %v205, 18
      %v1549 = vpop.permute.xlu0 %1548
      %1550 = vrot.lane.b32.xlu0 %v206, 18
      %v1551 = vpop.permute.xlu0 %1550
      %1552 = vrot.lane.b32.xlu0 %v207, 18
      %v1553 = vpop.permute.xlu0 %1552
      %1554 = vrot.lane.b32.xlu0 %v208, 18
      %v1555 = vpop.permute.xlu0 %1554
      %vm1556 = vcmp.lt.s32.totalorder %v227, 18
      %v1557 = vsel %vm1556, %v1553, %v1555
      %v1558 = vsel %vm1556, %v1551, %v1553
      %v1559 = vsel %vm1556, %v1549, %v1551
      %v1560 = vsel %vm1556, %v1547, %v1549
      %v1561 = vsel %vm1556, %v1545, %v1547
      %v1562 = vsel %vm1556, %v1543, %v1545
      %v1563 = vsel %vm1556, %v1541, %v1543
      %v1564 = vsel %vm1556, %v1555, %v1541
      %v1565 = vpack.c.bf16 %v1563, %v1538
      %v1566 = vpack.c.bf16 %v1562, %v1537
      %v1567 = vpack.c.bf16 %v1561, %v1536
      %v1568 = vpack.c.bf16 %v1560, %v1535
      %v1569 = vpack.c.bf16 %v1559, %v1534
      %v1570 = vpack.c.bf16 %v1558, %v1533
      %v1571 = vpack.c.bf16 %v1557, %v1532
      %v1572 = vpack.c.bf16 %v1564, %v1539
      %v1581 = vunpack.c.l.b16 %v1565
      %v1582 = vunpack.c.l.b16 %v1566
      %v1583 = vunpack.c.l.b16 %v1567
      %v1584 = vunpack.c.l.b16 %v1568
      %v1585 = vunpack.c.l.b16 %v1569
      %v1586 = vunpack.c.l.b16 %v1570
      %v1587 = vunpack.c.l.b16 %v1571
      %v1588 = vunpack.c.l.b16 %v1572
      %v1589 = vunpack.c.h.b16 %v1565
      %v1590 = vunpack.c.h.b16 %v1566
      %v1591 = vunpack.c.h.b16 %v1567
      %v1592 = vunpack.c.h.b16 %v1568
      %v1593 = vunpack.c.h.b16 %v1569
      %v1594 = vunpack.c.h.b16 %v1570
      %v1595 = vunpack.c.h.b16 %v1571
      %v1596 = vunpack.c.h.b16 %v1572
      %v1597 = vpack.c.b16 %v1582, %v1581
      %v1598 = vpack.c.b16 %v1584, %v1583
      %v1599 = vpack.c.b16 %v1586, %v1585
      %v1600 = vpack.c.b16 %v1588, %v1587
      %v1601 = vpack.c.b16 %v1590, %v1589
      %v1602 = vpack.c.b16 %v1592, %v1591
      %v1603 = vpack.c.b16 %v1594, %v1593
      %v1604 = vpack.c.b16 %v1596, %v1595
      %1613 = vst [vmem:[#allocation2 + $0x340] sm:$0xff] %v1597
      %1614 = vst [vmem:[#allocation2 + $0x348] sm:$0xff] %v1598
      %1615 = vst [vmem:[#allocation2 + $0x350] sm:$0xff] %v1599
      %1616 = vst [vmem:[#allocation2 + $0x358] sm:$0xff] %v1600
      %1617 = vst [vmem:[#allocation2 + $0x360] sm:$0xff] %v1601
      %1618 = vst [vmem:[#allocation2 + $0x368] sm:$0xff] %v1602
      %1619 = vst [vmem:[#allocation2 + $0x370] sm:$0xff] %v1603
      %1620 = vst [vmem:[#allocation2 + $0x378] sm:$0xff] %v1604
      %1621 = vrot.lane.b32.xlu0 %v201, 17
      %v1622 = vpop.permute.xlu0 %1621
      %1623 = vrot.lane.b32.xlu0 %v202, 17
      %v1624 = vpop.permute.xlu0 %1623
      %1625 = vrot.lane.b32.xlu0 %v203, 17
      %v1626 = vpop.permute.xlu0 %1625
      %1627 = vrot.lane.b32.xlu0 %v204, 17
      %v1628 = vpop.permute.xlu0 %1627
      %1629 = vrot.lane.b32.xlu0 %v205, 17
      %v1630 = vpop.permute.xlu0 %1629
      %1631 = vrot.lane.b32.xlu0 %v206, 17
      %v1632 = vpop.permute.xlu0 %1631
      %1633 = vrot.lane.b32.xlu0 %v207, 17
      %v1634 = vpop.permute.xlu0 %1633
      %1635 = vrot.lane.b32.xlu0 %v208, 17
      %v1636 = vpop.permute.xlu0 %1635
      %vm1637 = vcmp.lt.s32.totalorder %v227, 17
      %v1638 = vsel %vm1637, %v1634, %v1636
      %v1639 = vsel %vm1637, %v1632, %v1634
      %v1640 = vsel %vm1637, %v1630, %v1632
      %v1641 = vsel %vm1637, %v1628, %v1630
      %v1642 = vsel %vm1637, %v1626, %v1628
      %v1643 = vsel %vm1637, %v1624, %v1626
      %v1644 = vsel %vm1637, %v1622, %v1624
      %v1645 = vsel %vm1637, %v1636, %v1622
      %v1646 = vpack.c.bf16 %v1644, %v1644
      %v1647 = vpack.c.bf16 %v1643, %v1643
      %v1648 = vpack.c.bf16 %v1642, %v1642
      %v1649 = vpack.c.bf16 %v1641, %v1641
      %v1650 = vpack.c.bf16 %v1640, %v1640
      %v1651 = vpack.c.bf16 %v1639, %v1639
      %v1652 = vpack.c.bf16 %v1638, %v1638
      %v1653 = vpack.c.bf16 %v1645, %v1645
      %v1662 = vunpack.c.l.b16 %v1646
      %v1663 = vunpack.c.l.b16 %v1647
      %v1664 = vunpack.c.l.b16 %v1648
      %v1665 = vunpack.c.l.b16 %v1649
      %v1666 = vunpack.c.l.b16 %v1650
      %v1667 = vunpack.c.l.b16 %v1651
      %v1668 = vunpack.c.l.b16 %v1652
      %v1669 = vunpack.c.l.b16 %v1653
      %v1670 = vunpack.c.h.b16 %v1646
      %v1671 = vunpack.c.h.b16 %v1647
      %v1672 = vunpack.c.h.b16 %v1648
      %v1673 = vunpack.c.h.b16 %v1649
      %v1674 = vunpack.c.h.b16 %v1650
      %v1675 = vunpack.c.h.b16 %v1651
      %v1676 = vunpack.c.h.b16 %v1652
      %v1677 = vunpack.c.h.b16 %v1653
      %v1678 = vpack.c.b16 %v1663, %v1662
      %v1679 = vpack.c.b16 %v1665, %v1664
      %v1680 = vpack.c.b16 %v1667, %v1666
      %v1681 = vpack.c.b16 %v1669, %v1668
      %v1682 = vpack.c.b16 %v1671, %v1670
      %v1683 = vpack.c.b16 %v1673, %v1672
      %v1684 = vpack.c.b16 %v1675, %v1674
      %v1685 = vpack.c.b16 %v1677, %v1676
      %1694 = vst [vmem:[#allocation2 + $0x380] sm:$0xff] %v1678
      %1695 = vst [vmem:[#allocation2 + $0x388] sm:$0xff] %v1679
      %1696 = vst [vmem:[#allocation2 + $0x390] sm:$0xff] %v1680
      %1697 = vst [vmem:[#allocation2 + $0x398] sm:$0xff] %v1681
      %1698 = vst [vmem:[#allocation2 + $0x3a0] sm:$0xff] %v1682
      %1699 = vst [vmem:[#allocation2 + $0x3a8] sm:$0xff] %v1683
      %1700 = vst [vmem:[#allocation2 + $0x3b0] sm:$0xff] %v1684
      %1701 = vst [vmem:[#allocation2 + $0x3b8] sm:$0xff] %v1685
      %v1702 = vld [vmem:[#allocation2 + $0x200] sm:$0xff]
      %v1703 = vld [vmem:[#allocation2 + $0x208] sm:$0xff]
      %v1704 = vld [vmem:[#allocation2 + $0x210] sm:$0xff]
      %v1705 = vld [vmem:[#allocation2 + $0x218] sm:$0xff]
      %v1706 = vld [vmem:[#allocation2 + $0x220] sm:$0xff]
      %v1707 = vld [vmem:[#allocation2 + $0x228] sm:$0xff]
      %v1708 = vld [vmem:[#allocation2 + $0x230] sm:$0xff]
      %v1709 = vld [vmem:[#allocation2 + $0x238] sm:$0xff]
      %v1710 = vld [vmem:[#allocation2 + $0x240] sm:$0xff]
      %v1711 = vld [vmem:[#allocation2 + $0x248] sm:$0xff]
      %v1712 = vld [vmem:[#allocation2 + $0x250] sm:$0xff]
      %v1713 = vld [vmem:[#allocation2 + $0x258] sm:$0xff]
      %v1714 = vld [vmem:[#allocation2 + $0x260] sm:$0xff]
      %v1715 = vld [vmem:[#allocation2 + $0x268] sm:$0xff]
      %v1716 = vld [vmem:[#allocation2 + $0x270] sm:$0xff]
      %v1717 = vld [vmem:[#allocation2 + $0x278] sm:$0xff]
      %v1718 = vld [vmem:[#allocation2 + $0x280] sm:$0xff]
      %v1719 = vld [vmem:[#allocation2 + $0x288] sm:$0xff]
      %v1720 = vld [vmem:[#allocation2 + $0x290] sm:$0xff]
      %v1721 = vld [vmem:[#allocation2 + $0x298] sm:$0xff]
      %v1722 = vld [vmem:[#allocation2 + $0x2a0] sm:$0xff]
      %v1723 = vld [vmem:[#allocation2 + $0x2a8] sm:$0xff]
      %v1724 = vld [vmem:[#allocation2 + $0x2b0] sm:$0xff]
      %v1725 = vld [vmem:[#allocation2 + $0x2b8] sm:$0xff]
      %v1726 = vld [vmem:[#allocation2 + $0x2c0] sm:$0xff]
      %v1727 = vld [vmem:[#allocation2 + $0x2c8] sm:$0xff]
      %v1728 = vld [vmem:[#allocation2 + $0x2d0] sm:$0xff]
      %v1729 = vld [vmem:[#allocation2 + $0x2d8] sm:$0xff]
      %v1730 = vld [vmem:[#allocation2 + $0x2e0] sm:$0xff]
      %v1731 = vld [vmem:[#allocation2 + $0x2e8] sm:$0xff]
      %v1732 = vld [vmem:[#allocation2 + $0x2f0] sm:$0xff]
      %v1733 = vld [vmem:[#allocation2 + $0x2f8] sm:$0xff]
      %v1734 = vld [vmem:[#allocation2 + $0x300] sm:$0xff]
      %v1735 = vld [vmem:[#allocation2 + $0x308] sm:$0xff]
      %v1736 = vld [vmem:[#allocation2 + $0x310] sm:$0xff]
      %v1737 = vld [vmem:[#allocation2 + $0x318] sm:$0xff]
      %v1738 = vld [vmem:[#allocation2 + $0x320] sm:$0xff]
      %v1739 = vld [vmem:[#allocation2 + $0x328] sm:$0xff]
      %v1740 = vld [vmem:[#allocation2 + $0x330] sm:$0xff]
      %v1741 = vld [vmem:[#allocation2 + $0x338] sm:$0xff]
      %v1742 = vld [vmem:[#allocation2 + $0x340] sm:$0xff]
      %v1743 = vld [vmem:[#allocation2 + $0x348] sm:$0xff]
      %v1744 = vld [vmem:[#allocation2 + $0x350] sm:$0xff]
      %v1745 = vld [vmem:[#allocation2 + $0x358] sm:$0xff]
      %v1746 = vld [vmem:[#allocation2 + $0x360] sm:$0xff]
      %v1747 = vld [vmem:[#allocation2 + $0x368] sm:$0xff]
      %v1748 = vld [vmem:[#allocation2 + $0x370] sm:$0xff]
      %v1749 = vld [vmem:[#allocation2 + $0x378] sm:$0xff]
      %v1750 = vld [vmem:[#allocation2 + $0x380] sm:$0xff]
      %v1751 = vld [vmem:[#allocation2 + $0x388] sm:$0xff]
      %v1752 = vld [vmem:[#allocation2 + $0x390] sm:$0xff]
      %v1753 = vld [vmem:[#allocation2 + $0x398] sm:$0xff]
      %v1755 = vunpack.c.h.b16 %v209
      %v1756 = vpack.c.b16 %v1755, %v1755
      %v1809 = vunpack.c.l.b16 %v1702
      %v1810 = vunpack.c.h.b16 %v1702
      %v1811 = vunpack.c.l.b16 %v1703
      %v1812 = vunpack.c.h.b16 %v1703
      %v1813 = vunpack.c.l.b16 %v1704
      %v1814 = vunpack.c.h.b16 %v1704
      %v1815 = vunpack.c.l.b16 %v1705
      %v1816 = vunpack.c.h.b16 %v1705
      %v1817 = vunpack.c.l.b16 %v1706
      %v1818 = vunpack.c.h.b16 %v1706
      %v1819 = vunpack.c.l.b16 %v1707
      %v1820 = vunpack.c.h.b16 %v1707
      %v1821 = vunpack.c.l.b16 %v1708
      %v1822 = vunpack.c.h.b16 %v1708
      %v1823 = vunpack.c.l.b16 %v1709
      %v1824 = vunpack.c.h.b16 %v1709
      %v1825 = vunpack.c.l.b16 %v1710
      %v1826 = vunpack.c.h.b16 %v1710
      %v1827 = vunpack.c.l.b16 %v1711
      %v1828 = vunpack.c.h.b16 %v1711
      %v1829 = vunpack.c.l.b16 %v1712
      %v1830 = vunpack.c.h.b16 %v1712
      %v1831 = vunpack.c.l.b16 %v1713
      %v1832 = vunpack.c.h.b16 %v1713
      %v1833 = vunpack.c.l.b16 %v1714
      %v1834 = vunpack.c.h.b16 %v1714
      %v1835 = vunpack.c.l.b16 %v1715
      %v1836 = vunpack.c.h.b16 %v1715
      %v1837 = vunpack.c.l.b16 %v1716
      %v1838 = vunpack.c.h.b16 %v1716
      %v1839 = vunpack.c.l.b16 %v1717
      %v1840 = vunpack.c.h.b16 %v1717
      %v1841 = vunpack.c.l.b16 %v1718
      %v1842 = vunpack.c.h.b16 %v1718
      %v1843 = vunpack.c.l.b16 %v1719
      %v1844 = vunpack.c.h.b16 %v1719
      %v1845 = vunpack.c.l.b16 %v1720
      %v1846 = vunpack.c.h.b16 %v1720
      %v1847 = vunpack.c.l.b16 %v1721
      %v1848 = vunpack.c.h.b16 %v1721
      %v1849 = vunpack.c.l.b16 %v1722
      %v1850 = vunpack.c.h.b16 %v1722
      %v1851 = vunpack.c.l.b16 %v1723
      %v1852 = vunpack.c.h.b16 %v1723
      %v1853 = vunpack.c.l.b16 %v1724
      %v1854 = vunpack.c.h.b16 %v1724
      %v1855 = vunpack.c.l.b16 %v1725
      %v1856 = vunpack.c.h.b16 %v1725
      %v1857 = vunpack.c.l.b16 %v1726
      %v1858 = vunpack.c.h.b16 %v1726
      %v1859 = vunpack.c.l.b16 %v1727
      %v1860 = vunpack.c.h.b16 %v1727
      %v1861 = vunpack.c.l.b16 %v1728
      %v1862 = vunpack.c.h.b16 %v1728
      %v1863 = vunpack.c.l.b16 %v1729
      %v1864 = vunpack.c.h.b16 %v1729
      %v1865 = vunpack.c.l.b16 %v1730
      %v1866 = vunpack.c.h.b16 %v1730
      %v1867 = vunpack.c.l.b16 %v1731
      %v1868 = vunpack.c.h.b16 %v1731
      %v1869 = vunpack.c.l.b16 %v1732
      %v1870 = vunpack.c.h.b16 %v1732
      %v1871 = vunpack.c.l.b16 %v1733
      %v1872 = vunpack.c.h.b16 %v1733
      %v1873 = vunpack.c.l.b16 %v1734
      %v1874 = vunpack.c.h.b16 %v1734
      %v1875 = vunpack.c.l.b16 %v1735
      %v1876 = vunpack.c.h.b16 %v1735
      %v1877 = vunpack.c.l.b16 %v1736
      %v1878 = vunpack.c.h.b16 %v1736
      %v1879 = vunpack.c.l.b16 %v1737
      %v1880 = vunpack.c.h.b16 %v1737
      %v1881 = vunpack.c.l.b16 %v1738
      %v1882 = vunpack.c.h.b16 %v1738
      %v1883 = vunpack.c.l.b16 %v1739
      %v1884 = vunpack.c.h.b16 %v1739
      %v1885 = vunpack.c.l.b16 %v1740
      %v1886 = vunpack.c.h.b16 %v1740
      %v1887 = vunpack.c.l.b16 %v1741
      %v1888 = vunpack.c.h.b16 %v1741
      %v1889 = vunpack.c.l.b16 %v1742
      %v1890 = vunpack.c.h.b16 %v1742
      %v1891 = vunpack.c.l.b16 %v1743
      %v1892 = vunpack.c.h.b16 %v1743
      %v1893 = vunpack.c.l.b16 %v1744
      %v1894 = vunpack.c.h.b16 %v1744
      %v1895 = vunpack.c.l.b16 %v1745
      %v1896 = vunpack.c.h.b16 %v1745
      %v1897 = vunpack.c.l.b16 %v1746
      %v1898 = vunpack.c.h.b16 %v1746
      %v1899 = vunpack.c.l.b16 %v1747
      %v1900 = vunpack.c.h.b16 %v1747
      %v1901 = vunpack.c.l.b16 %v1748
      %v1902 = vunpack.c.h.b16 %v1748
      %v1903 = vunpack.c.l.b16 %v1749
      %v1904 = vunpack.c.h.b16 %v1749
      %v1905 = vunpack.c.l.b16 %v1750
      %v1906 = vunpack.c.h.b16 %v1750
      %v1907 = vunpack.c.l.b16 %v1751
      %v1908 = vunpack.c.h.b16 %v1751
      %v1909 = vunpack.c.l.b16 %v1752
      %v1910 = vunpack.c.h.b16 %v1752
      %v1911 = vunpack.c.l.b16 %v1753
      %v1912 = vunpack.c.h.b16 %v1753
      %v1913 = vpack.c.b16 %v1817, %v1809
      %v1914 = vpack.c.b16 %v1818, %v1810
      %v1915 = vpack.c.b16 %v1819, %v1811
      %v1916 = vpack.c.b16 %v1820, %v1812
      %v1917 = vpack.c.b16 %v1821, %v1813
      %v1918 = vpack.c.b16 %v1822, %v1814
      %v1919 = vpack.c.b16 %v1823, %v1815
      %v1920 = vpack.c.b16 %v1824, %v1816
      %v1921 = vpack.c.b16 %v1833, %v1825
      %v1922 = vpack.c.b16 %v1834, %v1826
      %v1923 = vpack.c.b16 %v1835, %v1827
      %v1924 = vpack.c.b16 %v1836, %v1828
      %v1925 = vpack.c.b16 %v1837, %v1829
      %v1926 = vpack.c.b16 %v1838, %v1830
      %v1927 = vpack.c.b16 %v1839, %v1831
      %v1928 = vpack.c.b16 %v1840, %v1832
      %v1929 = vpack.c.b16 %v1849, %v1841
      %v1930 = vpack.c.b16 %v1850, %v1842
      %v1931 = vpack.c.b16 %v1851, %v1843
      %v1932 = vpack.c.b16 %v1852, %v1844
      %v1933 = vpack.c.b16 %v1853, %v1845
      %v1934 = vpack.c.b16 %v1854, %v1846
      %v1935 = vpack.c.b16 %v1855, %v1847
      %v1936 = vpack.c.b16 %v1856, %v1848
      %v1937 = vpack.c.b16 %v1865, %v1857
      %v1938 = vpack.c.b16 %v1866, %v1858
      %v1939 = vpack.c.b16 %v1867, %v1859
      %v1940 = vpack.c.b16 %v1868, %v1860
      %v1941 = vpack.c.b16 %v1869, %v1861
      %v1942 = vpack.c.b16 %v1870, %v1862
      %v1943 = vpack.c.b16 %v1871, %v1863
      %v1944 = vpack.c.b16 %v1872, %v1864
      %v1945 = vpack.c.b16 %v1881, %v1873
      %v1946 = vpack.c.b16 %v1882, %v1874
      %v1947 = vpack.c.b16 %v1883, %v1875
      %v1948 = vpack.c.b16 %v1884, %v1876
      %v1949 = vpack.c.b16 %v1885, %v1877
      %v1950 = vpack.c.b16 %v1886, %v1878
      %v1951 = vpack.c.b16 %v1887, %v1879
      %v1952 = vpack.c.b16 %v1888, %v1880
      %v1953 = vpack.c.b16 %v1897, %v1889
      %v1954 = vpack.c.b16 %v1898, %v1890
      %v1955 = vpack.c.b16 %v1899, %v1891
      %v1956 = vpack.c.b16 %v1900, %v1892
      %v1957 = vpack.c.b16 %v1901, %v1893
      %v1958 = vpack.c.b16 %v1902, %v1894
      %v1959 = vpack.c.b16 %v1903, %v1895
      %v1960 = vpack.c.b16 %v1904, %v1896
      %v1961 = vpack.c.b16 %v1905, %v1905
      %v1962 = vpack.c.b16 %v1906, %v1906
      %v1963 = vpack.c.b16 %v1907, %v1907
      %v1964 = vpack.c.b16 %v1908, %v1908
      %v1965 = vpack.c.b16 %v1909, %v1909
      %v1966 = vpack.c.b16 %v1910, %v1910
      %v1967 = vpack.c.b16 %v1911, %v1911
      %v1968 = vpack.c.b16 %v1912, %v1912
      %vm2017 = vcmask 850944
      %v2019 = vsel %vm2017, %v1756, 0
      %vm2021 = vcmask 1043456
      %v2023 = vsel %vm2021, %v1961, 0
      %v2026 = vsel %vm2021, %v1962, 0
      %v2029 = vsel %vm2021, %v1963, 0
      %v2032 = vsel %vm2021, %v1964, 0
      %v2035 = vsel %vm2021, %v1965, 0
      %v2038 = vsel %vm2021, %v1966, 0
      %v2041 = vsel %vm2021, %v1967, 0
      %v2044 = vsel %vm2021, %v1968, 0
      %2046 = vmatprep.subr.bf16.mxu0 0
      %2047 = vmatpush1.bf16.msra.mxu0 0
      %2048 = vmatprep.subr.bf16.mxu0 %v2026
      %2049 = vmatpush1.bf16.msra.mxu0 %v2023
      %2050 = vmatprep.subr.bf16.mxu0 %v1954
      %2051 = vmatpush1.bf16.msra.mxu0 %v1953
      %2052 = vmatprep.subr.bf16.mxu0 %v1946
      %2053 = vmatpush1.bf16.msra.mxu0 %v1945
      %2054 = vmatprep.subr.bf16.mxu0 %v1938
      %2055 = vmatpush1.bf16.msra.mxu0 %v1937
      %2056 = vmatprep.subr.bf16.mxu0 %v1930
      %2057 = vmatpush1.bf16.msra.mxu0 %v1929
      %2058 = vmatprep.subr.bf16.mxu0 %v1922
      %2059 = vmatpush1.bf16.msra.mxu0 %v1921
      %2060 = vmatprep.subr.bf16.mxu0 %v1914
      %2061 = vmatpush1.bf16.msra.mxu0 %v1913
      %2062 = vmatprep.subr.bf16.mxu0 0
      %2063 = vmatpush2.bf16.msra.mxu0 0
      %2064 = vmatprep.subr.bf16.mxu0 0
      %2065 = vmatpush2.bf16.msra.mxu0 0
      %2066 = vmatprep.subr.bf16.mxu0 0
      %2067 = vmatpush2.bf16.msra.mxu0 0
      %2068 = vmatprep.subr.bf16.mxu0 0
      %2069 = vmatpush2.bf16.msra.mxu0 0
      %2070 = vmatprep.subr.bf16.mxu0 0
      %2071 = vmatpush2.bf16.msra.mxu0 0
      %2072 = vmatprep.subr.bf16.mxu0 0
      %2073 = vmatpush2.bf16.msra.mxu0 0
      %2074 = vmatprep.subr.bf16.mxu0 0
      %2075 = vmatpush2.bf16.msra.mxu0 0
      %2076 = vmatprep.subr.bf16.mxu0 0
      %2077 = vmatpush2.bf16.msra.mxu0 0
      %2078 = vmatprep.mubr.bf16.mxu0 0
      %2079 = vmatmul.mubr.bf16.gmra.mxu0 %v2019
      %v2080 = vpop.f32.mrf.mxu0
      %v2081 = vadd.f32 0.0, %v2080
      %v2082 = vpop.f32.mrf.mxu0
      %v2083 = vadd.f32 0.0, %v2082
      %v2084 = vpop.f32.mrf.mxu0
      %v2085 = vpop.f32.mrf.mxu0
      %2086 = vdwg.mxu0
      %2087 = vmatprep.subr.bf16.mxu0 0
      %2088 = vmatpush1.bf16.msra.mxu0 0
      %2089 = vmatprep.subr.bf16.mxu0 %v2032
      %2090 = vmatpush1.bf16.msra.mxu0 %v2029
      %2091 = vmatprep.subr.bf16.mxu0 %v1956
      %2092 = vmatpush1.bf16.msra.mxu0 %v1955
      %2093 = vmatprep.subr.bf16.mxu0 %v1948
      %2094 = vmatpush1.bf16.msra.mxu0 %v1947
      %2095 = vmatprep.subr.bf16.mxu0 %v1940
      %2096 = vmatpush1.bf16.msra.mxu0 %v1939
      %2097 = vmatprep.subr.bf16.mxu0 %v1932
      %2098 = vmatpush1.bf16.msra.mxu0 %v1931
      %2099 = vmatprep.subr.bf16.mxu0 %v1924
      %2100 = vmatpush1.bf16.msra.mxu0 %v1923
      %2101 = vmatprep.subr.bf16.mxu0 %v1916
      %2102 = vmatpush1.bf16.msra.mxu0 %v1915
      %2103 = vmatprep.subr.bf16.mxu0 0
      %2104 = vmatpush2.bf16.msra.mxu0 0
      %2105 = vmatprep.subr.bf16.mxu0 0
      %2106 = vmatpush2.bf16.msra.mxu0 0
      %2107 = vmatprep.subr.bf16.mxu0 0
      %2108 = vmatpush2.bf16.msra.mxu0 0
      %2109 = vmatprep.subr.bf16.mxu0 0
      %2110 = vmatpush2.bf16.msra.mxu0 0
      %2111 = vmatprep.subr.bf16.mxu0 0
      %2112 = vmatpush2.bf16.msra.mxu0 0
      %2113 = vmatprep.subr.bf16.mxu0 0
      %2114 = vmatpush2.bf16.msra.mxu0 0
      %2115 = vmatprep.subr.bf16.mxu0 0
      %2116 = vmatpush2.bf16.msra.mxu0 0
      %2117 = vmatprep.subr.bf16.mxu0 0
      %2118 = vmatpush2.bf16.msra.mxu0 0
      %2119 = vmatprep.mubr.bf16.mxu0 0
      %2120 = vmatmul.mubr.bf16.gmra.mxu0 %v2019
      %v2121 = vpop.f32.mrf.mxu0
      %v2122 = vadd.f32 0.0, %v2121
      %v2123 = vpop.f32.mrf.mxu0
      %v2124 = vadd.f32 0.0, %v2123
      %v2125 = vpop.f32.mrf.mxu0
      %v2126 = vpop.f32.mrf.mxu0
      %2127 = vdwg.mxu0
      %2128 = vmatprep.subr.bf16.mxu0 0
      %2129 = vmatpush1.bf16.msra.mxu0 0
      %2130 = vmatprep.subr.bf16.mxu0 %v2038
      %2131 = vmatpush1.bf16.msra.mxu0 %v2035
      %2132 = vmatprep.subr.bf16.mxu0 %v1958
      %2133 = vmatpush1.bf16.msra.mxu0 %v1957
      %2134 = vmatprep.subr.bf16.mxu0 %v1950
      %2135 = vmatpush1.bf16.msra.mxu0 %v1949
      %2136 = vmatprep.subr.bf16.mxu0 %v1942
      %2137 = vmatpush1.bf16.msra.mxu0 %v1941
      %2138 = vmatprep.subr.bf16.mxu0 %v1934
      %2139 = vmatpush1.bf16.msra.mxu0 %v1933
      %2140 = vmatprep.subr.bf16.mxu0 %v1926
      %2141 = vmatpush1.bf16.msra.mxu0 %v1925
      %2142 = vmatprep.subr.bf16.mxu0 %v1918
      %2143 = vmatpush1.bf16.msra.mxu0 %v1917
      %2144 = vmatprep.subr.bf16.mxu0 0
      %2145 = vmatpush2.bf16.msra.mxu0 0
      %2146 = vmatprep.subr.bf16.mxu0 0
      %2147 = vmatpush2.bf16.msra.mxu0 0
      %2148 = vmatprep.subr.bf16.mxu0 0
      %2149 = vmatpush2.bf16.msra.mxu0 0
      %2150 = vmatprep.subr.bf16.mxu0 0
      %2151 = vmatpush2.bf16.msra.mxu0 0
      %2152 = vmatprep.subr.bf16.mxu0 0
      %2153 = vmatpush2.bf16.msra.mxu0 0
      %2154 = vmatprep.subr.bf16.mxu0 0
      %2155 = vmatpush2.bf16.msra.mxu0 0
      %2156 = vmatprep.subr.bf16.mxu0 0
      %2157 = vmatpush2.bf16.msra.mxu0 0
      %2158 = vmatprep.subr.bf16.mxu0 0
      %2159 = vmatpush2.bf16.msra.mxu0 0
      %2160 = vmatprep.mubr.bf16.mxu0 0
      %2161 = vmatmul.mubr.bf16.gmra.mxu0 %v2019
      %v2162 = vpop.f32.mrf.mxu0
      %v2163 = vadd.f32 0.0, %v2162
      %v2164 = vpop.f32.mrf.mxu0
      %v2165 = vadd.f32 0.0, %v2164
      %v2166 = vpop.f32.mrf.mxu0
      %v2167 = vpop.f32.mrf.mxu0
      %2168 = vdwg.mxu0
      %2169 = vmatprep.subr.bf16.mxu0 0
      %2170 = vmatpush1.bf16.msra.mxu0 0
      %2171 = vmatprep.subr.bf16.mxu0 %v2044
      %2172 = vmatpush1.bf16.msra.mxu0 %v2041
      %2173 = vmatprep.subr.bf16.mxu0 %v1960
      %2174 = vmatpush1.bf16.msra.mxu0 %v1959
      %2175 = vmatprep.subr.bf16.mxu0 %v1952
      %2176 = vmatpush1.bf16.msra.mxu0 %v1951
      %2177 = vmatprep.subr.bf16.mxu0 %v1944
      %2178 = vmatpush1.bf16.msra.mxu0 %v1943
      %2179 = vmatprep.subr.bf16.mxu0 %v1936
      %2180 = vmatpush1.bf16.msra.mxu0 %v1935
      %2181 = vmatprep.subr.bf16.mxu0 %v1928
      %2182 = vmatpush1.bf16.msra.mxu0 %v1927
      %2183 = vmatprep.subr.bf16.mxu0 %v1920
      %2184 = vmatpush1.bf16.msra.mxu0 %v1919
      %2185 = vmatprep.subr.bf16.mxu0 0
      %2186 = vmatpush2.bf16.msra.mxu0 0
      %2187 = vmatprep.subr.bf16.mxu0 0
      %2188 = vmatpush2.bf16.msra.mxu0 0
      %2189 = vmatprep.subr.bf16.mxu0 0
      %2190 = vmatpush2.bf16.msra.mxu0 0
      %2191 = vmatprep.subr.bf16.mxu0 0
      %2192 = vmatpush2.bf16.msra.mxu0 0
      %2193 = vmatprep.subr.bf16.mxu0 0
      %2194 = vmatpush2.bf16.msra.mxu0 0
      %2195 = vmatprep.subr.bf16.mxu0 0
      %2196 = vmatpush2.bf16.msra.mxu0 0
      %2197 = vmatprep.subr.bf16.mxu0 0
      %2198 = vmatpush2.bf16.msra.mxu0 0
      %2199 = vmatprep.subr.bf16.mxu0 0
      %2200 = vmatpush2.bf16.msra.mxu0 0
      %2201 = vmatprep.mubr.bf16.mxu0 0
      %2202 = vmatmul.mubr.bf16.gmra.mxu0 %v2019
      %v2203 = vpop.f32.mrf.mxu0
      %v2204 = vadd.f32 0.0, %v2203
      %v2205 = vpop.f32.mrf.mxu0
      %v2206 = vadd.f32 0.0, %v2205
      %v2207 = vpop.f32.mrf.mxu0
      %v2208 = vpop.f32.mrf.mxu0
      %2209 = vdwg.mxu0
      %v2266 = vunpack.c.l.b16 %v929
      %v2267 = vunpack.c.h.b16 %v929
      %v2268 = vunpack.c.l.b16 %v930
      %v2269 = vunpack.c.h.b16 %v930
      %v2270 = vunpack.c.l.b16 %v931
      %v2271 = vunpack.c.h.b16 %v931
      %v2272 = vunpack.c.l.b16 %v932
      %v2273 = vunpack.c.h.b16 %v932
      %v2274 = vunpack.c.l.b16 %v933
      %v2275 = vunpack.c.h.b16 %v933
      %v2276 = vunpack.c.l.b16 %v934
      %v2277 = vunpack.c.h.b16 %v934
      %v2278 = vunpack.c.l.b16 %v935
      %v2279 = vunpack.c.h.b16 %v935
      %v2280 = vunpack.c.l.b16 %v936
      %v2281 = vunpack.c.h.b16 %v936
      %v2282 = vunpack.c.l.b16 %v937
      %v2283 = vunpack.c.h.b16 %v937
      %v2284 = vunpack.c.l.b16 %v938
      %v2285 = vunpack.c.h.b16 %v938
      %v2286 = vunpack.c.l.b16 %v939
      %v2287 = vunpack.c.h.b16 %v939
      %v2288 = vunpack.c.l.b16 %v940
      %v2289 = vunpack.c.h.b16 %v940
      %v2290 = vunpack.c.l.b16 %v941
      %v2291 = vunpack.c.h.b16 %v941
      %v2292 = vunpack.c.l.b16 %v942
      %v2293 = vunpack.c.h.b16 %v942
      %v2294 = vunpack.c.l.b16 %v943
      %v2295 = vunpack.c.h.b16 %v943
      %v2296 = vunpack.c.l.b16 %v944
      %v2297 = vunpack.c.h.b16 %v944
      %v2298 = vunpack.c.l.b16 %v945
      %v2299 = vunpack.c.h.b16 %v945
      %v2300 = vunpack.c.l.b16 %v946
      %v2301 = vunpack.c.h.b16 %v946
      %v2302 = vunpack.c.l.b16 %v947
      %v2303 = vunpack.c.h.b16 %v947
      %v2304 = vunpack.c.l.b16 %v948
      %v2305 = vunpack.c.h.b16 %v948
      %v2306 = vunpack.c.l.b16 %v949
      %v2307 = vunpack.c.h.b16 %v949
      %v2308 = vunpack.c.l.b16 %v950
      %v2309 = vunpack.c.h.b16 %v950
      %v2310 = vunpack.c.l.b16 %v951
      %v2311 = vunpack.c.h.b16 %v951
      %v2312 = vunpack.c.l.b16 %v952
      %v2313 = vunpack.c.h.b16 %v952
      %v2314 = vunpack.c.l.b16 %v953
      %v2315 = vunpack.c.h.b16 %v953
      %v2316 = vunpack.c.l.b16 %v954
      %v2317 = vunpack.c.h.b16 %v954
      %v2318 = vunpack.c.l.b16 %v955
      %v2319 = vunpack.c.h.b16 %v955
      %v2320 = vunpack.c.l.b16 %v956
      %v2321 = vunpack.c.h.b16 %v956
      %v2322 = vunpack.c.l.b16 %v957
      %v2323 = vunpack.c.h.b16 %v957
      %v2324 = vunpack.c.l.b16 %v958
      %v2325 = vunpack.c.h.b16 %v958
      %v2326 = vunpack.c.l.b16 %v959
      %v2327 = vunpack.c.h.b16 %v959
      %v2328 = vunpack.c.l.b16 %v960
      %v2329 = vunpack.c.h.b16 %v960
      %v2330 = vunpack.c.l.b16 %v961
      %v2331 = vunpack.c.h.b16 %v961
      %v2332 = vunpack.c.l.b16 %v962
      %v2333 = vunpack.c.h.b16 %v962
      %v2334 = vunpack.c.l.b16 %v963
      %v2335 = vunpack.c.h.b16 %v963
      %v2336 = vunpack.c.l.b16 %v964
      %v2337 = vunpack.c.h.b16 %v964
      %v2338 = vunpack.c.l.b16 %v965
      %v2339 = vunpack.c.h.b16 %v965
      %v2340 = vunpack.c.l.b16 %v966
      %v2341 = vunpack.c.h.b16 %v966
      %v2342 = vunpack.c.l.b16 %v967
      %v2343 = vunpack.c.h.b16 %v967
      %v2344 = vunpack.c.l.b16 %v968
      %v2345 = vunpack.c.h.b16 %v968
      %v2346 = vunpack.c.l.b16 %v969
      %v2347 = vunpack.c.h.b16 %v969
      %v2348 = vunpack.c.l.b16 %v970
      %v2349 = vunpack.c.h.b16 %v970
      %v2350 = vunpack.c.l.b16 %v971
      %v2351 = vunpack.c.h.b16 %v971
      %v2352 = vunpack.c.l.b16 %v972
      %v2353 = vunpack.c.h.b16 %v972
      %v2354 = vunpack.c.l.b16 %v973
      %v2355 = vunpack.c.h.b16 %v973
      %v2356 = vunpack.c.l.b16 %v974
      %v2357 = vunpack.c.h.b16 %v974
      %v2358 = vunpack.c.l.b16 %v975
      %v2359 = vunpack.c.h.b16 %v975
      %v2360 = vunpack.c.l.b16 %v976
      %v2361 = vunpack.c.h.b16 %v976
      %v2362 = vunpack.c.l.b16 %v977
      %v2363 = vunpack.c.h.b16 %v977
      %v2364 = vunpack.c.l.b16 %v978
      %v2365 = vunpack.c.h.b16 %v978
      %v2366 = vunpack.c.l.b16 %v979
      %v2367 = vunpack.c.h.b16 %v979
      %v2368 = vunpack.c.l.b16 %v980
      %v2369 = vunpack.c.h.b16 %v980
      %v2370 = vunpack.c.l.b16 %v981
      %v2371 = vunpack.c.h.b16 %v981
      %v2372 = vunpack.c.l.b16 %v982
      %v2373 = vunpack.c.h.b16 %v982
      %v2374 = vunpack.c.l.b16 %v983
      %v2375 = vunpack.c.h.b16 %v983
      %v2376 = vunpack.c.l.b16 %v984
      %v2377 = vunpack.c.h.b16 %v984
      %v2378 = vpack.c.b16 %v2274, %v2266
      %v2379 = vpack.c.b16 %v2275, %v2267
      %v2380 = vpack.c.b16 %v2276, %v2268
      %v2381 = vpack.c.b16 %v2277, %v2269
      %v2382 = vpack.c.b16 %v2278, %v2270
      %v2383 = vpack.c.b16 %v2279, %v2271
      %v2384 = vpack.c.b16 %v2280, %v2272
      %v2385 = vpack.c.b16 %v2281, %v2273
      %v2386 = vpack.c.b16 %v2290, %v2282
      %v2387 = vpack.c.b16 %v2291, %v2283
      %v2388 = vpack.c.b16 %v2292, %v2284
      %v2389 = vpack.c.b16 %v2293, %v2285
      %v2390 = vpack.c.b16 %v2294, %v2286
      %v2391 = vpack.c.b16 %v2295, %v2287
      %v2392 = vpack.c.b16 %v2296, %v2288
      %v2393 = vpack.c.b16 %v2297, %v2289
      %v2394 = vpack.c.b16 %v2306, %v2298
      %v2395 = vpack.c.b16 %v2307, %v2299
      %v2396 = vpack.c.b16 %v2308, %v2300
      %v2397 = vpack.c.b16 %v2309, %v2301
      %v2398 = vpack.c.b16 %v2310, %v2302
      %v2399 = vpack.c.b16 %v2311, %v2303
      %v2400 = vpack.c.b16 %v2312, %v2304
      %v2401 = vpack.c.b16 %v2313, %v2305
      %v2402 = vpack.c.b16 %v2322, %v2314
      %v2403 = vpack.c.b16 %v2323, %v2315
      %v2404 = vpack.c.b16 %v2324, %v2316
      %v2405 = vpack.c.b16 %v2325, %v2317
      %v2406 = vpack.c.b16 %v2326, %v2318
      %v2407 = vpack.c.b16 %v2327, %v2319
      %v2408 = vpack.c.b16 %v2328, %v2320
      %v2409 = vpack.c.b16 %v2329, %v2321
      %v2410 = vpack.c.b16 %v2338, %v2330
      %v2411 = vpack.c.b16 %v2339, %v2331
      %v2412 = vpack.c.b16 %v2340, %v2332
      %v2413 = vpack.c.b16 %v2341, %v2333
      %v2414 = vpack.c.b16 %v2342, %v2334
      %v2415 = vpack.c.b16 %v2343, %v2335
      %v2416 = vpack.c.b16 %v2344, %v2336
      %v2417 = vpack.c.b16 %v2345, %v2337
      %v2418 = vpack.c.b16 %v2354, %v2346
      %v2419 = vpack.c.b16 %v2355, %v2347
      %v2420 = vpack.c.b16 %v2356, %v2348
      %v2421 = vpack.c.b16 %v2357, %v2349
      %v2422 = vpack.c.b16 %v2358, %v2350
      %v2423 = vpack.c.b16 %v2359, %v2351
      %v2424 = vpack.c.b16 %v2360, %v2352
      %v2425 = vpack.c.b16 %v2361, %v2353
      %v2426 = vpack.c.b16 %v2370, %v2362
      %v2427 = vpack.c.b16 %v2371, %v2363
      %v2428 = vpack.c.b16 %v2372, %v2364
      %v2429 = vpack.c.b16 %v2373, %v2365
      %v2430 = vpack.c.b16 %v2374, %v2366
      %v2431 = vpack.c.b16 %v2375, %v2367
      %v2432 = vpack.c.b16 %v2376, %v2368
      %v2433 = vpack.c.b16 %v2377, %v2369
      %vm2490 = vcmask 916480
      %v2492 = vsel %vm2490, %v209, 0
      %2494 = vmatprep.subr.bf16.mxu0 0
      %2495 = vmatpush1.bf16.msra.mxu0 0
      %2496 = vmatprep.subr.bf16.mxu0 %v2427
      %2497 = vmatpush1.bf16.msra.mxu0 %v2426
      %2498 = vmatprep.subr.bf16.mxu0 %v2419
      %2499 = vmatpush1.bf16.msra.mxu0 %v2418
      %2500 = vmatprep.subr.bf16.mxu0 %v2411
      %2501 = vmatpush1.bf16.msra.mxu0 %v2410
      %2502 = vmatprep.subr.bf16.mxu0 %v2403
      %2503 = vmatpush1.bf16.msra.mxu0 %v2402
      %2504 = vmatprep.subr.bf16.mxu0 %v2395
      %2505 = vmatpush1.bf16.msra.mxu0 %v2394
      %2506 = vmatprep.subr.bf16.mxu0 %v2387
      %2507 = vmatpush1.bf16.msra.mxu0 %v2386
      %2508 = vmatprep.subr.bf16.mxu0 %v2379
      %2509 = vmatpush1.bf16.msra.mxu0 %v2378
      %2510 = vmatprep.subr.bf16.mxu0 0
      %2511 = vmatpush2.bf16.msra.mxu0 0
      %2512 = vmatprep.subr.bf16.mxu0 0
      %2513 = vmatpush2.bf16.msra.mxu0 0
      %2514 = vmatprep.subr.bf16.mxu0 0
      %2515 = vmatpush2.bf16.msra.mxu0 0
      %2516 = vmatprep.subr.bf16.mxu0 0
      %2517 = vmatpush2.bf16.msra.mxu0 0
      %2518 = vmatprep.subr.bf16.mxu0 0
      %2519 = vmatpush2.bf16.msra.mxu0 0
      %2520 = vmatprep.subr.bf16.mxu0 0
      %2521 = vmatpush2.bf16.msra.mxu0 0
      %2522 = vmatprep.subr.bf16.mxu0 0
      %2523 = vmatpush2.bf16.msra.mxu0 0
      %2524 = vmatprep.subr.bf16.mxu0 0
      %2525 = vmatpush2.bf16.msra.mxu0 0
      %2526 = vmatprep.mubr.bf16.mxu0 0
      %2527 = vmatmul.mubr.bf16.gmra.mxu0 %v2492
      %v2528 = vpop.f32.mrf.mxu0
      %v2529 = vadd.f32 %v2081, %v2528
      %v2530 = vpop.f32.mrf.mxu0
      %v2531 = vadd.f32 %v2083, %v2530
      %v2532 = vpop.f32.mrf.mxu0
      %v2533 = vpop.f32.mrf.mxu0
      %2534 = vdwg.mxu0
      %2535 = vmatprep.subr.bf16.mxu0 0
      %2536 = vmatpush1.bf16.msra.mxu0 0
      %2537 = vmatprep.subr.bf16.mxu0 %v2429
      %2538 = vmatpush1.bf16.msra.mxu0 %v2428
      %2539 = vmatprep.subr.bf16.mxu0 %v2421
      %2540 = vmatpush1.bf16.msra.mxu0 %v2420
      %2541 = vmatprep.subr.bf16.mxu0 %v2413
      %2542 = vmatpush1.bf16.msra.mxu0 %v2412
      %2543 = vmatprep.subr.bf16.mxu0 %v2405
      %2544 = vmatpush1.bf16.msra.mxu0 %v2404
      %2545 = vmatprep.subr.bf16.mxu0 %v2397
      %2546 = vmatpush1.bf16.msra.mxu0 %v2396
      %2547 = vmatprep.subr.bf16.mxu0 %v2389
      %2548 = vmatpush1.bf16.msra.mxu0 %v2388
      %2549 = vmatprep.subr.bf16.mxu0 %v2381
      %2550 = vmatpush1.bf16.msra.mxu0 %v2380
      %2551 = vmatprep.subr.bf16.mxu0 0
      %2552 = vmatpush2.bf16.msra.mxu0 0
      %2553 = vmatprep.subr.bf16.mxu0 0
      %2554 = vmatpush2.bf16.msra.mxu0 0
      %2555 = vmatprep.subr.bf16.mxu0 0
      %2556 = vmatpush2.bf16.msra.mxu0 0
      %2557 = vmatprep.subr.bf16.mxu0 0
      %2558 = vmatpush2.bf16.msra.mxu0 0
      %2559 = vmatprep.subr.bf16.mxu0 0
      %2560 = vmatpush2.bf16.msra.mxu0 0
      %2561 = vmatprep.subr.bf16.mxu0 0
      %2562 = vmatpush2.bf16.msra.mxu0 0
      %2563 = vmatprep.subr.bf16.mxu0 0
      %2564 = vmatpush2.bf16.msra.mxu0 0
      %2565 = vmatprep.subr.bf16.mxu0 0
      %2566 = vmatpush2.bf16.msra.mxu0 0
      %2567 = vmatprep.mubr.bf16.mxu0 0
      %2568 = vmatmul.mubr.bf16.gmra.mxu0 %v2492
      %v2569 = vpop.f32.mrf.mxu0
      %v2570 = vadd.f32 %v2122, %v2569
      %v2571 = vpop.f32.mrf.mxu0
      %v2572 = vadd.f32 %v2124, %v2571
      %v2573 = vpop.f32.mrf.mxu0
      %v2574 = vpop.f32.mrf.mxu0
      %2575 = vdwg.mxu0
      %2576 = vmatprep.subr.bf16.mxu0 0
      %2577 = vmatpush1.bf16.msra.mxu0 0
      %2578 = vmatprep.subr.bf16.mxu0 %v2431
      %2579 = vmatpush1.bf16.msra.mxu0 %v2430
      %2580 = vmatprep.subr.bf16.mxu0 %v2423
      %2581 = vmatpush1.bf16.msra.mxu0 %v2422
      %2582 = vmatprep.subr.bf16.mxu0 %v2415
      %2583 = vmatpush1.bf16.msra.mxu0 %v2414
      %2584 = vmatprep.subr.bf16.mxu0 %v2407
      %2585 = vmatpush1.bf16.msra.mxu0 %v2406
      %2586 = vmatprep.subr.bf16.mxu0 %v2399
      %2587 = vmatpush1.bf16.msra.mxu0 %v2398
      %2588 = vmatprep.subr.bf16.mxu0 %v2391
      %2589 = vmatpush1.bf16.msra.mxu0 %v2390
      %2590 = vmatprep.subr.bf16.mxu0 %v2383
      %2591 = vmatpush1.bf16.msra.mxu0 %v2382
      %2592 = vmatprep.subr.bf16.mxu0 0
      %2593 = vmatpush2.bf16.msra.mxu0 0
      %2594 = vmatprep.subr.bf16.mxu0 0
      %2595 = vmatpush2.bf16.msra.mxu0 0
      %2596 = vmatprep.subr.bf16.mxu0 0
      %2597 = vmatpush2.bf16.msra.mxu0 0
      %2598 = vmatprep.subr.bf16.mxu0 0
      %2599 = vmatpush2.bf16.msra.mxu0 0
      %2600 = vmatprep.subr.bf16.mxu0 0
      %2601 = vmatpush2.bf16.msra.mxu0 0
      %2602 = vmatprep.subr.bf16.mxu0 0
      %2603 = vmatpush2.bf16.msra.mxu0 0
      %2604 = vmatprep.subr.bf16.mxu0 0
      %2605 = vmatpush2.bf16.msra.mxu0 0
      %2606 = vmatprep.subr.bf16.mxu0 0
      %2607 = vmatpush2.bf16.msra.mxu0 0
      %2608 = vmatprep.mubr.bf16.mxu0 0
      %2609 = vmatmul.mubr.bf16.gmra.mxu0 %v2492
      %v2610 = vpop.f32.mrf.mxu0
      %v2611 = vadd.f32 %v2163, %v2610
      %v2612 = vpop.f32.mrf.mxu0
      %v2613 = vadd.f32 %v2165, %v2612
      %v2614 = vpop.f32.mrf.mxu0
      %v2615 = vpop.f32.mrf.mxu0
      %2616 = vdwg.mxu0
      %2617 = vmatprep.subr.bf16.mxu0 0
      %2618 = vmatpush1.bf16.msra.mxu0 0
      %2619 = vmatprep.subr.bf16.mxu0 %v2433
      %2620 = vmatpush1.bf16.msra.mxu0 %v2432
      %2621 = vmatprep.subr.bf16.mxu0 %v2425
      %2622 = vmatpush1.bf16.msra.mxu0 %v2424
      %2623 = vmatprep.subr.bf16.mxu0 %v2417
      %2624 = vmatpush1.bf16.msra.mxu0 %v2416
      %2625 = vmatprep.subr.bf16.mxu0 %v2409
      %2626 = vmatpush1.bf16.msra.mxu0 %v2408
      %2627 = vmatprep.subr.bf16.mxu0 %v2401
      %2628 = vmatpush1.bf16.msra.mxu0 %v2400
      %2629 = vmatprep.subr.bf16.mxu0 %v2393
      %2630 = vmatpush1.bf16.msra.mxu0 %v2392
      %2631 = vmatprep.subr.bf16.mxu0 %v2385
      %2632 = vmatpush1.bf16.msra.mxu0 %v2384
      %2633 = vmatprep.subr.bf16.mxu0 0
      %2634 = vmatpush2.bf16.msra.mxu0 0
      %2635 = vmatprep.subr.bf16.mxu0 0
      %2636 = vmatpush2.bf16.msra.mxu0 0
      %2637 = vmatprep.subr.bf16.mxu0 0
      %2638 = vmatpush2.bf16.msra.mxu0 0
      %2639 = vmatprep.subr.bf16.mxu0 0
      %2640 = vmatpush2.bf16.msra.mxu0 0
      %2641 = vmatprep.subr.bf16.mxu0 0
      %2642 = vmatpush2.bf16.msra.mxu0 0
      %2643 = vmatprep.subr.bf16.mxu0 0
      %2644 = vmatpush2.bf16.msra.mxu0 0
      %2645 = vmatprep.subr.bf16.mxu0 0
      %2646 = vmatpush2.bf16.msra.mxu0 0
      %2647 = vmatprep.subr.bf16.mxu0 0
      %2648 = vmatpush2.bf16.msra.mxu0 0
      %2649 = vmatprep.mubr.bf16.mxu0 0
      %2650 = vmatmul.mubr.bf16.gmra.mxu0 %v2492
      %v2651 = vpop.f32.mrf.mxu0
      %v2652 = vadd.f32 %v2204, %v2651
      %v2653 = vpop.f32.mrf.mxu0
      %v2654 = vadd.f32 %v2206, %v2653
      %v2655 = vpop.f32.mrf.mxu0
      %v2656 = vpop.f32.mrf.mxu0
      %2657 = vdwg.mxu0
      %v2658 = vld [vmem:[%s2] sm:$0xff]
      %2660 = vset.pattern.permute.xlu0 0
      %2661 = vperm.xlu0 %2660, %v2658
      %v2662 = vpop.permute.xlu0 %2661
      %v2664 = vadd.f32 %v2529, %v2662
      %v2665 = vadd.f32 %v2531, %v2662
      %v2666 = vadd.f32 %v2570, %v2662
      %v2667 = vadd.f32 %v2572, %v2662
      %v2668 = vadd.f32 %v2611, %v2662
      %v2669 = vadd.f32 %v2613, %v2662
      %v2670 = vadd.f32 %v2652, %v2662
      %v2671 = vadd.f32 %v2654, %v2662
      %v2672 = vmax.f32 %v2664, 0.0
      %v2673 = vmax.f32 %v2665, 0.0
      %v2674 = vmax.f32 %v2666, 0.0
      %v2675 = vmax.f32 %v2667, 0.0
      %v2676 = vmax.f32 %v2668, 0.0
      %v2677 = vmax.f32 %v2669, 0.0
      %v2678 = vmax.f32 %v2670, 0.0
      %v2679 = vmax.f32 %v2671, 0.0
      %v2680 = vsel %vm200, 1, 0
      %v2681 = vlaneseq
      %v2682 = vshrl.u32 %v2681, 7
      %v2683 = vsub.s32 0, %v2682
      %v2684 = vrot.slane %v2680, %v2683
      %v2685 = vlaneseq
      %v2686 = vshrl.u32 %v2685, 7
      %v2687 = vsub.s32 1, %v2686
      %v2688 = vrot.slane %v2680, %v2687
      %v2689 = vlaneseq
      %v2690 = vshrl.u32 %v2689, 7
      %v2691 = vsub.s32 2, %v2690
      %v2692 = vrot.slane %v2680, %v2691
      %v2693 = vlaneseq
      %v2694 = vshrl.u32 %v2693, 7
      %v2695 = vsub.s32 3, %v2694
      %v2696 = vrot.slane %v2680, %v2695
      %v2697 = vlaneseq
      %v2698 = vshrl.u32 %v2697, 7
      %v2699 = vsub.s32 4, %v2698
      %v2700 = vrot.slane %v2680, %v2699
      %v2701 = vlaneseq
      %v2702 = vshrl.u32 %v2701, 7
      %v2703 = vsub.s32 5, %v2702
      %v2704 = vrot.slane %v2680, %v2703
      %v2705 = vlaneseq
      %v2706 = vshrl.u32 %v2705, 7
      %v2707 = vsub.s32 6, %v2706
      %v2708 = vrot.slane %v2680, %v2707
      %v2709 = vlaneseq
      %v2710 = vshrl.u32 %v2709, 7
      %v2711 = vsub.s32 7, %v2710
      %v2712 = vrot.slane %v2680, %v2711
      %vm2713 = vcmp.eq.s32.totalorder %v2684, 1
      %vm2714 = vcmp.eq.s32.totalorder %v2688, 1
      %vm2715 = vcmp.eq.s32.totalorder %v2692, 1
      %vm2716 = vcmp.eq.s32.totalorder %v2696, 1
      %vm2717 = vcmp.eq.s32.totalorder %v2700, 1
      %vm2718 = vcmp.eq.s32.totalorder %v2704, 1
      %vm2719 = vcmp.eq.s32.totalorder %v2708, 1
      %vm2720 = vcmp.eq.s32.totalorder %v2712, 1
      %v2721 = vsel %vm2713, %v2672, 0.0
      %v2722 = vsel %vm2714, %v2673, 0.0
      %v2723 = vsel %vm2715, %v2674, 0.0
      %v2724 = vsel %vm2716, %v2675, 0.0
      %v2725 = vsel %vm2717, %v2676, 0.0
      %v2726 = vsel %vm2718, %v2677, 0.0
      %v2727 = vsel %vm2719, %v2678, 0.0
      %v2728 = vsel %vm2720, %v2679, 0.0
      %s2729 = scalar_lea.vmem %s1, 8
      %v2730 = vld [vmem:[%s2729] sm:$0xff]
      %2731 = vrot.lane.b32.xlu0 %v2721, 111
      %v2732 = vpop.permute.xlu0 %2731
      %2733 = vrot.lane.b32.xlu0 %v2722, 111
      %v2734 = vpop.permute.xlu0 %2733
      %2735 = vrot.lane.b32.xlu0 %v2723, 111
      %v2736 = vpop.permute.xlu0 %2735
      %2737 = vrot.lane.b32.xlu0 %v2724, 111
      %v2738 = vpop.permute.xlu0 %2737
      %2739 = vrot.lane.b32.xlu0 %v2725, 111
      %v2740 = vpop.permute.xlu0 %2739
      %2741 = vrot.lane.b32.xlu0 %v2726, 111
      %v2742 = vpop.permute.xlu0 %2741
      %2743 = vrot.lane.b32.xlu0 %v2727, 111
      %v2744 = vpop.permute.xlu0 %2743
      %2745 = vrot.lane.b32.xlu0 %v2728, 111
      %v2746 = vpop.permute.xlu0 %2745
      %v2747 = vsel %vm228, %v2744, %v2746
      %v2748 = vsel %vm228, %v2742, %v2744
      %v2749 = vsel %vm228, %v2740, %v2742
      %v2750 = vsel %vm228, %v2738, %v2740
      %v2751 = vsel %vm228, %v2736, %v2738
      %v2752 = vsel %vm228, %v2734, %v2736
      %v2753 = vsel %vm228, %v2732, %v2734
      %v2754 = vsel %vm228, %v2746, %v2732
      %2755 = vrot.lane.b32.xlu0 %v2721, 110
      %v2756 = vpop.permute.xlu0 %2755
      %2757 = vrot.lane.b32.xlu0 %v2722, 110
      %v2758 = vpop.permute.xlu0 %2757
      %2759 = vrot.lane.b32.xlu0 %v2723, 110
      %v2760 = vpop.permute.xlu0 %2759
      %2761 = vrot.lane.b32.xlu0 %v2724, 110
      %v2762 = vpop.permute.xlu0 %2761
      %2763 = vrot.lane.b32.xlu0 %v2725, 110
      %v2764 = vpop.permute.xlu0 %2763
      %2765 = vrot.lane.b32.xlu0 %v2726, 110
      %v2766 = vpop.permute.xlu0 %2765
      %2767 = vrot.lane.b32.xlu0 %v2727, 110
      %v2768 = vpop.permute.xlu0 %2767
      %2769 = vrot.lane.b32.xlu0 %v2728, 110
      %v2770 = vpop.permute.xlu0 %2769
      %v2771 = vsel %vm253, %v2768, %v2770
      %v2772 = vsel %vm253, %v2766, %v2768
      %v2773 = vsel %vm253, %v2764, %v2766
      %v2774 = vsel %vm253, %v2762, %v2764
      %v2775 = vsel %vm253, %v2760, %v2762
      %v2776 = vsel %vm253, %v2758, %v2760
      %v2777 = vsel %vm253, %v2756, %v2758
      %v2778 = vsel %vm253, %v2770, %v2756
      %v2779 = vpack.c.bf16 %v2778, %v2754
      %v2780 = vpack.c.bf16 %v2777, %v2753
      %v2781 = vpack.c.bf16 %v2776, %v2752
      %v2782 = vpack.c.bf16 %v2775, %v2751
      %v2783 = vpack.c.bf16 %v2774, %v2750
      %v2784 = vpack.c.bf16 %v2773, %v2749
      %v2785 = vpack.c.bf16 %v2772, %v2748
      %v2786 = vpack.c.bf16 %v2771, %v2747
      %v2795 = vunpack.c.l.b16 %v2779
      %v2796 = vunpack.c.l.b16 %v2780
      %v2797 = vunpack.c.l.b16 %v2781
      %v2798 = vunpack.c.l.b16 %v2782
      %v2799 = vunpack.c.l.b16 %v2783
      %v2800 = vunpack.c.l.b16 %v2784
      %v2801 = vunpack.c.l.b16 %v2785
      %v2802 = vunpack.c.l.b16 %v2786
      %v2803 = vunpack.c.h.b16 %v2779
      %v2804 = vunpack.c.h.b16 %v2780
      %v2805 = vunpack.c.h.b16 %v2781
      %v2806 = vunpack.c.h.b16 %v2782
      %v2807 = vunpack.c.h.b16 %v2783
      %v2808 = vunpack.c.h.b16 %v2784
      %v2809 = vunpack.c.h.b16 %v2785
      %v2810 = vunpack.c.h.b16 %v2786
      %v2811 = vpack.c.b16 %v2796, %v2795
      %v2812 = vpack.c.b16 %v2798, %v2797
      %v2813 = vpack.c.b16 %v2800, %v2799
      %v2814 = vpack.c.b16 %v2802, %v2801
      %v2815 = vpack.c.b16 %v2804, %v2803
      %v2816 = vpack.c.b16 %v2806, %v2805
      %v2817 = vpack.c.b16 %v2808, %v2807
      %v2818 = vpack.c.b16 %v2810, %v2809
      %2827 = vst [vmem:[#allocation2] sm:$0xff] %v2811
      %2828 = vst [vmem:[#allocation2 + $0x8] sm:$0xff] %v2812
      %2829 = vst [vmem:[#allocation2 + $0x10] sm:$0xff] %v2813
      %2830 = vst [vmem:[#allocation2 + $0x18] sm:$0xff] %v2814
      %2831 = vst [vmem:[#allocation2 + $0x20] sm:$0xff] %v2815
      %2832 = vst [vmem:[#allocation2 + $0x28] sm:$0xff] %v2816
      %2833 = vst [vmem:[#allocation2 + $0x30] sm:$0xff] %v2817
      %2834 = vst [vmem:[#allocation2 + $0x38] sm:$0xff] %v2818
      %2835 = vrot.lane.b32.xlu0 %v2721, 109
      %v2836 = vpop.permute.xlu0 %2835
      %2837 = vrot.lane.b32.xlu0 %v2722, 109
      %v2838 = vpop.permute.xlu0 %2837
      %2839 = vrot.lane.b32.xlu0 %v2723, 109
      %v2840 = vpop.permute.xlu0 %2839
      %2841 = vrot.lane.b32.xlu0 %v2724, 109
      %v2842 = vpop.permute.xlu0 %2841
      %2843 = vrot.lane.b32.xlu0 %v2725, 109
      %v2844 = vpop.permute.xlu0 %2843
      %2845 = vrot.lane.b32.xlu0 %v2726, 109
      %v2846 = vpop.permute.xlu0 %2845
      %2847 = vrot.lane.b32.xlu0 %v2727, 109
      %v2848 = vpop.permute.xlu0 %2847
      %2849 = vrot.lane.b32.xlu0 %v2728, 109
      %v2850 = vpop.permute.xlu0 %2849
      %v2851 = vsel %vm334, %v2848, %v2850
      %v2852 = vsel %vm334, %v2846, %v2848
      %v2853 = vsel %vm334, %v2844, %v2846
      %v2854 = vsel %vm334, %v2842, %v2844
      %v2855 = vsel %vm334, %v2840, %v2842
      %v2856 = vsel %vm334, %v2838, %v2840
      %v2857 = vsel %vm334, %v2836, %v2838
      %v2858 = vsel %vm334, %v2850, %v2836
      %2859 = vrot.lane.b32.xlu0 %v2721, 101
      %v2860 = vpop.permute.xlu0 %2859
      %2861 = vrot.lane.b32.xlu0 %v2722, 101
      %v2862 = vpop.permute.xlu0 %2861
      %2863 = vrot.lane.b32.xlu0 %v2723, 101
      %v2864 = vpop.permute.xlu0 %2863
      %2865 = vrot.lane.b32.xlu0 %v2724, 101
      %v2866 = vpop.permute.xlu0 %2865
      %2867 = vrot.lane.b32.xlu0 %v2725, 101
      %v2868 = vpop.permute.xlu0 %2867
      %2869 = vrot.lane.b32.xlu0 %v2726, 101
      %v2870 = vpop.permute.xlu0 %2869
      %2871 = vrot.lane.b32.xlu0 %v2727, 101
      %v2872 = vpop.permute.xlu0 %2871
      %2873 = vrot.lane.b32.xlu0 %v2728, 101
      %v2874 = vpop.permute.xlu0 %2873
      %v2875 = vsel %vm359, %v2872, %v2874
      %v2876 = vsel %vm359, %v2870, %v2872
      %v2877 = vsel %vm359, %v2868, %v2870
      %v2878 = vsel %vm359, %v2866, %v2868
      %v2879 = vsel %vm359, %v2864, %v2866
      %v2880 = vsel %vm359, %v2862, %v2864
      %v2881 = vsel %vm359, %v2860, %v2862
      %v2882 = vsel %vm359, %v2874, %v2860
      %v2883 = vpack.c.bf16 %v2882, %v2858
      %v2884 = vpack.c.bf16 %v2881, %v2857
      %v2885 = vpack.c.bf16 %v2880, %v2856
      %v2886 = vpack.c.bf16 %v2879, %v2855
      %v2887 = vpack.c.bf16 %v2878, %v2854
      %v2888 = vpack.c.bf16 %v2877, %v2853
      %v2889 = vpack.c.bf16 %v2876, %v2852
      %v2890 = vpack.c.bf16 %v2875, %v2851
      %v2899 = vunpack.c.l.b16 %v2883
      %v2900 = vunpack.c.l.b16 %v2884
      %v2901 = vunpack.c.l.b16 %v2885
      %v2902 = vunpack.c.l.b16 %v2886
      %v2903 = vunpack.c.l.b16 %v2887
      %v2904 = vunpack.c.l.b16 %v2888
      %v2905 = vunpack.c.l.b16 %v2889
      %v2906 = vunpack.c.l.b16 %v2890
      %v2907 = vunpack.c.h.b16 %v2883
      %v2908 = vunpack.c.h.b16 %v2884
      %v2909 = vunpack.c.h.b16 %v2885
      %v2910 = vunpack.c.h.b16 %v2886
      %v2911 = vunpack.c.h.b16 %v2887
      %v2912 = vunpack.c.h.b16 %v2888
      %v2913 = vunpack.c.h.b16 %v2889
      %v2914 = vunpack.c.h.b16 %v2890
      %v2915 = vpack.c.b16 %v2900, %v2899
      %v2916 = vpack.c.b16 %v2902, %v2901
      %v2917 = vpack.c.b16 %v2904, %v2903
      %v2918 = vpack.c.b16 %v2906, %v2905
      %v2919 = vpack.c.b16 %v2908, %v2907
      %v2920 = vpack.c.b16 %v2910, %v2909
      %v2921 = vpack.c.b16 %v2912, %v2911
      %v2922 = vpack.c.b16 %v2914, %v2913
      %2931 = vst [vmem:[#allocation2 + $0x40] sm:$0xff] %v2915
      %2932 = vst [vmem:[#allocation2 + $0x48] sm:$0xff] %v2916
      %2933 = vst [vmem:[#allocation2 + $0x50] sm:$0xff] %v2917
      %2934 = vst [vmem:[#allocation2 + $0x58] sm:$0xff] %v2918
      %2935 = vst [vmem:[#allocation2 + $0x60] sm:$0xff] %v2919
      %2936 = vst [vmem:[#allocation2 + $0x68] sm:$0xff] %v2920
      %2937 = vst [vmem:[#allocation2 + $0x70] sm:$0xff] %v2921
      %2938 = vst [vmem:[#allocation2 + $0x78] sm:$0xff] %v2922
      %2939 = vrot.lane.b32.xlu0 %v2721, 100
      %v2940 = vpop.permute.xlu0 %2939
      %2941 = vrot.lane.b32.xlu0 %v2722, 100
      %v2942 = vpop.permute.xlu0 %2941
      %2943 = vrot.lane.b32.xlu0 %v2723, 100
      %v2944 = vpop.permute.xlu0 %2943
      %2945 = vrot.lane.b32.xlu0 %v2724, 100
      %v2946 = vpop.permute.xlu0 %2945
      %2947 = vrot.lane.b32.xlu0 %v2725, 100
      %v2948 = vpop.permute.xlu0 %2947
      %2949 = vrot.lane.b32.xlu0 %v2726, 100
      %v2950 = vpop.permute.xlu0 %2949
      %2951 = vrot.lane.b32.xlu0 %v2727, 100
      %v2952 = vpop.permute.xlu0 %2951
      %2953 = vrot.lane.b32.xlu0 %v2728, 100
      %v2954 = vpop.permute.xlu0 %2953
      %v2955 = vsel %vm440, %v2952, %v2954
      %v2956 = vsel %vm440, %v2950, %v2952
      %v2957 = vsel %vm440, %v2948, %v2950
      %v2958 = vsel %vm440, %v2946, %v2948
      %v2959 = vsel %vm440, %v2944, %v2946
      %v2960 = vsel %vm440, %v2942, %v2944
      %v2961 = vsel %vm440, %v2940, %v2942
      %v2962 = vsel %vm440, %v2954, %v2940
      %2963 = vrot.lane.b32.xlu0 %v2721, 99
      %v2964 = vpop.permute.xlu0 %2963
      %2965 = vrot.lane.b32.xlu0 %v2722, 99
      %v2966 = vpop.permute.xlu0 %2965
      %2967 = vrot.lane.b32.xlu0 %v2723, 99
      %v2968 = vpop.permute.xlu0 %2967
      %2969 = vrot.lane.b32.xlu0 %v2724, 99
      %v2970 = vpop.permute.xlu0 %2969
      %2971 = vrot.lane.b32.xlu0 %v2725, 99
      %v2972 = vpop.permute.xlu0 %2971
      %2973 = vrot.lane.b32.xlu0 %v2726, 99
      %v2974 = vpop.permute.xlu0 %2973
      %2975 = vrot.lane.b32.xlu0 %v2727, 99
      %v2976 = vpop.permute.xlu0 %2975
      %2977 = vrot.lane.b32.xlu0 %v2728, 99
      %v2978 = vpop.permute.xlu0 %2977
      %v2979 = vsel %vm465, %v2976, %v2978
      %v2980 = vsel %vm465, %v2974, %v2976
      %v2981 = vsel %vm465, %v2972, %v2974
      %v2982 = vsel %vm465, %v2970, %v2972
      %v2983 = vsel %vm465, %v2968, %v2970
      %v2984 = vsel %vm465, %v2966, %v2968
      %v2985 = vsel %vm465, %v2964, %v2966
      %v2986 = vsel %vm465, %v2978, %v2964
      %v2987 = vpack.c.bf16 %v2986, %v2962
      %v2988 = vpack.c.bf16 %v2985, %v2961
      %v2989 = vpack.c.bf16 %v2984, %v2960
      %v2990 = vpack.c.bf16 %v2983, %v2959
      %v2991 = vpack.c.bf16 %v2982, %v2958
      %v2992 = vpack.c.bf16 %v2981, %v2957
      %v2993 = vpack.c.bf16 %v2980, %v2956
      %v2994 = vpack.c.bf16 %v2979, %v2955
      %v3003 = vunpack.c.l.b16 %v2987
      %v3004 = vunpack.c.l.b16 %v2988
      %v3005 = vunpack.c.l.b16 %v2989
      %v3006 = vunpack.c.l.b16 %v2990
      %v3007 = vunpack.c.l.b16 %v2991
      %v3008 = vunpack.c.l.b16 %v2992
      %v3009 = vunpack.c.l.b16 %v2993
      %v3010 = vunpack.c.l.b16 %v2994
      %v3011 = vunpack.c.h.b16 %v2987
      %v3012 = vunpack.c.h.b16 %v2988
      %v3013 = vunpack.c.h.b16 %v2989
      %v3014 = vunpack.c.h.b16 %v2990
      %v3015 = vunpack.c.h.b16 %v2991
      %v3016 = vunpack.c.h.b16 %v2992
      %v3017 = vunpack.c.h.b16 %v2993
      %v3018 = vunpack.c.h.b16 %v2994
      %v3019 = vpack.c.b16 %v3004, %v3003
      %v3020 = vpack.c.b16 %v3006, %v3005
      %v3021 = vpack.c.b16 %v3008, %v3007
      %v3022 = vpack.c.b16 %v3010, %v3009
      %v3023 = vpack.c.b16 %v3012, %v3011
      %v3024 = vpack.c.b16 %v3014, %v3013
      %v3025 = vpack.c.b16 %v3016, %v3015
      %v3026 = vpack.c.b16 %v3018, %v3017
      %3035 = vst [vmem:[#allocation2 + $0x80] sm:$0xff] %v3019
      %3036 = vst [vmem:[#allocation2 + $0x88] sm:$0xff] %v3020
      %3037 = vst [vmem:[#allocation2 + $0x90] sm:$0xff] %v3021
      %3038 = vst [vmem:[#allocation2 + $0x98] sm:$0xff] %v3022
      %3039 = vst [vmem:[#allocation2 + $0xa0] sm:$0xff] %v3023
      %3040 = vst [vmem:[#allocation2 + $0xa8] sm:$0xff] %v3024
      %3041 = vst [vmem:[#allocation2 + $0xb0] sm:$0xff] %v3025
      %3042 = vst [vmem:[#allocation2 + $0xb8] sm:$0xff] %v3026
      %3043 = vrot.lane.b32.xlu0 %v2721, 91
      %v3044 = vpop.permute.xlu0 %3043
      %3045 = vrot.lane.b32.xlu0 %v2722, 91
      %v3046 = vpop.permute.xlu0 %3045
      %3047 = vrot.lane.b32.xlu0 %v2723, 91
      %v3048 = vpop.permute.xlu0 %3047
      %3049 = vrot.lane.b32.xlu0 %v2724, 91
      %v3050 = vpop.permute.xlu0 %3049
      %3051 = vrot.lane.b32.xlu0 %v2725, 91
      %v3052 = vpop.permute.xlu0 %3051
      %3053 = vrot.lane.b32.xlu0 %v2726, 91
      %v3054 = vpop.permute.xlu0 %3053
      %3055 = vrot.lane.b32.xlu0 %v2727, 91
      %v3056 = vpop.permute.xlu0 %3055
      %3057 = vrot.lane.b32.xlu0 %v2728, 91
      %v3058 = vpop.permute.xlu0 %3057
      %v3059 = vsel %vm546, %v3056, %v3058
      %v3060 = vsel %vm546, %v3054, %v3056
      %v3061 = vsel %vm546, %v3052, %v3054
      %v3062 = vsel %vm546, %v3050, %v3052
      %v3063 = vsel %vm546, %v3048, %v3050
      %v3064 = vsel %vm546, %v3046, %v3048
      %v3065 = vsel %vm546, %v3044, %v3046
      %v3066 = vsel %vm546, %v3058, %v3044
      %3067 = vrot.lane.b32.xlu0 %v2721, 90
      %v3068 = vpop.permute.xlu0 %3067
      %3069 = vrot.lane.b32.xlu0 %v2722, 90
      %v3070 = vpop.permute.xlu0 %3069
      %3071 = vrot.lane.b32.xlu0 %v2723, 90
      %v3072 = vpop.permute.xlu0 %3071
      %3073 = vrot.lane.b32.xlu0 %v2724, 90
      %v3074 = vpop.permute.xlu0 %3073
      %3075 = vrot.lane.b32.xlu0 %v2725, 90
      %v3076 = vpop.permute.xlu0 %3075
      %3077 = vrot.lane.b32.xlu0 %v2726, 90
      %v3078 = vpop.permute.xlu0 %3077
      %3079 = vrot.lane.b32.xlu0 %v2727, 90
      %v3080 = vpop.permute.xlu0 %3079
      %3081 = vrot.lane.b32.xlu0 %v2728, 90
      %v3082 = vpop.permute.xlu0 %3081
      %v3083 = vsel %vm571, %v3080, %v3082
      %v3084 = vsel %vm571, %v3078, %v3080
      %v3085 = vsel %vm571, %v3076, %v3078
      %v3086 = vsel %vm571, %v3074, %v3076
      %v3087 = vsel %vm571, %v3072, %v3074
      %v3088 = vsel %vm571, %v3070, %v3072
      %v3089 = vsel %vm571, %v3068, %v3070
      %v3090 = vsel %vm571, %v3082, %v3068
      %v3091 = vpack.c.bf16 %v3090, %v3066
      %v3092 = vpack.c.bf16 %v3089, %v3065
      %v3093 = vpack.c.bf16 %v3088, %v3064
      %v3094 = vpack.c.bf16 %v3087, %v3063
      %v3095 = vpack.c.bf16 %v3086, %v3062
      %v3096 = vpack.c.bf16 %v3085, %v3061
      %v3097 = vpack.c.bf16 %v3084, %v3060
      %v3098 = vpack.c.bf16 %v3083, %v3059
      %v3107 = vunpack.c.l.b16 %v3091
      %v3108 = vunpack.c.l.b16 %v3092
      %v3109 = vunpack.c.l.b16 %v3093
      %v3110 = vunpack.c.l.b16 %v3094
      %v3111 = vunpack.c.l.b16 %v3095
      %v3112 = vunpack.c.l.b16 %v3096
      %v3113 = vunpack.c.l.b16 %v3097
      %v3114 = vunpack.c.l.b16 %v3098
      %v3115 = vunpack.c.h.b16 %v3091
      %v3116 = vunpack.c.h.b16 %v3092
      %v3117 = vunpack.c.h.b16 %v3093
      %v3118 = vunpack.c.h.b16 %v3094
      %v3119 = vunpack.c.h.b16 %v3095
      %v3120 = vunpack.c.h.b16 %v3096
      %v3121 = vunpack.c.h.b16 %v3097
      %v3122 = vunpack.c.h.b16 %v3098
      %v3123 = vpack.c.b16 %v3108, %v3107
      %v3124 = vpack.c.b16 %v3110, %v3109
      %v3125 = vpack.c.b16 %v3112, %v3111
      %v3126 = vpack.c.b16 %v3114, %v3113
      %v3127 = vpack.c.b16 %v3116, %v3115
      %v3128 = vpack.c.b16 %v3118, %v3117
      %v3129 = vpack.c.b16 %v3120, %v3119
      %v3130 = vpack.c.b16 %v3122, %v3121
      %3139 = vst [vmem:[#allocation2 + $0xc0] sm:$0xff] %v3123
      %3140 = vst [vmem:[#allocation2 + $0xc8] sm:$0xff] %v3124
      %3141 = vst [vmem:[#allocation2 + $0xd0] sm:$0xff] %v3125
      %3142 = vst [vmem:[#allocation2 + $0xd8] sm:$0xff] %v3126
      %3143 = vst [vmem:[#allocation2 + $0xe0] sm:$0xff] %v3127
      %3144 = vst [vmem:[#allocation2 + $0xe8] sm:$0xff] %v3128
      %3145 = vst [vmem:[#allocation2 + $0xf0] sm:$0xff] %v3129
      %3146 = vst [vmem:[#allocation2 + $0xf8] sm:$0xff] %v3130
      %3147 = vrot.lane.b32.xlu0 %v2721, 89
      %v3148 = vpop.permute.xlu0 %3147
      %3149 = vrot.lane.b32.xlu0 %v2722, 89
      %v3150 = vpop.permute.xlu0 %3149
      %3151 = vrot.lane.b32.xlu0 %v2723, 89
      %v3152 = vpop.permute.xlu0 %3151
      %3153 = vrot.lane.b32.xlu0 %v2724, 89
      %v3154 = vpop.permute.xlu0 %3153
      %3155 = vrot.lane.b32.xlu0 %v2725, 89
      %v3156 = vpop.permute.xlu0 %3155
      %3157 = vrot.lane.b32.xlu0 %v2726, 89
      %v3158 = vpop.permute.xlu0 %3157
      %3159 = vrot.lane.b32.xlu0 %v2727, 89
      %v3160 = vpop.permute.xlu0 %3159
      %3161 = vrot.lane.b32.xlu0 %v2728, 89
      %v3162 = vpop.permute.xlu0 %3161
      %v3163 = vsel %vm652, %v3160, %v3162
      %v3164 = vsel %vm652, %v3158, %v3160
      %v3165 = vsel %vm652, %v3156, %v3158
      %v3166 = vsel %vm652, %v3154, %v3156
      %v3167 = vsel %vm652, %v3152, %v3154
      %v3168 = vsel %vm652, %v3150, %v3152
      %v3169 = vsel %vm652, %v3148, %v3150
      %v3170 = vsel %vm652, %v3162, %v3148
      %3171 = vrot.lane.b32.xlu0 %v2721, 11
      %v3172 = vpop.permute.xlu0 %3171
      %3173 = vrot.lane.b32.xlu0 %v2722, 11
      %v3174 = vpop.permute.xlu0 %3173
      %3175 = vrot.lane.b32.xlu0 %v2723, 11
      %v3176 = vpop.permute.xlu0 %3175
      %3177 = vrot.lane.b32.xlu0 %v2724, 11
      %v3178 = vpop.permute.xlu0 %3177
      %3179 = vrot.lane.b32.xlu0 %v2725, 11
      %v3180 = vpop.permute.xlu0 %3179
      %3181 = vrot.lane.b32.xlu0 %v2726, 11
      %v3182 = vpop.permute.xlu0 %3181
      %3183 = vrot.lane.b32.xlu0 %v2727, 11
      %v3184 = vpop.permute.xlu0 %3183
      %3185 = vrot.lane.b32.xlu0 %v2728, 11
      %v3186 = vpop.permute.xlu0 %3185
      %v3187 = vsel %vm677, %v3184, %v3186
      %v3188 = vsel %vm677, %v3182, %v3184
      %v3189 = vsel %vm677, %v3180, %v3182
      %v3190 = vsel %vm677, %v3178, %v3180
      %v3191 = vsel %vm677, %v3176, %v3178
      %v3192 = vsel %vm677, %v3174, %v3176
      %v3193 = vsel %vm677, %v3172, %v3174
      %v3194 = vsel %vm677, %v3186, %v3172
      %v3195 = vpack.c.bf16 %v3194, %v3170
      %v3196 = vpack.c.bf16 %v3193, %v3169
      %v3197 = vpack.c.bf16 %v3192, %v3168
      %v3198 = vpack.c.bf16 %v3191, %v3167
      %v3199 = vpack.c.bf16 %v3190, %v3166
      %v3200 = vpack.c.bf16 %v3189, %v3165
      %v3201 = vpack.c.bf16 %v3188, %v3164
      %v3202 = vpack.c.bf16 %v3187, %v3163
      %v3211 = vunpack.c.l.b16 %v3195
      %v3212 = vunpack.c.l.b16 %v3196
      %v3213 = vunpack.c.l.b16 %v3197
      %v3214 = vunpack.c.l.b16 %v3198
      %v3215 = vunpack.c.l.b16 %v3199
      %v3216 = vunpack.c.l.b16 %v3200
      %v3217 = vunpack.c.l.b16 %v3201
      %v3218 = vunpack.c.l.b16 %v3202
      %v3219 = vunpack.c.h.b16 %v3195
      %v3220 = vunpack.c.h.b16 %v3196
      %v3221 = vunpack.c.h.b16 %v3197
      %v3222 = vunpack.c.h.b16 %v3198
      %v3223 = vunpack.c.h.b16 %v3199
      %v3224 = vunpack.c.h.b16 %v3200
      %v3225 = vunpack.c.h.b16 %v3201
      %v3226 = vunpack.c.h.b16 %v3202
      %v3227 = vpack.c.b16 %v3212, %v3211
      %v3228 = vpack.c.b16 %v3214, %v3213
      %v3229 = vpack.c.b16 %v3216, %v3215
      %v3230 = vpack.c.b16 %v3218, %v3217
      %v3231 = vpack.c.b16 %v3220, %v3219
      %v3232 = vpack.c.b16 %v3222, %v3221
      %v3233 = vpack.c.b16 %v3224, %v3223
      %v3234 = vpack.c.b16 %v3226, %v3225
      %3243 = vst [vmem:[#allocation2 + $0x100] sm:$0xff] %v3227
      %3244 = vst [vmem:[#allocation2 + $0x108] sm:$0xff] %v3228
      %3245 = vst [vmem:[#allocation2 + $0x110] sm:$0xff] %v3229
      %3246 = vst [vmem:[#allocation2 + $0x118] sm:$0xff] %v3230
      %3247 = vst [vmem:[#allocation2 + $0x120] sm:$0xff] %v3231
      %3248 = vst [vmem:[#allocation2 + $0x128] sm:$0xff] %v3232
      %3249 = vst [vmem:[#allocation2 + $0x130] sm:$0xff] %v3233
      %3250 = vst [vmem:[#allocation2 + $0x138] sm:$0xff] %v3234
      %3251 = vrot.lane.b32.xlu0 %v2721, 10
      %v3252 = vpop.permute.xlu0 %3251
      %3253 = vrot.lane.b32.xlu0 %v2722, 10
      %v3254 = vpop.permute.xlu0 %3253
      %3255 = vrot.lane.b32.xlu0 %v2723, 10
      %v3256 = vpop.permute.xlu0 %3255
      %3257 = vrot.lane.b32.xlu0 %v2724, 10
      %v3258 = vpop.permute.xlu0 %3257
      %3259 = vrot.lane.b32.xlu0 %v2725, 10
      %v3260 = vpop.permute.xlu0 %3259
      %3261 = vrot.lane.b32.xlu0 %v2726, 10
      %v3262 = vpop.permute.xlu0 %3261
      %3263 = vrot.lane.b32.xlu0 %v2727, 10
      %v3264 = vpop.permute.xlu0 %3263
      %3265 = vrot.lane.b32.xlu0 %v2728, 10
      %v3266 = vpop.permute.xlu0 %3265
      %v3267 = vsel %vm758, %v3264, %v3266
      %v3268 = vsel %vm758, %v3262, %v3264
      %v3269 = vsel %vm758, %v3260, %v3262
      %v3270 = vsel %vm758, %v3258, %v3260
      %v3271 = vsel %vm758, %v3256, %v3258
      %v3272 = vsel %vm758, %v3254, %v3256
      %v3273 = vsel %vm758, %v3252, %v3254
      %v3274 = vsel %vm758, %v3266, %v3252
      %3275 = vrot.lane.b32.xlu0 %v2721, 9
      %v3276 = vpop.permute.xlu0 %3275
      %3277 = vrot.lane.b32.xlu0 %v2722, 9
      %v3278 = vpop.permute.xlu0 %3277
      %3279 = vrot.lane.b32.xlu0 %v2723, 9
      %v3280 = vpop.permute.xlu0 %3279
      %3281 = vrot.lane.b32.xlu0 %v2724, 9
      %v3282 = vpop.permute.xlu0 %3281
      %3283 = vrot.lane.b32.xlu0 %v2725, 9
      %v3284 = vpop.permute.xlu0 %3283
      %3285 = vrot.lane.b32.xlu0 %v2726, 9
      %v3286 = vpop.permute.xlu0 %3285
      %3287 = vrot.lane.b32.xlu0 %v2727, 9
      %v3288 = vpop.permute.xlu0 %3287
      %3289 = vrot.lane.b32.xlu0 %v2728, 9
      %v3290 = vpop.permute.xlu0 %3289
      %v3291 = vsel %vm783, %v3288, %v3290
      %v3292 = vsel %vm783, %v3286, %v3288
      %v3293 = vsel %vm783, %v3284, %v3286
      %v3294 = vsel %vm783, %v3282, %v3284
      %v3295 = vsel %vm783, %v3280, %v3282
      %v3296 = vsel %vm783, %v3278, %v3280
      %v3297 = vsel %vm783, %v3276, %v3278
      %v3298 = vsel %vm783, %v3290, %v3276
      %v3299 = vpack.c.bf16 %v3298, %v3274
      %v3300 = vpack.c.bf16 %v3297, %v3273
      %v3301 = vpack.c.bf16 %v3296, %v3272
      %v3302 = vpack.c.bf16 %v3295, %v3271
      %v3303 = vpack.c.bf16 %v3294, %v3270
      %v3304 = vpack.c.bf16 %v3293, %v3269
      %v3305 = vpack.c.bf16 %v3292, %v3268
      %v3306 = vpack.c.bf16 %v3291, %v3267
      %v3315 = vunpack.c.l.b16 %v3299
      %v3316 = vunpack.c.l.b16 %v3300
      %v3317 = vunpack.c.l.b16 %v3301
      %v3318 = vunpack.c.l.b16 %v3302
      %v3319 = vunpack.c.l.b16 %v3303
      %v3320 = vunpack.c.l.b16 %v3304
      %v3321 = vunpack.c.l.b16 %v3305
      %v3322 = vunpack.c.l.b16 %v3306
      %v3323 = vunpack.c.h.b16 %v3299
      %v3324 = vunpack.c.h.b16 %v3300
      %v3325 = vunpack.c.h.b16 %v3301
      %v3326 = vunpack.c.h.b16 %v3302
      %v3327 = vunpack.c.h.b16 %v3303
      %v3328 = vunpack.c.h.b16 %v3304
      %v3329 = vunpack.c.h.b16 %v3305
      %v3330 = vunpack.c.h.b16 %v3306
      %v3331 = vpack.c.b16 %v3316, %v3315
      %v3332 = vpack.c.b16 %v3318, %v3317
      %v3333 = vpack.c.b16 %v3320, %v3319
      %v3334 = vpack.c.b16 %v3322, %v3321
      %v3335 = vpack.c.b16 %v3324, %v3323
      %v3336 = vpack.c.b16 %v3326, %v3325
      %v3337 = vpack.c.b16 %v3328, %v3327
      %v3338 = vpack.c.b16 %v3330, %v3329
      %3347 = vst [vmem:[#allocation2 + $0x140] sm:$0xff] %v3331
      %3348 = vst [vmem:[#allocation2 + $0x148] sm:$0xff] %v3332
      %3349 = vst [vmem:[#allocation2 + $0x150] sm:$0xff] %v3333
      %3350 = vst [vmem:[#allocation2 + $0x158] sm:$0xff] %v3334
      %3351 = vst [vmem:[#allocation2 + $0x160] sm:$0xff] %v3335
      %3352 = vst [vmem:[#allocation2 + $0x168] sm:$0xff] %v3336
      %3353 = vst [vmem:[#allocation2 + $0x170] sm:$0xff] %v3337
      %3354 = vst [vmem:[#allocation2 + $0x178] sm:$0xff] %v3338
      %3355 = vrot.lane.b32.xlu0 %v2721, 1
      %v3356 = vpop.permute.xlu0 %3355
      %3357 = vrot.lane.b32.xlu0 %v2722, 1
      %v3358 = vpop.permute.xlu0 %3357
      %3359 = vrot.lane.b32.xlu0 %v2723, 1
      %v3360 = vpop.permute.xlu0 %3359
      %3361 = vrot.lane.b32.xlu0 %v2724, 1
      %v3362 = vpop.permute.xlu0 %3361
      %3363 = vrot.lane.b32.xlu0 %v2725, 1
      %v3364 = vpop.permute.xlu0 %3363
      %3365 = vrot.lane.b32.xlu0 %v2726, 1
      %v3366 = vpop.permute.xlu0 %3365
      %3367 = vrot.lane.b32.xlu0 %v2727, 1
      %v3368 = vpop.permute.xlu0 %3367
      %3369 = vrot.lane.b32.xlu0 %v2728, 1
      %v3370 = vpop.permute.xlu0 %3369
      %v3371 = vsel %vm864, %v3368, %v3370
      %v3372 = vsel %vm864, %v3366, %v3368
      %v3373 = vsel %vm864, %v3364, %v3366
      %v3374 = vsel %vm864, %v3362, %v3364
      %v3375 = vsel %vm864, %v3360, %v3362
      %v3376 = vsel %vm864, %v3358, %v3360
      %v3377 = vsel %vm864, %v3356, %v3358
      %v3378 = vsel %vm864, %v3370, %v3356
      %v3379 = vpack.c.bf16 %v2721, %v3378
      %v3380 = vpack.c.bf16 %v2722, %v3377
      %v3381 = vpack.c.bf16 %v2723, %v3376
      %v3382 = vpack.c.bf16 %v2724, %v3375
      %v3383 = vpack.c.bf16 %v2725, %v3374
      %v3384 = vpack.c.bf16 %v2726, %v3373
      %v3385 = vpack.c.bf16 %v2727, %v3372
      %v3386 = vpack.c.bf16 %v2728, %v3371
      %v3395 = vunpack.c.l.b16 %v3379
      %v3396 = vunpack.c.l.b16 %v3380
      %v3397 = vunpack.c.l.b16 %v3381
      %v3398 = vunpack.c.l.b16 %v3382
      %v3399 = vunpack.c.l.b16 %v3383
      %v3400 = vunpack.c.l.b16 %v3384
      %v3401 = vunpack.c.l.b16 %v3385
      %v3402 = vunpack.c.l.b16 %v3386
      %v3403 = vunpack.c.h.b16 %v3379
      %v3404 = vunpack.c.h.b16 %v3380
      %v3405 = vunpack.c.h.b16 %v3381
      %v3406 = vunpack.c.h.b16 %v3382
      %v3407 = vunpack.c.h.b16 %v3383
      %v3408 = vunpack.c.h.b16 %v3384
      %v3409 = vunpack.c.h.b16 %v3385
      %v3410 = vunpack.c.h.b16 %v3386
      %v3411 = vpack.c.b16 %v3396, %v3395
      %v3412 = vpack.c.b16 %v3398, %v3397
      %v3413 = vpack.c.b16 %v3400, %v3399
      %v3414 = vpack.c.b16 %v3402, %v3401
      %v3415 = vpack.c.b16 %v3404, %v3403
      %v3416 = vpack.c.b16 %v3406, %v3405
      %v3417 = vpack.c.b16 %v3408, %v3407
      %v3418 = vpack.c.b16 %v3410, %v3409
      %3427 = vst [vmem:[#allocation2 + $0x180] sm:$0xff] %v3411
      %3428 = vst [vmem:[#allocation2 + $0x188] sm:$0xff] %v3412
      %3429 = vst [vmem:[#allocation2 + $0x190] sm:$0xff] %v3413
      %3430 = vst [vmem:[#allocation2 + $0x198] sm:$0xff] %v3414
      %3431 = vst [vmem:[#allocation2 + $0x1a0] sm:$0xff] %v3415
      %3432 = vst [vmem:[#allocation2 + $0x1a8] sm:$0xff] %v3416
      %3433 = vst [vmem:[#allocation2 + $0x1b0] sm:$0xff] %v3417
      %3434 = vst [vmem:[#allocation2 + $0x1b8] sm:$0xff] %v3418
      %v3435 = vld [vmem:[#allocation2] sm:$0xff]
      %v3436 = vld [vmem:[#allocation2 + $0x8] sm:$0xff]
      %v3437 = vld [vmem:[#allocation2 + $0x10] sm:$0xff]
      %v3438 = vld [vmem:[#allocation2 + $0x18] sm:$0xff]
      %v3439 = vld [vmem:[#allocation2 + $0x20] sm:$0xff]
      %v3440 = vld [vmem:[#allocation2 + $0x28] sm:$0xff]
      %v3441 = vld [vmem:[#allocation2 + $0x30] sm:$0xff]
      %v3442 = vld [vmem:[#allocation2 + $0x38] sm:$0xff]
      %v3443 = vld [vmem:[#allocation2 + $0x40] sm:$0xff]
      %v3444 = vld [vmem:[#allocation2 + $0x48] sm:$0xff]
      %v3445 = vld [vmem:[#allocation2 + $0x50] sm:$0xff]
      %v3446 = vld [vmem:[#allocation2 + $0x58] sm:$0xff]
      %v3447 = vld [vmem:[#allocation2 + $0x60] sm:$0xff]
      %v3448 = vld [vmem:[#allocation2 + $0x68] sm:$0xff]
      %v3449 = vld [vmem:[#allocation2 + $0x70] sm:$0xff]
      %v3450 = vld [vmem:[#allocation2 + $0x78] sm:$0xff]
      %v3451 = vld [vmem:[#allocation2 + $0x80] sm:$0xff]
      %v3452 = vld [vmem:[#allocation2 + $0x88] sm:$0xff]
      %v3453 = vld [vmem:[#allocation2 + $0x90] sm:$0xff]
      %v3454 = vld [vmem:[#allocation2 + $0x98] sm:$0xff]
      %v3455 = vld [vmem:[#allocation2 + $0xa0] sm:$0xff]
      %v3456 = vld [vmem:[#allocation2 + $0xa8] sm:$0xff]
      %v3457 = vld [vmem:[#allocation2 + $0xb0] sm:$0xff]
      %v3458 = vld [vmem:[#allocation2 + $0xb8] sm:$0xff]
      %v3459 = vld [vmem:[#allocation2 + $0xc0] sm:$0xff]
      %v3460 = vld [vmem:[#allocation2 + $0xc8] sm:$0xff]
      %v3461 = vld [vmem:[#allocation2 + $0xd0] sm:$0xff]
      %v3462 = vld [vmem:[#allocation2 + $0xd8] sm:$0xff]
      %v3463 = vld [vmem:[#allocation2 + $0xe0] sm:$0xff]
      %v3464 = vld [vmem:[#allocation2 + $0xe8] sm:$0xff]
      %v3465 = vld [vmem:[#allocation2 + $0xf0] sm:$0xff]
      %v3466 = vld [vmem:[#allocation2 + $0xf8] sm:$0xff]
      %v3467 = vld [vmem:[#allocation2 + $0x100] sm:$0xff]
      %v3468 = vld [vmem:[#allocation2 + $0x108] sm:$0xff]
      %v3469 = vld [vmem:[#allocation2 + $0x110] sm:$0xff]
      %v3470 = vld [vmem:[#allocation2 + $0x118] sm:$0xff]
      %v3471 = vld [vmem:[#allocation2 + $0x120] sm:$0xff]
      %v3472 = vld [vmem:[#allocation2 + $0x128] sm:$0xff]
      %v3473 = vld [vmem:[#allocation2 + $0x130] sm:$0xff]
      %v3474 = vld [vmem:[#allocation2 + $0x138] sm:$0xff]
      %v3475 = vld [vmem:[#allocation2 + $0x140] sm:$0xff]
      %v3476 = vld [vmem:[#allocation2 + $0x148] sm:$0xff]
      %v3477 = vld [vmem:[#allocation2 + $0x150] sm:$0xff]
      %v3478 = vld [vmem:[#allocation2 + $0x158] sm:$0xff]
      %v3479 = vld [vmem:[#allocation2 + $0x160] sm:$0xff]
      %v3480 = vld [vmem:[#allocation2 + $0x168] sm:$0xff]
      %v3481 = vld [vmem:[#allocation2 + $0x170] sm:$0xff]
      %v3482 = vld [vmem:[#allocation2 + $0x178] sm:$0xff]
      %v3483 = vld [vmem:[#allocation2 + $0x180] sm:$0xff]
      %v3484 = vld [vmem:[#allocation2 + $0x188] sm:$0xff]
      %v3485 = vld [vmem:[#allocation2 + $0x190] sm:$0xff]
      %v3486 = vld [vmem:[#allocation2 + $0x198] sm:$0xff]
      %v3487 = vld [vmem:[#allocation2 + $0x1a0] sm:$0xff]
      %v3488 = vld [vmem:[#allocation2 + $0x1a8] sm:$0xff]
      %v3489 = vld [vmem:[#allocation2 + $0x1b0] sm:$0xff]
      %v3490 = vld [vmem:[#allocation2 + $0x1b8] sm:$0xff]
      %3491 = vrot.lane.b32.xlu0 %v2721, 127
      %v3492 = vpop.permute.xlu0 %3491
      %3493 = vrot.lane.b32.xlu0 %v2722, 127
      %v3494 = vpop.permute.xlu0 %3493
      %3495 = vrot.lane.b32.xlu0 %v2723, 127
      %v3496 = vpop.permute.xlu0 %3495
      %3497 = vrot.lane.b32.xlu0 %v2724, 127
      %v3498 = vpop.permute.xlu0 %3497
      %3499 = vrot.lane.b32.xlu0 %v2725, 127
      %v3500 = vpop.permute.xlu0 %3499
      %3501 = vrot.lane.b32.xlu0 %v2726, 127
      %v3502 = vpop.permute.xlu0 %3501
      %3503 = vrot.lane.b32.xlu0 %v2727, 127
      %v3504 = vpop.permute.xlu0 %3503
      %3505 = vrot.lane.b32.xlu0 %v2728, 127
      %v3506 = vpop.permute.xlu0 %3505
      %v3507 = vsel %vm1001, %v3504, %v3506
      %v3508 = vsel %vm1001, %v3502, %v3504
      %v3509 = vsel %vm1001, %v3500, %v3502
      %v3510 = vsel %vm1001, %v3498, %v3500
      %v3511 = vsel %vm1001, %v3496, %v3498
      %v3512 = vsel %vm1001, %v3494, %v3496
      %v3513 = vsel %vm1001, %v3492, %v3494
      %v3514 = vsel %vm1001, %v3506, %v3492
      %3515 = vrot.lane.b32.xlu0 %v2721, 119
      %v3516 = vpop.permute.xlu0 %3515
      %3517 = vrot.lane.b32.xlu0 %v2722, 119
      %v3518 = vpop.permute.xlu0 %3517
      %3519 = vrot.lane.b32.xlu0 %v2723, 119
      %v3520 = vpop.permute.xlu0 %3519
      %3521 = vrot.lane.b32.xlu0 %v2724, 119
      %v3522 = vpop.permute.xlu0 %3521
      %3523 = vrot.lane.b32.xlu0 %v2725, 119
      %v3524 = vpop.permute.xlu0 %3523
      %3525 = vrot.lane.b32.xlu0 %v2726, 119
      %v3526 = vpop.permute.xlu0 %3525
      %3527 = vrot.lane.b32.xlu0 %v2727, 119
      %v3528 = vpop.permute.xlu0 %3527
      %3529 = vrot.lane.b32.xlu0 %v2728, 119
      %v3530 = vpop.permute.xlu0 %3529
      %v3531 = vsel %vm1026, %v3528, %v3530
      %v3532 = vsel %vm1026, %v3526, %v3528
      %v3533 = vsel %vm1026, %v3524, %v3526
      %v3534 = vsel %vm1026, %v3522, %v3524
      %v3535 = vsel %vm1026, %v3520, %v3522
      %v3536 = vsel %vm1026, %v3518, %v3520
      %v3537 = vsel %vm1026, %v3516, %v3518
      %v3538 = vsel %vm1026, %v3530, %v3516
      %v3539 = vpack.c.bf16 %v3537, %v3513
      %v3540 = vpack.c.bf16 %v3536, %v3512
      %v3541 = vpack.c.bf16 %v3535, %v3511
      %v3542 = vpack.c.bf16 %v3534, %v3510
      %v3543 = vpack.c.bf16 %v3533, %v3509
      %v3544 = vpack.c.bf16 %v3532, %v3508
      %v3545 = vpack.c.bf16 %v3531, %v3507
      %v3546 = vpack.c.bf16 %v3538, %v3514
      %v3555 = vunpack.c.l.b16 %v3539
      %v3556 = vunpack.c.l.b16 %v3540
      %v3557 = vunpack.c.l.b16 %v3541
      %v3558 = vunpack.c.l.b16 %v3542
      %v3559 = vunpack.c.l.b16 %v3543
      %v3560 = vunpack.c.l.b16 %v3544
      %v3561 = vunpack.c.l.b16 %v3545
      %v3562 = vunpack.c.l.b16 %v3546
      %v3563 = vunpack.c.h.b16 %v3539
      %v3564 = vunpack.c.h.b16 %v3540
      %v3565 = vunpack.c.h.b16 %v3541
      %v3566 = vunpack.c.h.b16 %v3542
      %v3567 = vunpack.c.h.b16 %v3543
      %v3568 = vunpack.c.h.b16 %v3544
      %v3569 = vunpack.c.h.b16 %v3545
      %v3570 = vunpack.c.h.b16 %v3546
      %v3571 = vpack.c.b16 %v3556, %v3555
      %v3572 = vpack.c.b16 %v3558, %v3557
      %v3573 = vpack.c.b16 %v3560, %v3559
      %v3574 = vpack.c.b16 %v3562, %v3561
      %v3575 = vpack.c.b16 %v3564, %v3563
      %v3576 = vpack.c.b16 %v3566, %v3565
      %v3577 = vpack.c.b16 %v3568, %v3567
      %v3578 = vpack.c.b16 %v3570, %v3569
      %3587 = vst [vmem:[#allocation2 + $0x200] sm:$0xff] %v3571
      %3588 = vst [vmem:[#allocation2 + $0x208] sm:$0xff] %v3572
      %3589 = vst [vmem:[#allocation2 + $0x210] sm:$0xff] %v3573
      %3590 = vst [vmem:[#allocation2 + $0x218] sm:$0xff] %v3574
      %3591 = vst [vmem:[#allocation2 + $0x220] sm:$0xff] %v3575
      %3592 = vst [vmem:[#allocation2 + $0x228] sm:$0xff] %v3576
      %3593 = vst [vmem:[#allocation2 + $0x230] sm:$0xff] %v3577
      %3594 = vst [vmem:[#allocation2 + $0x238] sm:$0xff] %v3578
      %3595 = vrot.lane.b32.xlu0 %v2721, 118
      %v3596 = vpop.permute.xlu0 %3595
      %3597 = vrot.lane.b32.xlu0 %v2722, 118
      %v3598 = vpop.permute.xlu0 %3597
      %3599 = vrot.lane.b32.xlu0 %v2723, 118
      %v3600 = vpop.permute.xlu0 %3599
      %3601 = vrot.lane.b32.xlu0 %v2724, 118
      %v3602 = vpop.permute.xlu0 %3601
      %3603 = vrot.lane.b32.xlu0 %v2725, 118
      %v3604 = vpop.permute.xlu0 %3603
      %3605 = vrot.lane.b32.xlu0 %v2726, 118
      %v3606 = vpop.permute.xlu0 %3605
      %3607 = vrot.lane.b32.xlu0 %v2727, 118
      %v3608 = vpop.permute.xlu0 %3607
      %3609 = vrot.lane.b32.xlu0 %v2728, 118
      %v3610 = vpop.permute.xlu0 %3609
      %v3611 = vsel %vm1107, %v3608, %v3610
      %v3612 = vsel %vm1107, %v3606, %v3608
      %v3613 = vsel %vm1107, %v3604, %v3606
      %v3614 = vsel %vm1107, %v3602, %v3604
      %v3615 = vsel %vm1107, %v3600, %v3602
      %v3616 = vsel %vm1107, %v3598, %v3600
      %v3617 = vsel %vm1107, %v3596, %v3598
      %v3618 = vsel %vm1107, %v3610, %v3596
      %3619 = vrot.lane.b32.xlu0 %v2721, 117
      %v3620 = vpop.permute.xlu0 %3619
      %3621 = vrot.lane.b32.xlu0 %v2722, 117
      %v3622 = vpop.permute.xlu0 %3621
      %3623 = vrot.lane.b32.xlu0 %v2723, 117
      %v3624 = vpop.permute.xlu0 %3623
      %3625 = vrot.lane.b32.xlu0 %v2724, 117
      %v3626 = vpop.permute.xlu0 %3625
      %3627 = vrot.lane.b32.xlu0 %v2725, 117
      %v3628 = vpop.permute.xlu0 %3627
      %3629 = vrot.lane.b32.xlu0 %v2726, 117
      %v3630 = vpop.permute.xlu0 %3629
      %3631 = vrot.lane.b32.xlu0 %v2727, 117
      %v3632 = vpop.permute.xlu0 %3631
      %3633 = vrot.lane.b32.xlu0 %v2728, 117
      %v3634 = vpop.permute.xlu0 %3633
      %v3635 = vsel %vm1132, %v3632, %v3634
      %v3636 = vsel %vm1132, %v3630, %v3632
      %v3637 = vsel %vm1132, %v3628, %v3630
      %v3638 = vsel %vm1132, %v3626, %v3628
      %v3639 = vsel %vm1132, %v3624, %v3626
      %v3640 = vsel %vm1132, %v3622, %v3624
      %v3641 = vsel %vm1132, %v3620, %v3622
      %v3642 = vsel %vm1132, %v3634, %v3620
      %v3643 = vpack.c.bf16 %v3641, %v3617
      %v3644 = vpack.c.bf16 %v3640, %v3616
      %v3645 = vpack.c.bf16 %v3639, %v3615
      %v3646 = vpack.c.bf16 %v3638, %v3614
      %v3647 = vpack.c.bf16 %v3637, %v3613
      %v3648 = vpack.c.bf16 %v3636, %v3612
      %v3649 = vpack.c.bf16 %v3635, %v3611
      %v3650 = vpack.c.bf16 %v3642, %v3618
      %v3659 = vunpack.c.l.b16 %v3643
      %v3660 = vunpack.c.l.b16 %v3644
      %v3661 = vunpack.c.l.b16 %v3645
      %v3662 = vunpack.c.l.b16 %v3646
      %v3663 = vunpack.c.l.b16 %v3647
      %v3664 = vunpack.c.l.b16 %v3648
      %v3665 = vunpack.c.l.b16 %v3649
      %v3666 = vunpack.c.l.b16 %v3650
      %v3667 = vunpack.c.h.b16 %v3643
      %v3668 = vunpack.c.h.b16 %v3644
      %v3669 = vunpack.c.h.b16 %v3645
      %v3670 = vunpack.c.h.b16 %v3646
      %v3671 = vunpack.c.h.b16 %v3647
      %v3672 = vunpack.c.h.b16 %v3648
      %v3673 = vunpack.c.h.b16 %v3649
      %v3674 = vunpack.c.h.b16 %v3650
      %v3675 = vpack.c.b16 %v3660, %v3659
      %v3676 = vpack.c.b16 %v3662, %v3661
      %v3677 = vpack.c.b16 %v3664, %v3663
      %v3678 = vpack.c.b16 %v3666, %v3665
      %v3679 = vpack.c.b16 %v3668, %v3667
      %v3680 = vpack.c.b16 %v3670, %v3669
      %v3681 = vpack.c.b16 %v3672, %v3671
      %v3682 = vpack.c.b16 %v3674, %v3673
      %3691 = vst [vmem:[#allocation2 + $0x240] sm:$0xff] %v3675
      %3692 = vst [vmem:[#allocation2 + $0x248] sm:$0xff] %v3676
      %3693 = vst [vmem:[#allocation2 + $0x250] sm:$0xff] %v3677
      %3694 = vst [vmem:[#allocation2 + $0x258] sm:$0xff] %v3678
      %3695 = vst [vmem:[#allocation2 + $0x260] sm:$0xff] %v3679
      %3696 = vst [vmem:[#allocation2 + $0x268] sm:$0xff] %v3680
      %3697 = vst [vmem:[#allocation2 + $0x270] sm:$0xff] %v3681
      %3698 = vst [vmem:[#allocation2 + $0x278] sm:$0xff] %v3682
      %3699 = vrot.lane.b32.xlu0 %v2721, 39
      %v3700 = vpop.permute.xlu0 %3699
      %3701 = vrot.lane.b32.xlu0 %v2722, 39
      %v3702 = vpop.permute.xlu0 %3701
      %3703 = vrot.lane.b32.xlu0 %v2723, 39
      %v3704 = vpop.permute.xlu0 %3703
      %3705 = vrot.lane.b32.xlu0 %v2724, 39
      %v3706 = vpop.permute.xlu0 %3705
      %3707 = vrot.lane.b32.xlu0 %v2725, 39
      %v3708 = vpop.permute.xlu0 %3707
      %3709 = vrot.lane.b32.xlu0 %v2726, 39
      %v3710 = vpop.permute.xlu0 %3709
      %3711 = vrot.lane.b32.xlu0 %v2727, 39
      %v3712 = vpop.permute.xlu0 %3711
      %3713 = vrot.lane.b32.xlu0 %v2728, 39
      %v3714 = vpop.permute.xlu0 %3713
      %v3715 = vsel %vm1213, %v3712, %v3714
      %v3716 = vsel %vm1213, %v3710, %v3712
      %v3717 = vsel %vm1213, %v3708, %v3710
      %v3718 = vsel %vm1213, %v3706, %v3708
      %v3719 = vsel %vm1213, %v3704, %v3706
      %v3720 = vsel %vm1213, %v3702, %v3704
      %v3721 = vsel %vm1213, %v3700, %v3702
      %v3722 = vsel %vm1213, %v3714, %v3700
      %3723 = vrot.lane.b32.xlu0 %v2721, 38
      %v3724 = vpop.permute.xlu0 %3723
      %3725 = vrot.lane.b32.xlu0 %v2722, 38
      %v3726 = vpop.permute.xlu0 %3725
      %3727 = vrot.lane.b32.xlu0 %v2723, 38
      %v3728 = vpop.permute.xlu0 %3727
      %3729 = vrot.lane.b32.xlu0 %v2724, 38
      %v3730 = vpop.permute.xlu0 %3729
      %3731 = vrot.lane.b32.xlu0 %v2725, 38
      %v3732 = vpop.permute.xlu0 %3731
      %3733 = vrot.lane.b32.xlu0 %v2726, 38
      %v3734 = vpop.permute.xlu0 %3733
      %3735 = vrot.lane.b32.xlu0 %v2727, 38
      %v3736 = vpop.permute.xlu0 %3735
      %3737 = vrot.lane.b32.xlu0 %v2728, 38
      %v3738 = vpop.permute.xlu0 %3737
      %v3739 = vsel %vm1238, %v3736, %v3738
      %v3740 = vsel %vm1238, %v3734, %v3736
      %v3741 = vsel %vm1238, %v3732, %v3734
      %v3742 = vsel %vm1238, %v3730, %v3732
      %v3743 = vsel %vm1238, %v3728, %v3730
      %v3744 = vsel %vm1238, %v3726, %v3728
      %v3745 = vsel %vm1238, %v3724, %v3726
      %v3746 = vsel %vm1238, %v3738, %v3724
      %v3747 = vpack.c.bf16 %v3745, %v3721
      %v3748 = vpack.c.bf16 %v3744, %v3720
      %v3749 = vpack.c.bf16 %v3743, %v3719
      %v3750 = vpack.c.bf16 %v3742, %v3718
      %v3751 = vpack.c.bf16 %v3741, %v3717
      %v3752 = vpack.c.bf16 %v3740, %v3716
      %v3753 = vpack.c.bf16 %v3739, %v3715
      %v3754 = vpack.c.bf16 %v3746, %v3722
      %v3763 = vunpack.c.l.b16 %v3747
      %v3764 = vunpack.c.l.b16 %v3748
      %v3765 = vunpack.c.l.b16 %v3749
      %v3766 = vunpack.c.l.b16 %v3750
      %v3767 = vunpack.c.l.b16 %v3751
      %v3768 = vunpack.c.l.b16 %v3752
      %v3769 = vunpack.c.l.b16 %v3753
      %v3770 = vunpack.c.l.b16 %v3754
      %v3771 = vunpack.c.h.b16 %v3747
      %v3772 = vunpack.c.h.b16 %v3748
      %v3773 = vunpack.c.h.b16 %v3749
      %v3774 = vunpack.c.h.b16 %v3750
      %v3775 = vunpack.c.h.b16 %v3751
      %v3776 = vunpack.c.h.b16 %v3752
      %v3777 = vunpack.c.h.b16 %v3753
      %v3778 = vunpack.c.h.b16 %v3754
      %v3779 = vpack.c.b16 %v3764, %v3763
      %v3780 = vpack.c.b16 %v3766, %v3765
      %v3781 = vpack.c.b16 %v3768, %v3767
      %v3782 = vpack.c.b16 %v3770, %v3769
      %v3783 = vpack.c.b16 %v3772, %v3771
      %v3784 = vpack.c.b16 %v3774, %v3773
      %v3785 = vpack.c.b16 %v3776, %v3775
      %v3786 = vpack.c.b16 %v3778, %v3777
      %3795 = vst [vmem:[#allocation2 + $0x280] sm:$0xff] %v3779
      %3796 = vst [vmem:[#allocation2 + $0x288] sm:$0xff] %v3780
      %3797 = vst [vmem:[#allocation2 + $0x290] sm:$0xff] %v3781
      %3798 = vst [vmem:[#allocation2 + $0x298] sm:$0xff] %v3782
      %3799 = vst [vmem:[#allocation2 + $0x2a0] sm:$0xff] %v3783
      %3800 = vst [vmem:[#allocation2 + $0x2a8] sm:$0xff] %v3784
      %3801 = vst [vmem:[#allocation2 + $0x2b0] sm:$0xff] %v3785
      %3802 = vst [vmem:[#allocation2 + $0x2b8] sm:$0xff] %v3786
      %3803 = vrot.lane.b32.xlu0 %v2721, 37
      %v3804 = vpop.permute.xlu0 %3803
      %3805 = vrot.lane.b32.xlu0 %v2722, 37
      %v3806 = vpop.permute.xlu0 %3805
      %3807 = vrot.lane.b32.xlu0 %v2723, 37
      %v3808 = vpop.permute.xlu0 %3807
      %3809 = vrot.lane.b32.xlu0 %v2724, 37
      %v3810 = vpop.permute.xlu0 %3809
      %3811 = vrot.lane.b32.xlu0 %v2725, 37
      %v3812 = vpop.permute.xlu0 %3811
      %3813 = vrot.lane.b32.xlu0 %v2726, 37
      %v3814 = vpop.permute.xlu0 %3813
      %3815 = vrot.lane.b32.xlu0 %v2727, 37
      %v3816 = vpop.permute.xlu0 %3815
      %3817 = vrot.lane.b32.xlu0 %v2728, 37
      %v3818 = vpop.permute.xlu0 %3817
      %v3819 = vsel %vm1319, %v3816, %v3818
      %v3820 = vsel %vm1319, %v3814, %v3816
      %v3821 = vsel %vm1319, %v3812, %v3814
      %v3822 = vsel %vm1319, %v3810, %v3812
      %v3823 = vsel %vm1319, %v3808, %v3810
      %v3824 = vsel %vm1319, %v3806, %v3808
      %v3825 = vsel %vm1319, %v3804, %v3806
      %v3826 = vsel %vm1319, %v3818, %v3804
      %3827 = vrot.lane.b32.xlu0 %v2721, 29
      %v3828 = vpop.permute.xlu0 %3827
      %3829 = vrot.lane.b32.xlu0 %v2722, 29
      %v3830 = vpop.permute.xlu0 %3829
      %3831 = vrot.lane.b32.xlu0 %v2723, 29
      %v3832 = vpop.permute.xlu0 %3831
      %3833 = vrot.lane.b32.xlu0 %v2724, 29
      %v3834 = vpop.permute.xlu0 %3833
      %3835 = vrot.lane.b32.xlu0 %v2725, 29
      %v3836 = vpop.permute.xlu0 %3835
      %3837 = vrot.lane.b32.xlu0 %v2726, 29
      %v3838 = vpop.permute.xlu0 %3837
      %3839 = vrot.lane.b32.xlu0 %v2727, 29
      %v3840 = vpop.permute.xlu0 %3839
      %3841 = vrot.lane.b32.xlu0 %v2728, 29
      %v3842 = vpop.permute.xlu0 %3841
      %v3843 = vsel %vm1344, %v3840, %v3842
      %v3844 = vsel %vm1344, %v3838, %v3840
      %v3845 = vsel %vm1344, %v3836, %v3838
      %v3846 = vsel %vm1344, %v3834, %v3836
      %v3847 = vsel %vm1344, %v3832, %v3834
      %v3848 = vsel %vm1344, %v3830, %v3832
      %v3849 = vsel %vm1344, %v3828, %v3830
      %v3850 = vsel %vm1344, %v3842, %v3828
      %v3851 = vpack.c.bf16 %v3849, %v3825
      %v3852 = vpack.c.bf16 %v3848, %v3824
      %v3853 = vpack.c.bf16 %v3847, %v3823
      %v3854 = vpack.c.bf16 %v3846, %v3822
      %v3855 = vpack.c.bf16 %v3845, %v3821
      %v3856 = vpack.c.bf16 %v3844, %v3820
      %v3857 = vpack.c.bf16 %v3843, %v3819
      %v3858 = vpack.c.bf16 %v3850, %v3826
      %v3867 = vunpack.c.l.b16 %v3851
      %v3868 = vunpack.c.l.b16 %v3852
      %v3869 = vunpack.c.l.b16 %v3853
      %v3870 = vunpack.c.l.b16 %v3854
      %v3871 = vunpack.c.l.b16 %v3855
      %v3872 = vunpack.c.l.b16 %v3856
      %v3873 = vunpack.c.l.b16 %v3857
      %v3874 = vunpack.c.l.b16 %v3858
      %v3875 = vunpack.c.h.b16 %v3851
      %v3876 = vunpack.c.h.b16 %v3852
      %v3877 = vunpack.c.h.b16 %v3853
      %v3878 = vunpack.c.h.b16 %v3854
      %v3879 = vunpack.c.h.b16 %v3855
      %v3880 = vunpack.c.h.b16 %v3856
      %v3881 = vunpack.c.h.b16 %v3857
      %v3882 = vunpack.c.h.b16 %v3858
      %v3883 = vpack.c.b16 %v3868, %v3867
      %v3884 = vpack.c.b16 %v3870, %v3869
      %v3885 = vpack.c.b16 %v3872, %v3871
      %v3886 = vpack.c.b16 %v3874, %v3873
      %v3887 = vpack.c.b16 %v3876, %v3875
      %v3888 = vpack.c.b16 %v3878, %v3877
      %v3889 = vpack.c.b16 %v3880, %v3879
      %v3890 = vpack.c.b16 %v3882, %v3881
      %3899 = vst [vmem:[#allocation2 + $0x2c0] sm:$0xff] %v3883
      %3900 = vst [vmem:[#allocation2 + $0x2c8] sm:$0xff] %v3884
      %3901 = vst [vmem:[#allocation2 + $0x2d0] sm:$0xff] %v3885
      %3902 = vst [vmem:[#allocation2 + $0x2d8] sm:$0xff] %v3886
      %3903 = vst [vmem:[#allocation2 + $0x2e0] sm:$0xff] %v3887
      %3904 = vst [vmem:[#allocation2 + $0x2e8] sm:$0xff] %v3888
      %3905 = vst [vmem:[#allocation2 + $0x2f0] sm:$0xff] %v3889
      %3906 = vst [vmem:[#allocation2 + $0x2f8] sm:$0xff] %v3890
      %3907 = vrot.lane.b32.xlu0 %v2721, 28
      %v3908 = vpop.permute.xlu0 %3907
      %3909 = vrot.lane.b32.xlu0 %v2722, 28
      %v3910 = vpop.permute.xlu0 %3909
      %3911 = vrot.lane.b32.xlu0 %v2723, 28
      %v3912 = vpop.permute.xlu0 %3911
      %3913 = vrot.lane.b32.xlu0 %v2724, 28
      %v3914 = vpop.permute.xlu0 %3913
      %3915 = vrot.lane.b32.xlu0 %v2725, 28
      %v3916 = vpop.permute.xlu0 %3915
      %3917 = vrot.lane.b32.xlu0 %v2726, 28
      %v3918 = vpop.permute.xlu0 %3917
      %3919 = vrot.lane.b32.xlu0 %v2727, 28
      %v3920 = vpop.permute.xlu0 %3919
      %3921 = vrot.lane.b32.xlu0 %v2728, 28
      %v3922 = vpop.permute.xlu0 %3921
      %v3923 = vsel %vm1425, %v3920, %v3922
      %v3924 = vsel %vm1425, %v3918, %v3920
      %v3925 = vsel %vm1425, %v3916, %v3918
      %v3926 = vsel %vm1425, %v3914, %v3916
      %v3927 = vsel %vm1425, %v3912, %v3914
      %v3928 = vsel %vm1425, %v3910, %v3912
      %v3929 = vsel %vm1425, %v3908, %v3910
      %v3930 = vsel %vm1425, %v3922, %v3908
      %3931 = vrot.lane.b32.xlu0 %v2721, 27
      %v3932 = vpop.permute.xlu0 %3931
      %3933 = vrot.lane.b32.xlu0 %v2722, 27
      %v3934 = vpop.permute.xlu0 %3933
      %3935 = vrot.lane.b32.xlu0 %v2723, 27
      %v3936 = vpop.permute.xlu0 %3935
      %3937 = vrot.lane.b32.xlu0 %v2724, 27
      %v3938 = vpop.permute.xlu0 %3937
      %3939 = vrot.lane.b32.xlu0 %v2725, 27
      %v3940 = vpop.permute.xlu0 %3939
      %3941 = vrot.lane.b32.xlu0 %v2726, 27
      %v3942 = vpop.permute.xlu0 %3941
      %3943 = vrot.lane.b32.xlu0 %v2727, 27
      %v3944 = vpop.permute.xlu0 %3943
      %3945 = vrot.lane.b32.xlu0 %v2728, 27
      %v3946 = vpop.permute.xlu0 %3945
      %v3947 = vsel %vm1450, %v3944, %v3946
      %v3948 = vsel %vm1450, %v3942, %v3944
      %v3949 = vsel %vm1450, %v3940, %v3942
      %v3950 = vsel %vm1450, %v3938, %v3940
      %v3951 = vsel %vm1450, %v3936, %v3938
      %v3952 = vsel %vm1450, %v3934, %v3936
      %v3953 = vsel %vm1450, %v3932, %v3934
      %v3954 = vsel %vm1450, %v3946, %v3932
      %v3955 = vpack.c.bf16 %v3953, %v3929
      %v3956 = vpack.c.bf16 %v3952, %v3928
      %v3957 = vpack.c.bf16 %v3951, %v3927
      %v3958 = vpack.c.bf16 %v3950, %v3926
      %v3959 = vpack.c.bf16 %v3949, %v3925
      %v3960 = vpack.c.bf16 %v3948, %v3924
      %v3961 = vpack.c.bf16 %v3947, %v3923
      %v3962 = vpack.c.bf16 %v3954, %v3930
      %v3971 = vunpack.c.l.b16 %v3955
      %v3972 = vunpack.c.l.b16 %v3956
      %v3973 = vunpack.c.l.b16 %v3957
      %v3974 = vunpack.c.l.b16 %v3958
      %v3975 = vunpack.c.l.b16 %v3959
      %v3976 = vunpack.c.l.b16 %v3960
      %v3977 = vunpack.c.l.b16 %v3961
      %v3978 = vunpack.c.l.b16 %v3962
      %v3979 = vunpack.c.h.b16 %v3955
      %v3980 = vunpack.c.h.b16 %v3956
      %v3981 = vunpack.c.h.b16 %v3957
      %v3982 = vunpack.c.h.b16 %v3958
      %v3983 = vunpack.c.h.b16 %v3959
      %v3984 = vunpack.c.h.b16 %v3960
      %v3985 = vunpack.c.h.b16 %v3961
      %v3986 = vunpack.c.h.b16 %v3962
      %v3987 = vpack.c.b16 %v3972, %v3971
      %v3988 = vpack.c.b16 %v3974, %v3973
      %v3989 = vpack.c.b16 %v3976, %v3975
      %v3990 = vpack.c.b16 %v3978, %v3977
      %v3991 = vpack.c.b16 %v3980, %v3979
      %v3992 = vpack.c.b16 %v3982, %v3981
      %v3993 = vpack.c.b16 %v3984, %v3983
      %v3994 = vpack.c.b16 %v3986, %v3985
      %4003 = vst [vmem:[#allocation2 + $0x300] sm:$0xff] %v3987
      %4004 = vst [vmem:[#allocation2 + $0x308] sm:$0xff] %v3988
      %4005 = vst [vmem:[#allocation2 + $0x310] sm:$0xff] %v3989
      %4006 = vst [vmem:[#allocation2 + $0x318] sm:$0xff] %v3990
      %4007 = vst [vmem:[#allocation2 + $0x320] sm:$0xff] %v3991
      %4008 = vst [vmem:[#allocation2 + $0x328] sm:$0xff] %v3992
      %4009 = vst [vmem:[#allocation2 + $0x330] sm:$0xff] %v3993
      %4010 = vst [vmem:[#allocation2 + $0x338] sm:$0xff] %v3994
      %4011 = vrot.lane.b32.xlu0 %v2721, 19
      %v4012 = vpop.permute.xlu0 %4011
      %4013 = vrot.lane.b32.xlu0 %v2722, 19
      %v4014 = vpop.permute.xlu0 %4013
      %4015 = vrot.lane.b32.xlu0 %v2723, 19
      %v4016 = vpop.permute.xlu0 %4015
      %4017 = vrot.lane.b32.xlu0 %v2724, 19
      %v4018 = vpop.permute.xlu0 %4017
      %4019 = vrot.lane.b32.xlu0 %v2725, 19
      %v4020 = vpop.permute.xlu0 %4019
      %4021 = vrot.lane.b32.xlu0 %v2726, 19
      %v4022 = vpop.permute.xlu0 %4021
      %4023 = vrot.lane.b32.xlu0 %v2727, 19
      %v4024 = vpop.permute.xlu0 %4023
      %4025 = vrot.lane.b32.xlu0 %v2728, 19
      %v4026 = vpop.permute.xlu0 %4025
      %v4027 = vsel %vm1531, %v4024, %v4026
      %v4028 = vsel %vm1531, %v4022, %v4024
      %v4029 = vsel %vm1531, %v4020, %v4022
      %v4030 = vsel %vm1531, %v4018, %v4020
      %v4031 = vsel %vm1531, %v4016, %v4018
      %v4032 = vsel %vm1531, %v4014, %v4016
      %v4033 = vsel %vm1531, %v4012, %v4014
      %v4034 = vsel %vm1531, %v4026, %v4012
      %4035 = vrot.lane.b32.xlu0 %v2721, 18
      %v4036 = vpop.permute.xlu0 %4035
      %4037 = vrot.lane.b32.xlu0 %v2722, 18
      %v4038 = vpop.permute.xlu0 %4037
      %4039 = vrot.lane.b32.xlu0 %v2723, 18
      %v4040 = vpop.permute.xlu0 %4039
      %4041 = vrot.lane.b32.xlu0 %v2724, 18
      %v4042 = vpop.permute.xlu0 %4041
      %4043 = vrot.lane.b32.xlu0 %v2725, 18
      %v4044 = vpop.permute.xlu0 %4043
      %4045 = vrot.lane.b32.xlu0 %v2726, 18
      %v4046 = vpop.permute.xlu0 %4045
      %4047 = vrot.lane.b32.xlu0 %v2727, 18
      %v4048 = vpop.permute.xlu0 %4047
      %4049 = vrot.lane.b32.xlu0 %v2728, 18
      %v4050 = vpop.permute.xlu0 %4049
      %v4051 = vsel %vm1556, %v4048, %v4050
      %v4052 = vsel %vm1556, %v4046, %v4048
      %v4053 = vsel %vm1556, %v4044, %v4046
      %v4054 = vsel %vm1556, %v4042, %v4044
      %v4055 = vsel %vm1556, %v4040, %v4042
      %v4056 = vsel %vm1556, %v4038, %v4040
      %v4057 = vsel %vm1556, %v4036, %v4038
      %v4058 = vsel %vm1556, %v4050, %v4036
      %v4059 = vpack.c.bf16 %v4057, %v4033
      %v4060 = vpack.c.bf16 %v4056, %v4032
      %v4061 = vpack.c.bf16 %v4055, %v4031
      %v4062 = vpack.c.bf16 %v4054, %v4030
      %v4063 = vpack.c.bf16 %v4053, %v4029
      %v4064 = vpack.c.bf16 %v4052, %v4028
      %v4065 = vpack.c.bf16 %v4051, %v4027
      %v4066 = vpack.c.bf16 %v4058, %v4034
      %v4075 = vunpack.c.l.b16 %v4059
      %v4076 = vunpack.c.l.b16 %v4060
      %v4077 = vunpack.c.l.b16 %v4061
      %v4078 = vunpack.c.l.b16 %v4062
      %v4079 = vunpack.c.l.b16 %v4063
      %v4080 = vunpack.c.l.b16 %v4064
      %v4081 = vunpack.c.l.b16 %v4065
      %v4082 = vunpack.c.l.b16 %v4066
      %v4083 = vunpack.c.h.b16 %v4059
      %v4084 = vunpack.c.h.b16 %v4060
      %v4085 = vunpack.c.h.b16 %v4061
      %v4086 = vunpack.c.h.b16 %v4062
      %v4087 = vunpack.c.h.b16 %v4063
      %v4088 = vunpack.c.h.b16 %v4064
      %v4089 = vunpack.c.h.b16 %v4065
      %v4090 = vunpack.c.h.b16 %v4066
      %v4091 = vpack.c.b16 %v4076, %v4075
      %v4092 = vpack.c.b16 %v4078, %v4077
      %v4093 = vpack.c.b16 %v4080, %v4079
      %v4094 = vpack.c.b16 %v4082, %v4081
      %v4095 = vpack.c.b16 %v4084, %v4083
      %v4096 = vpack.c.b16 %v4086, %v4085
      %v4097 = vpack.c.b16 %v4088, %v4087
      %v4098 = vpack.c.b16 %v4090, %v4089
      %4107 = vst [vmem:[#allocation2 + $0x340] sm:$0xff] %v4091
      %4108 = vst [vmem:[#allocation2 + $0x348] sm:$0xff] %v4092
      %4109 = vst [vmem:[#allocation2 + $0x350] sm:$0xff] %v4093
      %4110 = vst [vmem:[#allocation2 + $0x358] sm:$0xff] %v4094
      %4111 = vst [vmem:[#allocation2 + $0x360] sm:$0xff] %v4095
      %4112 = vst [vmem:[#allocation2 + $0x368] sm:$0xff] %v4096
      %4113 = vst [vmem:[#allocation2 + $0x370] sm:$0xff] %v4097
      %4114 = vst [vmem:[#allocation2 + $0x378] sm:$0xff] %v4098
      %4115 = vrot.lane.b32.xlu0 %v2721, 17
      %v4116 = vpop.permute.xlu0 %4115
      %4117 = vrot.lane.b32.xlu0 %v2722, 17
      %v4118 = vpop.permute.xlu0 %4117
      %4119 = vrot.lane.b32.xlu0 %v2723, 17
      %v4120 = vpop.permute.xlu0 %4119
      %4121 = vrot.lane.b32.xlu0 %v2724, 17
      %v4122 = vpop.permute.xlu0 %4121
      %4123 = vrot.lane.b32.xlu0 %v2725, 17
      %v4124 = vpop.permute.xlu0 %4123
      %4125 = vrot.lane.b32.xlu0 %v2726, 17
      %v4126 = vpop.permute.xlu0 %4125
      %4127 = vrot.lane.b32.xlu0 %v2727, 17
      %v4128 = vpop.permute.xlu0 %4127
      %4129 = vrot.lane.b32.xlu0 %v2728, 17
      %v4130 = vpop.permute.xlu0 %4129
      %v4131 = vsel %vm1637, %v4128, %v4130
      %v4132 = vsel %vm1637, %v4126, %v4128
      %v4133 = vsel %vm1637, %v4124, %v4126
      %v4134 = vsel %vm1637, %v4122, %v4124
      %v4135 = vsel %vm1637, %v4120, %v4122
      %v4136 = vsel %vm1637, %v4118, %v4120
      %v4137 = vsel %vm1637, %v4116, %v4118
      %v4138 = vsel %vm1637, %v4130, %v4116
      %v4139 = vpack.c.bf16 %v4137, %v4137
      %v4140 = vpack.c.bf16 %v4136, %v4136
      %v4141 = vpack.c.bf16 %v4135, %v4135
      %v4142 = vpack.c.bf16 %v4134, %v4134
      %v4143 = vpack.c.bf16 %v4133, %v4133
      %v4144 = vpack.c.bf16 %v4132, %v4132
      %v4145 = vpack.c.bf16 %v4131, %v4131
      %v4146 = vpack.c.bf16 %v4138, %v4138
      %v4155 = vunpack.c.l.b16 %v4139
      %v4156 = vunpack.c.l.b16 %v4140
      %v4157 = vunpack.c.l.b16 %v4141
      %v4158 = vunpack.c.l.b16 %v4142
      %v4159 = vunpack.c.l.b16 %v4143
      %v4160 = vunpack.c.l.b16 %v4144
      %v4161 = vunpack.c.l.b16 %v4145
      %v4162 = vunpack.c.l.b16 %v4146
      %v4163 = vunpack.c.h.b16 %v4139
      %v4164 = vunpack.c.h.b16 %v4140
      %v4165 = vunpack.c.h.b16 %v4141
      %v4166 = vunpack.c.h.b16 %v4142
      %v4167 = vunpack.c.h.b16 %v4143
      %v4168 = vunpack.c.h.b16 %v4144
      %v4169 = vunpack.c.h.b16 %v4145
      %v4170 = vunpack.c.h.b16 %v4146
      %v4171 = vpack.c.b16 %v4156, %v4155
      %v4172 = vpack.c.b16 %v4158, %v4157
      %v4173 = vpack.c.b16 %v4160, %v4159
      %v4174 = vpack.c.b16 %v4162, %v4161
      %v4175 = vpack.c.b16 %v4164, %v4163
      %v4176 = vpack.c.b16 %v4166, %v4165
      %v4177 = vpack.c.b16 %v4168, %v4167
      %v4178 = vpack.c.b16 %v4170, %v4169
      %4187 = vst [vmem:[#allocation2 + $0x380] sm:$0xff] %v4171
      %4188 = vst [vmem:[#allocation2 + $0x388] sm:$0xff] %v4172
      %4189 = vst [vmem:[#allocation2 + $0x390] sm:$0xff] %v4173
      %4190 = vst [vmem:[#allocation2 + $0x398] sm:$0xff] %v4174
      %4191 = vst [vmem:[#allocation2 + $0x3a0] sm:$0xff] %v4175
      %4192 = vst [vmem:[#allocation2 + $0x3a8] sm:$0xff] %v4176
      %4193 = vst [vmem:[#allocation2 + $0x3b0] sm:$0xff] %v4177
      %4194 = vst [vmem:[#allocation2 + $0x3b8] sm:$0xff] %v4178
      %v4195 = vld [vmem:[#allocation2 + $0x200] sm:$0xff]
      %v4196 = vld [vmem:[#allocation2 + $0x208] sm:$0xff]
      %v4197 = vld [vmem:[#allocation2 + $0x210] sm:$0xff]
      %v4198 = vld [vmem:[#allocation2 + $0x218] sm:$0xff]
      %v4199 = vld [vmem:[#allocation2 + $0x220] sm:$0xff]
      %v4200 = vld [vmem:[#allocation2 + $0x228] sm:$0xff]
      %v4201 = vld [vmem:[#allocation2 + $0x230] sm:$0xff]
      %v4202 = vld [vmem:[#allocation2 + $0x238] sm:$0xff]
      %v4203 = vld [vmem:[#allocation2 + $0x240] sm:$0xff]
      %v4204 = vld [vmem:[#allocation2 + $0x248] sm:$0xff]
      %v4205 = vld [vmem:[#allocation2 + $0x250] sm:$0xff]
      %v4206 = vld [vmem:[#allocation2 + $0x258] sm:$0xff]
      %v4207 = vld [vmem:[#allocation2 + $0x260] sm:$0xff]
      %v4208 = vld [vmem:[#allocation2 + $0x268] sm:$0xff]
      %v4209 = vld [vmem:[#allocation2 + $0x270] sm:$0xff]
      %v4210 = vld [vmem:[#allocation2 + $0x278] sm:$0xff]
      %v4211 = vld [vmem:[#allocation2 + $0x280] sm:$0xff]
      %v4212 = vld [vmem:[#allocation2 + $0x288] sm:$0xff]
      %v4213 = vld [vmem:[#allocation2 + $0x290] sm:$0xff]
      %v4214 = vld [vmem:[#allocation2 + $0x298] sm:$0xff]
      %v4215 = vld [vmem:[#allocation2 + $0x2a0] sm:$0xff]
      %v4216 = vld [vmem:[#allocation2 + $0x2a8] sm:$0xff]
      %v4217 = vld [vmem:[#allocation2 + $0x2b0] sm:$0xff]
      %v4218 = vld [vmem:[#allocation2 + $0x2b8] sm:$0xff]
      %v4219 = vld [vmem:[#allocation2 + $0x2c0] sm:$0xff]
      %v4220 = vld [vmem:[#allocation2 + $0x2c8] sm:$0xff]
      %v4221 = vld [vmem:[#allocation2 + $0x2d0] sm:$0xff]
      %v4222 = vld [vmem:[#allocation2 + $0x2d8] sm:$0xff]
      %v4223 = vld [vmem:[#allocation2 + $0x2e0] sm:$0xff]
      %v4224 = vld [vmem:[#allocation2 + $0x2e8] sm:$0xff]
      %v4225 = vld [vmem:[#allocation2 + $0x2f0] sm:$0xff]
      %v4226 = vld [vmem:[#allocation2 + $0x2f8] sm:$0xff]
      %v4227 = vld [vmem:[#allocation2 + $0x300] sm:$0xff]
      %v4228 = vld [vmem:[#allocation2 + $0x308] sm:$0xff]
      %v4229 = vld [vmem:[#allocation2 + $0x310] sm:$0xff]
      %v4230 = vld [vmem:[#allocation2 + $0x318] sm:$0xff]
      %v4231 = vld [vmem:[#allocation2 + $0x320] sm:$0xff]
      %v4232 = vld [vmem:[#allocation2 + $0x328] sm:$0xff]
      %v4233 = vld [vmem:[#allocation2 + $0x330] sm:$0xff]
      %v4234 = vld [vmem:[#allocation2 + $0x338] sm:$0xff]
      %v4235 = vld [vmem:[#allocation2 + $0x340] sm:$0xff]
      %v4236 = vld [vmem:[#allocation2 + $0x348] sm:$0xff]
      %v4237 = vld [vmem:[#allocation2 + $0x350] sm:$0xff]
      %v4238 = vld [vmem:[#allocation2 + $0x358] sm:$0xff]
      %v4239 = vld [vmem:[#allocation2 + $0x360] sm:$0xff]
      %v4240 = vld [vmem:[#allocation2 + $0x368] sm:$0xff]
      %v4241 = vld [vmem:[#allocation2 + $0x370] sm:$0xff]
      %v4242 = vld [vmem:[#allocation2 + $0x378] sm:$0xff]
      %v4243 = vld [vmem:[#allocation2 + $0x380] sm:$0xff]
      %v4244 = vld [vmem:[#allocation2 + $0x388] sm:$0xff]
      %v4245 = vld [vmem:[#allocation2 + $0x390] sm:$0xff]
      %v4246 = vld [vmem:[#allocation2 + $0x398] sm:$0xff]
      %v4248 = vunpack.c.h.b16 %v2730
      %v4249 = vpack.c.b16 %v4248, %v4248
      %v4302 = vunpack.c.l.b16 %v4195
      %v4303 = vunpack.c.h.b16 %v4195
      %v4304 = vunpack.c.l.b16 %v4196
      %v4305 = vunpack.c.h.b16 %v4196
      %v4306 = vunpack.c.l.b16 %v4197
      %v4307 = vunpack.c.h.b16 %v4197
      %v4308 = vunpack.c.l.b16 %v4198
      %v4309 = vunpack.c.h.b16 %v4198
      %v4310 = vunpack.c.l.b16 %v4199
      %v4311 = vunpack.c.h.b16 %v4199
      %v4312 = vunpack.c.l.b16 %v4200
      %v4313 = vunpack.c.h.b16 %v4200
      %v4314 = vunpack.c.l.b16 %v4201
      %v4315 = vunpack.c.h.b16 %v4201
      %v4316 = vunpack.c.l.b16 %v4202
      %v4317 = vunpack.c.h.b16 %v4202
      %v4318 = vunpack.c.l.b16 %v4203
      %v4319 = vunpack.c.h.b16 %v4203
      %v4320 = vunpack.c.l.b16 %v4204
      %v4321 = vunpack.c.h.b16 %v4204
      %v4322 = vunpack.c.l.b16 %v4205
      %v4323 = vunpack.c.h.b16 %v4205
      %v4324 = vunpack.c.l.b16 %v4206
      %v4325 = vunpack.c.h.b16 %v4206
      %v4326 = vunpack.c.l.b16 %v4207
      %v4327 = vunpack.c.h.b16 %v4207
      %v4328 = vunpack.c.l.b16 %v4208
      %v4329 = vunpack.c.h.b16 %v4208
      %v4330 = vunpack.c.l.b16 %v4209
      %v4331 = vunpack.c.h.b16 %v4209
      %v4332 = vunpack.c.l.b16 %v4210
      %v4333 = vunpack.c.h.b16 %v4210
      %v4334 = vunpack.c.l.b16 %v4211
      %v4335 = vunpack.c.h.b16 %v4211
      %v4336 = vunpack.c.l.b16 %v4212
      %v4337 = vunpack.c.h.b16 %v4212
      %v4338 = vunpack.c.l.b16 %v4213
      %v4339 = vunpack.c.h.b16 %v4213
      %v4340 = vunpack.c.l.b16 %v4214
      %v4341 = vunpack.c.h.b16 %v4214
      %v4342 = vunpack.c.l.b16 %v4215
      %v4343 = vunpack.c.h.b16 %v4215
      %v4344 = vunpack.c.l.b16 %v4216
      %v4345 = vunpack.c.h.b16 %v4216
      %v4346 = vunpack.c.l.b16 %v4217
      %v4347 = vunpack.c.h.b16 %v4217
      %v4348 = vunpack.c.l.b16 %v4218
      %v4349 = vunpack.c.h.b16 %v4218
      %v4350 = vunpack.c.l.b16 %v4219
      %v4351 = vunpack.c.h.b16 %v4219
      %v4352 = vunpack.c.l.b16 %v4220
      %v4353 = vunpack.c.h.b16 %v4220
      %v4354 = vunpack.c.l.b16 %v4221
      %v4355 = vunpack.c.h.b16 %v4221
      %v4356 = vunpack.c.l.b16 %v4222
      %v4357 = vunpack.c.h.b16 %v4222
      %v4358 = vunpack.c.l.b16 %v4223
      %v4359 = vunpack.c.h.b16 %v4223
      %v4360 = vunpack.c.l.b16 %v4224
      %v4361 = vunpack.c.h.b16 %v4224
      %v4362 = vunpack.c.l.b16 %v4225
      %v4363 = vunpack.c.h.b16 %v4225
      %v4364 = vunpack.c.l.b16 %v4226
      %v4365 = vunpack.c.h.b16 %v4226
      %v4366 = vunpack.c.l.b16 %v4227
      %v4367 = vunpack.c.h.b16 %v4227
      %v4368 = vunpack.c.l.b16 %v4228
      %v4369 = vunpack.c.h.b16 %v4228
      %v4370 = vunpack.c.l.b16 %v4229
      %v4371 = vunpack.c.h.b16 %v4229
      %v4372 = vunpack.c.l.b16 %v4230
      %v4373 = vunpack.c.h.b16 %v4230
      %v4374 = vunpack.c.l.b16 %v4231
      %v4375 = vunpack.c.h.b16 %v4231
      %v4376 = vunpack.c.l.b16 %v4232
      %v4377 = vunpack.c.h.b16 %v4232
      %v4378 = vunpack.c.l.b16 %v4233
      %v4379 = vunpack.c.h.b16 %v4233
      %v4380 = vunpack.c.l.b16 %v4234
      %v4381 = vunpack.c.h.b16 %v4234
      %v4382 = vunpack.c.l.b16 %v4235
      %v4383 = vunpack.c.h.b16 %v4235
      %v4384 = vunpack.c.l.b16 %v4236
      %v4385 = vunpack.c.h.b16 %v4236
      %v4386 = vunpack.c.l.b16 %v4237
      %v4387 = vunpack.c.h.b16 %v4237
      %v4388 = vunpack.c.l.b16 %v4238
      %v4389 = vunpack.c.h.b16 %v4238
      %v4390 = vunpack.c.l.b16 %v4239
      %v4391 = vunpack.c.h.b16 %v4239
      %v4392 = vunpack.c.l.b16 %v4240
      %v4393 = vunpack.c.h.b16 %v4240
      %v4394 = vunpack.c.l.b16 %v4241
      %v4395 = vunpack.c.h.b16 %v4241
      %v4396 = vunpack.c.l.b16 %v4242
      %v4397 = vunpack.c.h.b16 %v4242
      %v4398 = vunpack.c.l.b16 %v4243
      %v4399 = vunpack.c.h.b16 %v4243
      %v4400 = vunpack.c.l.b16 %v4244
      %v4401 = vunpack.c.h.b16 %v4244
      %v4402 = vunpack.c.l.b16 %v4245
      %v4403 = vunpack.c.h.b16 %v4245
      %v4404 = vunpack.c.l.b16 %v4246
      %v4405 = vunpack.c.h.b16 %v4246
      %v4406 = vpack.c.b16 %v4310, %v4302
      %v4407 = vpack.c.b16 %v4311, %v4303
      %v4408 = vpack.c.b16 %v4312, %v4304
      %v4409 = vpack.c.b16 %v4313, %v4305
      %v4410 = vpack.c.b16 %v4314, %v4306
      %v4411 = vpack.c.b16 %v4315, %v4307
      %v4412 = vpack.c.b16 %v4316, %v4308
      %v4413 = vpack.c.b16 %v4317, %v4309
      %v4414 = vpack.c.b16 %v4326, %v4318
      %v4415 = vpack.c.b16 %v4327, %v4319
      %v4416 = vpack.c.b16 %v4328, %v4320
      %v4417 = vpack.c.b16 %v4329, %v4321
      %v4418 = vpack.c.b16 %v4330, %v4322
      %v4419 = vpack.c.b16 %v4331, %v4323
      %v4420 = vpack.c.b16 %v4332, %v4324
      %v4421 = vpack.c.b16 %v4333, %v4325
      %v4422 = vpack.c.b16 %v4342, %v4334
      %v4423 = vpack.c.b16 %v4343, %v4335
      %v4424 = vpack.c.b16 %v4344, %v4336
      %v4425 = vpack.c.b16 %v4345, %v4337
      %v4426 = vpack.c.b16 %v4346, %v4338
      %v4427 = vpack.c.b16 %v4347, %v4339
      %v4428 = vpack.c.b16 %v4348, %v4340
      %v4429 = vpack.c.b16 %v4349, %v4341
      %v4430 = vpack.c.b16 %v4358, %v4350
      %v4431 = vpack.c.b16 %v4359, %v4351
      %v4432 = vpack.c.b16 %v4360, %v4352
      %v4433 = vpack.c.b16 %v4361, %v4353
      %v4434 = vpack.c.b16 %v4362, %v4354
      %v4435 = vpack.c.b16 %v4363, %v4355
      %v4436 = vpack.c.b16 %v4364, %v4356
      %v4437 = vpack.c.b16 %v4365, %v4357
      %v4438 = vpack.c.b16 %v4374, %v4366
      %v4439 = vpack.c.b16 %v4375, %v4367
      %v4440 = vpack.c.b16 %v4376, %v4368
      %v4441 = vpack.c.b16 %v4377, %v4369
      %v4442 = vpack.c.b16 %v4378, %v4370
      %v4443 = vpack.c.b16 %v4379, %v4371
      %v4444 = vpack.c.b16 %v4380, %v4372
      %v4445 = vpack.c.b16 %v4381, %v4373
      %v4446 = vpack.c.b16 %v4390, %v4382
      %v4447 = vpack.c.b16 %v4391, %v4383
      %v4448 = vpack.c.b16 %v4392, %v4384
      %v4449 = vpack.c.b16 %v4393, %v4385
      %v4450 = vpack.c.b16 %v4394, %v4386
      %v4451 = vpack.c.b16 %v4395, %v4387
      %v4452 = vpack.c.b16 %v4396, %v4388
      %v4453 = vpack.c.b16 %v4397, %v4389
      %v4454 = vpack.c.b16 %v4398, %v4398
      %v4455 = vpack.c.b16 %v4399, %v4399
      %v4456 = vpack.c.b16 %v4400, %v4400
      %v4457 = vpack.c.b16 %v4401, %v4401
      %v4458 = vpack.c.b16 %v4402, %v4402
      %v4459 = vpack.c.b16 %v4403, %v4403
      %v4460 = vpack.c.b16 %v4404, %v4404
      %v4461 = vpack.c.b16 %v4405, %v4405
      %v4511 = vsel %vm2017, %v4249, 0
      %v4514 = vsel %vm2021, %v4454, 0
      %v4517 = vsel %vm2021, %v4455, 0
      %v4520 = vsel %vm2021, %v4456, 0
      %v4523 = vsel %vm2021, %v4457, 0
      %v4526 = vsel %vm2021, %v4458, 0
      %v4529 = vsel %vm2021, %v4459, 0
      %v4532 = vsel %vm2021, %v4460, 0
      %v4535 = vsel %vm2021, %v4461, 0
      %4537 = vmatprep.subr.bf16.mxu0 0
      %4538 = vmatpush1.bf16.msra.mxu0 0
      %4539 = vmatprep.subr.bf16.mxu0 %v4517
      %4540 = vmatpush1.bf16.msra.mxu0 %v4514
      %4541 = vmatprep.subr.bf16.mxu0 %v4447
      %4542 = vmatpush1.bf16.msra.mxu0 %v4446
      %4543 = vmatprep.subr.bf16.mxu0 %v4439
      %4544 = vmatpush1.bf16.msra.mxu0 %v4438
      %4545 = vmatprep.subr.bf16.mxu0 %v4431
      %4546 = vmatpush1.bf16.msra.mxu0 %v4430
      %4547 = vmatprep.subr.bf16.mxu0 %v4423
      %4548 = vmatpush1.bf16.msra.mxu0 %v4422
      %4549 = vmatprep.subr.bf16.mxu0 %v4415
      %4550 = vmatpush1.bf16.msra.mxu0 %v4414
      %4551 = vmatprep.subr.bf16.mxu0 %v4407
      %4552 = vmatpush1.bf16.msra.mxu0 %v4406
      %4553 = vmatprep.subr.bf16.mxu0 0
      %4554 = vmatpush2.bf16.msra.mxu0 0
      %4555 = vmatprep.subr.bf16.mxu0 0
      %4556 = vmatpush2.bf16.msra.mxu0 0
      %4557 = vmatprep.subr.bf16.mxu0 0
      %4558 = vmatpush2.bf16.msra.mxu0 0
      %4559 = vmatprep.subr.bf16.mxu0 0
      %4560 = vmatpush2.bf16.msra.mxu0 0
      %4561 = vmatprep.subr.bf16.mxu0 0
      %4562 = vmatpush2.bf16.msra.mxu0 0
      %4563 = vmatprep.subr.bf16.mxu0 0
      %4564 = vmatpush2.bf16.msra.mxu0 0
      %4565 = vmatprep.subr.bf16.mxu0 0
      %4566 = vmatpush2.bf16.msra.mxu0 0
      %4567 = vmatprep.subr.bf16.mxu0 0
      %4568 = vmatpush2.bf16.msra.mxu0 0
      %4569 = vmatprep.mubr.bf16.mxu0 0
      %4570 = vmatmul.mubr.bf16.gmra.mxu0 %v4511
      %v4571 = vpop.f32.mrf.mxu0
      %v4572 = vadd.f32 0.0, %v4571
      %v4573 = vpop.f32.mrf.mxu0
      %v4574 = vadd.f32 0.0, %v4573
      %v4575 = vpop.f32.mrf.mxu0
      %v4576 = vpop.f32.mrf.mxu0
      %4577 = vdwg.mxu0
      %4578 = vmatprep.subr.bf16.mxu0 0
      %4579 = vmatpush1.bf16.msra.mxu0 0
      %4580 = vmatprep.subr.bf16.mxu0 %v4523
      %4581 = vmatpush1.bf16.msra.mxu0 %v4520
      %4582 = vmatprep.subr.bf16.mxu0 %v4449
      %4583 = vmatpush1.bf16.msra.mxu0 %v4448
      %4584 = vmatprep.subr.bf16.mxu0 %v4441
      %4585 = vmatpush1.bf16.msra.mxu0 %v4440
      %4586 = vmatprep.subr.bf16.mxu0 %v4433
      %4587 = vmatpush1.bf16.msra.mxu0 %v4432
      %4588 = vmatprep.subr.bf16.mxu0 %v4425
      %4589 = vmatpush1.bf16.msra.mxu0 %v4424
      %4590 = vmatprep.subr.bf16.mxu0 %v4417
      %4591 = vmatpush1.bf16.msra.mxu0 %v4416
      %4592 = vmatprep.subr.bf16.mxu0 %v4409
      %4593 = vmatpush1.bf16.msra.mxu0 %v4408
      %4594 = vmatprep.subr.bf16.mxu0 0
      %4595 = vmatpush2.bf16.msra.mxu0 0
      %4596 = vmatprep.subr.bf16.mxu0 0
      %4597 = vmatpush2.bf16.msra.mxu0 0
      %4598 = vmatprep.subr.bf16.mxu0 0
      %4599 = vmatpush2.bf16.msra.mxu0 0
      %4600 = vmatprep.subr.bf16.mxu0 0
      %4601 = vmatpush2.bf16.msra.mxu0 0
      %4602 = vmatprep.subr.bf16.mxu0 0
      %4603 = vmatpush2.bf16.msra.mxu0 0
      %4604 = vmatprep.subr.bf16.mxu0 0
      %4605 = vmatpush2.bf16.msra.mxu0 0
      %4606 = vmatprep.subr.bf16.mxu0 0
      %4607 = vmatpush2.bf16.msra.mxu0 0
      %4608 = vmatprep.subr.bf16.mxu0 0
      %4609 = vmatpush2.bf16.msra.mxu0 0
      %4610 = vmatprep.mubr.bf16.mxu0 0
      %4611 = vmatmul.mubr.bf16.gmra.mxu0 %v4511
      %v4612 = vpop.f32.mrf.mxu0
      %v4613 = vadd.f32 0.0, %v4612
      %v4614 = vpop.f32.mrf.mxu0
      %v4615 = vadd.f32 0.0, %v4614
      %v4616 = vpop.f32.mrf.mxu0
      %v4617 = vpop.f32.mrf.mxu0
      %4618 = vdwg.mxu0
      %4619 = vmatprep.subr.bf16.mxu0 0
      %4620 = vmatpush1.bf16.msra.mxu0 0
      %4621 = vmatprep.subr.bf16.mxu0 %v4529
      %4622 = vmatpush1.bf16.msra.mxu0 %v4526
      %4623 = vmatprep.subr.bf16.mxu0 %v4451
      %4624 = vmatpush1.bf16.msra.mxu0 %v4450
      %4625 = vmatprep.subr.bf16.mxu0 %v4443
      %4626 = vmatpush1.bf16.msra.mxu0 %v4442
      %4627 = vmatprep.subr.bf16.mxu0 %v4435
      %4628 = vmatpush1.bf16.msra.mxu0 %v4434
      %4629 = vmatprep.subr.bf16.mxu0 %v4427
      %4630 = vmatpush1.bf16.msra.mxu0 %v4426
      %4631 = vmatprep.subr.bf16.mxu0 %v4419
      %4632 = vmatpush1.bf16.msra.mxu0 %v4418
      %4633 = vmatprep.subr.bf16.mxu0 %v4411
      %4634 = vmatpush1.bf16.msra.mxu0 %v4410
      %4635 = vmatprep.subr.bf16.mxu0 0
      %4636 = vmatpush2.bf16.msra.mxu0 0
      %4637 = vmatprep.subr.bf16.mxu0 0
      %4638 = vmatpush2.bf16.msra.mxu0 0
      %4639 = vmatprep.subr.bf16.mxu0 0
      %4640 = vmatpush2.bf16.msra.mxu0 0
      %4641 = vmatprep.subr.bf16.mxu0 0
      %4642 = vmatpush2.bf16.msra.mxu0 0
      %4643 = vmatprep.subr.bf16.mxu0 0
      %4644 = vmatpush2.bf16.msra.mxu0 0
      %4645 = vmatprep.subr.bf16.mxu0 0
      %4646 = vmatpush2.bf16.msra.mxu0 0
      %4647 = vmatprep.subr.bf16.mxu0 0
      %4648 = vmatpush2.bf16.msra.mxu0 0
      %4649 = vmatprep.subr.bf16.mxu0 0
      %4650 = vmatpush2.bf16.msra.mxu0 0
      %4651 = vmatprep.mubr.bf16.mxu0 0
      %4652 = vmatmul.mubr.bf16.gmra.mxu0 %v4511
      %v4653 = vpop.f32.mrf.mxu0
      %v4654 = vadd.f32 0.0, %v4653
      %v4655 = vpop.f32.mrf.mxu0
      %v4656 = vadd.f32 0.0, %v4655
      %v4657 = vpop.f32.mrf.mxu0
      %v4658 = vpop.f32.mrf.mxu0
      %4659 = vdwg.mxu0
      %4660 = vmatprep.subr.bf16.mxu0 0
      %4661 = vmatpush1.bf16.msra.mxu0 0
      %4662 = vmatprep.subr.bf16.mxu0 %v4535
      %4663 = vmatpush1.bf16.msra.mxu0 %v4532
      %4664 = vmatprep.subr.bf16.mxu0 %v4453
      %4665 = vmatpush1.bf16.msra.mxu0 %v4452
      %4666 = vmatprep.subr.bf16.mxu0 %v4445
      %4667 = vmatpush1.bf16.msra.mxu0 %v4444
      %4668 = vmatprep.subr.bf16.mxu0 %v4437
      %4669 = vmatpush1.bf16.msra.mxu0 %v4436
      %4670 = vmatprep.subr.bf16.mxu0 %v4429
      %4671 = vmatpush1.bf16.msra.mxu0 %v4428
      %4672 = vmatprep.subr.bf16.mxu0 %v4421
      %4673 = vmatpush1.bf16.msra.mxu0 %v4420
      %4674 = vmatprep.subr.bf16.mxu0 %v4413
      %4675 = vmatpush1.bf16.msra.mxu0 %v4412
      %4676 = vmatprep.subr.bf16.mxu0 0
      %4677 = vmatpush2.bf16.msra.mxu0 0
      %4678 = vmatprep.subr.bf16.mxu0 0
      %4679 = vmatpush2.bf16.msra.mxu0 0
      %4680 = vmatprep.subr.bf16.mxu0 0
      %4681 = vmatpush2.bf16.msra.mxu0 0
      %4682 = vmatprep.subr.bf16.mxu0 0
      %4683 = vmatpush2.bf16.msra.mxu0 0
      %4684 = vmatprep.subr.bf16.mxu0 0
      %4685 = vmatpush2.bf16.msra.mxu0 0
      %4686 = vmatprep.subr.bf16.mxu0 0
      %4687 = vmatpush2.bf16.msra.mxu0 0
      %4688 = vmatprep.subr.bf16.mxu0 0
      %4689 = vmatpush2.bf16.msra.mxu0 0
      %4690 = vmatprep.subr.bf16.mxu0 0
      %4691 = vmatpush2.bf16.msra.mxu0 0
      %4692 = vmatprep.mubr.bf16.mxu0 0
      %4693 = vmatmul.mubr.bf16.gmra.mxu0 %v4511
      %v4694 = vpop.f32.mrf.mxu0
      %v4695 = vadd.f32 0.0, %v4694
      %v4696 = vpop.f32.mrf.mxu0
      %v4697 = vadd.f32 0.0, %v4696
      %v4698 = vpop.f32.mrf.mxu0
      %v4699 = vpop.f32.mrf.mxu0
      %4700 = vdwg.mxu0
      %v4757 = vunpack.c.l.b16 %v3435
      %v4758 = vunpack.c.h.b16 %v3435
      %v4759 = vunpack.c.l.b16 %v3436
      %v4760 = vunpack.c.h.b16 %v3436
      %v4761 = vunpack.c.l.b16 %v3437
      %v4762 = vunpack.c.h.b16 %v3437
      %v4763 = vunpack.c.l.b16 %v3438
      %v4764 = vunpack.c.h.b16 %v3438
      %v4765 = vunpack.c.l.b16 %v3439
      %v4766 = vunpack.c.h.b16 %v3439
      %v4767 = vunpack.c.l.b16 %v3440
      %v4768 = vunpack.c.h.b16 %v3440
      %v4769 = vunpack.c.l.b16 %v3441
      %v4770 = vunpack.c.h.b16 %v3441
      %v4771 = vunpack.c.l.b16 %v3442
      %v4772 = vunpack.c.h.b16 %v3442
      %v4773 = vunpack.c.l.b16 %v3443
      %v4774 = vunpack.c.h.b16 %v3443
      %v4775 = vunpack.c.l.b16 %v3444
      %v4776 = vunpack.c.h.b16 %v3444
      %v4777 = vunpack.c.l.b16 %v3445
      %v4778 = vunpack.c.h.b16 %v3445
      %v4779 = vunpack.c.l.b16 %v3446
      %v4780 = vunpack.c.h.b16 %v3446
      %v4781 = vunpack.c.l.b16 %v3447
      %v4782 = vunpack.c.h.b16 %v3447
      %v4783 = vunpack.c.l.b16 %v3448
      %v4784 = vunpack.c.h.b16 %v3448
      %v4785 = vunpack.c.l.b16 %v3449
      %v4786 = vunpack.c.h.b16 %v3449
      %v4787 = vunpack.c.l.b16 %v3450
      %v4788 = vunpack.c.h.b16 %v3450
      %v4789 = vunpack.c.l.b16 %v3451
      %v4790 = vunpack.c.h.b16 %v3451
      %v4791 = vunpack.c.l.b16 %v3452
      %v4792 = vunpack.c.h.b16 %v3452
      %v4793 = vunpack.c.l.b16 %v3453
      %v4794 = vunpack.c.h.b16 %v3453
      %v4795 = vunpack.c.l.b16 %v3454
      %v4796 = vunpack.c.h.b16 %v3454
      %v4797 = vunpack.c.l.b16 %v3455
      %v4798 = vunpack.c.h.b16 %v3455
      %v4799 = vunpack.c.l.b16 %v3456
      %v4800 = vunpack.c.h.b16 %v3456
      %v4801 = vunpack.c.l.b16 %v3457
      %v4802 = vunpack.c.h.b16 %v3457
      %v4803 = vunpack.c.l.b16 %v3458
      %v4804 = vunpack.c.h.b16 %v3458
      %v4805 = vunpack.c.l.b16 %v3459
      %v4806 = vunpack.c.h.b16 %v3459
      %v4807 = vunpack.c.l.b16 %v3460
      %v4808 = vunpack.c.h.b16 %v3460
      %v4809 = vunpack.c.l.b16 %v3461
      %v4810 = vunpack.c.h.b16 %v3461
      %v4811 = vunpack.c.l.b16 %v3462
      %v4812 = vunpack.c.h.b16 %v3462
      %v4813 = vunpack.c.l.b16 %v3463
      %v4814 = vunpack.c.h.b16 %v3463
      %v4815 = vunpack.c.l.b16 %v3464
      %v4816 = vunpack.c.h.b16 %v3464
      %v4817 = vunpack.c.l.b16 %v3465
      %v4818 = vunpack.c.h.b16 %v3465
      %v4819 = vunpack.c.l.b16 %v3466
      %v4820 = vunpack.c.h.b16 %v3466
      %v4821 = vunpack.c.l.b16 %v3467
      %v4822 = vunpack.c.h.b16 %v3467
      %v4823 = vunpack.c.l.b16 %v3468
      %v4824 = vunpack.c.h.b16 %v3468
      %v4825 = vunpack.c.l.b16 %v3469
      %v4826 = vunpack.c.h.b16 %v3469
      %v4827 = vunpack.c.l.b16 %v3470
      %v4828 = vunpack.c.h.b16 %v3470
      %v4829 = vunpack.c.l.b16 %v3471
      %v4830 = vunpack.c.h.b16 %v3471
      %v4831 = vunpack.c.l.b16 %v3472
      %v4832 = vunpack.c.h.b16 %v3472
      %v4833 = vunpack.c.l.b16 %v3473
      %v4834 = vunpack.c.h.b16 %v3473
      %v4835 = vunpack.c.l.b16 %v3474
      %v4836 = vunpack.c.h.b16 %v3474
      %v4837 = vunpack.c.l.b16 %v3475
      %v4838 = vunpack.c.h.b16 %v3475
      %v4839 = vunpack.c.l.b16 %v3476
      %v4840 = vunpack.c.h.b16 %v3476
      %v4841 = vunpack.c.l.b16 %v3477
      %v4842 = vunpack.c.h.b16 %v3477
      %v4843 = vunpack.c.l.b16 %v3478
      %v4844 = vunpack.c.h.b16 %v3478
      %v4845 = vunpack.c.l.b16 %v3479
      %v4846 = vunpack.c.h.b16 %v3479
      %v4847 = vunpack.c.l.b16 %v3480
      %v4848 = vunpack.c.h.b16 %v3480
      %v4849 = vunpack.c.l.b16 %v3481
      %v4850 = vunpack.c.h.b16 %v3481
      %v4851 = vunpack.c.l.b16 %v3482
      %v4852 = vunpack.c.h.b16 %v3482
      %v4853 = vunpack.c.l.b16 %v3483
      %v4854 = vunpack.c.h.b16 %v3483
      %v4855 = vunpack.c.l.b16 %v3484
      %v4856 = vunpack.c.h.b16 %v3484
      %v4857 = vunpack.c.l.b16 %v3485
      %v4858 = vunpack.c.h.b16 %v3485
      %v4859 = vunpack.c.l.b16 %v3486
      %v4860 = vunpack.c.h.b16 %v3486
      %v4861 = vunpack.c.l.b16 %v3487
      %v4862 = vunpack.c.h.b16 %v3487
      %v4863 = vunpack.c.l.b16 %v3488
      %v4864 = vunpack.c.h.b16 %v3488
      %v4865 = vunpack.c.l.b16 %v3489
      %v4866 = vunpack.c.h.b16 %v3489
      %v4867 = vunpack.c.l.b16 %v3490
      %v4868 = vunpack.c.h.b16 %v3490
      %v4869 = vpack.c.b16 %v4765, %v4757
      %v4870 = vpack.c.b16 %v4766, %v4758
      %v4871 = vpack.c.b16 %v4767, %v4759
      %v4872 = vpack.c.b16 %v4768, %v4760
      %v4873 = vpack.c.b16 %v4769, %v4761
      %v4874 = vpack.c.b16 %v4770, %v4762
      %v4875 = vpack.c.b16 %v4771, %v4763
      %v4876 = vpack.c.b16 %v4772, %v4764
      %v4877 = vpack.c.b16 %v4781, %v4773
      %v4878 = vpack.c.b16 %v4782, %v4774
      %v4879 = vpack.c.b16 %v4783, %v4775
      %v4880 = vpack.c.b16 %v4784, %v4776
      %v4881 = vpack.c.b16 %v4785, %v4777
      %v4882 = vpack.c.b16 %v4786, %v4778
      %v4883 = vpack.c.b16 %v4787, %v4779
      %v4884 = vpack.c.b16 %v4788, %v4780
      %v4885 = vpack.c.b16 %v4797, %v4789
      %v4886 = vpack.c.b16 %v4798, %v4790
      %v4887 = vpack.c.b16 %v4799, %v4791
      %v4888 = vpack.c.b16 %v4800, %v4792
      %v4889 = vpack.c.b16 %v4801, %v4793
      %v4890 = vpack.c.b16 %v4802, %v4794
      %v4891 = vpack.c.b16 %v4803, %v4795
      %v4892 = vpack.c.b16 %v4804, %v4796
      %v4893 = vpack.c.b16 %v4813, %v4805
      %v4894 = vpack.c.b16 %v4814, %v4806
      %v4895 = vpack.c.b16 %v4815, %v4807
      %v4896 = vpack.c.b16 %v4816, %v4808
      %v4897 = vpack.c.b16 %v4817, %v4809
      %v4898 = vpack.c.b16 %v4818, %v4810
      %v4899 = vpack.c.b16 %v4819, %v4811
      %v4900 = vpack.c.b16 %v4820, %v4812
      %v4901 = vpack.c.b16 %v4829, %v4821
      %v4902 = vpack.c.b16 %v4830, %v4822
      %v4903 = vpack.c.b16 %v4831, %v4823
      %v4904 = vpack.c.b16 %v4832, %v4824
      %v4905 = vpack.c.b16 %v4833, %v4825
      %v4906 = vpack.c.b16 %v4834, %v4826
      %v4907 = vpack.c.b16 %v4835, %v4827
      %v4908 = vpack.c.b16 %v4836, %v4828
      %v4909 = vpack.c.b16 %v4845, %v4837
      %v4910 = vpack.c.b16 %v4846, %v4838
      %v4911 = vpack.c.b16 %v4847, %v4839
      %v4912 = vpack.c.b16 %v4848, %v4840
      %v4913 = vpack.c.b16 %v4849, %v4841
      %v4914 = vpack.c.b16 %v4850, %v4842
      %v4915 = vpack.c.b16 %v4851, %v4843
      %v4916 = vpack.c.b16 %v4852, %v4844
      %v4917 = vpack.c.b16 %v4861, %v4853
      %v4918 = vpack.c.b16 %v4862, %v4854
      %v4919 = vpack.c.b16 %v4863, %v4855
      %v4920 = vpack.c.b16 %v4864, %v4856
      %v4921 = vpack.c.b16 %v4865, %v4857
      %v4922 = vpack.c.b16 %v4866, %v4858
      %v4923 = vpack.c.b16 %v4867, %v4859
      %v4924 = vpack.c.b16 %v4868, %v4860
      %v4982 = vsel %vm2490, %v2730, 0
      %4984 = vmatprep.subr.bf16.mxu0 0
      %4985 = vmatpush1.bf16.msra.mxu0 0
      %4986 = vmatprep.subr.bf16.mxu0 %v4918
      %4987 = vmatpush1.bf16.msra.mxu0 %v4917
      %4988 = vmatprep.subr.bf16.mxu0 %v4910
      %4989 = vmatpush1.bf16.msra.mxu0 %v4909
      %4990 = vmatprep.subr.bf16.mxu0 %v4902
      %4991 = vmatpush1.bf16.msra.mxu0 %v4901
      %4992 = vmatprep.subr.bf16.mxu0 %v4894
      %4993 = vmatpush1.bf16.msra.mxu0 %v4893
      %4994 = vmatprep.subr.bf16.mxu0 %v4886
      %4995 = vmatpush1.bf16.msra.mxu0 %v4885
      %4996 = vmatprep.subr.bf16.mxu0 %v4878
      %4997 = vmatpush1.bf16.msra.mxu0 %v4877
      %4998 = vmatprep.subr.bf16.mxu0 %v4870
      %4999 = vmatpush1.bf16.msra.mxu0 %v4869
      %5000 = vmatprep.subr.bf16.mxu0 0
      %5001 = vmatpush2.bf16.msra.mxu0 0
      %5002 = vmatprep.subr.bf16.mxu0 0
      %5003 = vmatpush2.bf16.msra.mxu0 0
      %5004 = vmatprep.subr.bf16.mxu0 0
      %5005 = vmatpush2.bf16.msra.mxu0 0
      %5006 = vmatprep.subr.bf16.mxu0 0
      %5007 = vmatpush2.bf16.msra.mxu0 0
      %5008 = vmatprep.subr.bf16.mxu0 0
      %5009 = vmatpush2.bf16.msra.mxu0 0
      %5010 = vmatprep.subr.bf16.mxu0 0
      %5011 = vmatpush2.bf16.msra.mxu0 0
      %5012 = vmatprep.subr.bf16.mxu0 0
      %5013 = vmatpush2.bf16.msra.mxu0 0
      %5014 = vmatprep.subr.bf16.mxu0 0
      %5015 = vmatpush2.bf16.msra.mxu0 0
      %5016 = vmatprep.mubr.bf16.mxu0 0
      %5017 = vmatmul.mubr.bf16.gmra.mxu0 %v4982
      %v5018 = vpop.f32.mrf.mxu0
      %v5019 = vadd.f32 %v4572, %v5018
      %v5020 = vpop.f32.mrf.mxu0
      %v5021 = vadd.f32 %v4574, %v5020
      %v5022 = vpop.f32.mrf.mxu0
      %v5023 = vpop.f32.mrf.mxu0
      %5024 = vdwg.mxu0
      %5025 = vmatprep.subr.bf16.mxu0 0
      %5026 = vmatpush1.bf16.msra.mxu0 0
      %5027 = vmatprep.subr.bf16.mxu0 %v4920
      %5028 = vmatpush1.bf16.msra.mxu0 %v4919
      %5029 = vmatprep.subr.bf16.mxu0 %v4912
      %5030 = vmatpush1.bf16.msra.mxu0 %v4911
      %5031 = vmatprep.subr.bf16.mxu0 %v4904
      %5032 = vmatpush1.bf16.msra.mxu0 %v4903
      %5033 = vmatprep.subr.bf16.mxu0 %v4896
      %5034 = vmatpush1.bf16.msra.mxu0 %v4895
      %5035 = vmatprep.subr.bf16.mxu0 %v4888
      %5036 = vmatpush1.bf16.msra.mxu0 %v4887
      %5037 = vmatprep.subr.bf16.mxu0 %v4880
      %5038 = vmatpush1.bf16.msra.mxu0 %v4879
      %5039 = vmatprep.subr.bf16.mxu0 %v4872
      %5040 = vmatpush1.bf16.msra.mxu0 %v4871
      %5041 = vmatprep.subr.bf16.mxu0 0
      %5042 = vmatpush2.bf16.msra.mxu0 0
      %5043 = vmatprep.subr.bf16.mxu0 0
      %5044 = vmatpush2.bf16.msra.mxu0 0
      %5045 = vmatprep.subr.bf16.mxu0 0
      %5046 = vmatpush2.bf16.msra.mxu0 0
      %5047 = vmatprep.subr.bf16.mxu0 0
      %5048 = vmatpush2.bf16.msra.mxu0 0
      %5049 = vmatprep.subr.bf16.mxu0 0
      %5050 = vmatpush2.bf16.msra.mxu0 0
      %5051 = vmatprep.subr.bf16.mxu0 0
      %5052 = vmatpush2.bf16.msra.mxu0 0
      %5053 = vmatprep.subr.bf16.mxu0 0
      %5054 = vmatpush2.bf16.msra.mxu0 0
      %5055 = vmatprep.subr.bf16.mxu0 0
      %5056 = vmatpush2.bf16.msra.mxu0 0
      %5057 = vmatprep.mubr.bf16.mxu0 0
      %5058 = vmatmul.mubr.bf16.gmra.mxu0 %v4982
      %v5059 = vpop.f32.mrf.mxu0
      %v5060 = vadd.f32 %v4613, %v5059
      %v5061 = vpop.f32.mrf.mxu0
      %v5062 = vadd.f32 %v4615, %v5061
      %v5063 = vpop.f32.mrf.mxu0
      %v5064 = vpop.f32.mrf.mxu0
      %5065 = vdwg.mxu0
      %5066 = vmatprep.subr.bf16.mxu0 0
      %5067 = vmatpush1.bf16.msra.mxu0 0
      %5068 = vmatprep.subr.bf16.mxu0 %v4922
      %5069 = vmatpush1.bf16.msra.mxu0 %v4921
      %5070 = vmatprep.subr.bf16.mxu0 %v4914
      %5071 = vmatpush1.bf16.msra.mxu0 %v4913
      %5072 = vmatprep.subr.bf16.mxu0 %v4906
      %5073 = vmatpush1.bf16.msra.mxu0 %v4905
      %5074 = vmatprep.subr.bf16.mxu0 %v4898
      %5075 = vmatpush1.bf16.msra.mxu0 %v4897
      %5076 = vmatprep.subr.bf16.mxu0 %v4890
      %5077 = vmatpush1.bf16.msra.mxu0 %v4889
      %5078 = vmatprep.subr.bf16.mxu0 %v4882
      %5079 = vmatpush1.bf16.msra.mxu0 %v4881
      %5080 = vmatprep.subr.bf16.mxu0 %v4874
      %5081 = vmatpush1.bf16.msra.mxu0 %v4873
      %5082 = vmatprep.subr.bf16.mxu0 0
      %5083 = vmatpush2.bf16.msra.mxu0 0
      %5084 = vmatprep.subr.bf16.mxu0 0
      %5085 = vmatpush2.bf16.msra.mxu0 0
      %5086 = vmatprep.subr.bf16.mxu0 0
      %5087 = vmatpush2.bf16.msra.mxu0 0
      %5088 = vmatprep.subr.bf16.mxu0 0
      %5089 = vmatpush2.bf16.msra.mxu0 0
      %5090 = vmatprep.subr.bf16.mxu0 0
      %5091 = vmatpush2.bf16.msra.mxu0 0
      %5092 = vmatprep.subr.bf16.mxu0 0
      %5093 = vmatpush2.bf16.msra.mxu0 0
      %5094 = vmatprep.subr.bf16.mxu0 0
      %5095 = vmatpush2.bf16.msra.mxu0 0
      %5096 = vmatprep.subr.bf16.mxu0 0
      %5097 = vmatpush2.bf16.msra.mxu0 0
      %5098 = vmatprep.mubr.bf16.mxu0 0
      %5099 = vmatmul.mubr.bf16.gmra.mxu0 %v4982
      %v5100 = vpop.f32.mrf.mxu0
      %v5101 = vadd.f32 %v4654, %v5100
      %v5102 = vpop.f32.mrf.mxu0
      %v5103 = vadd.f32 %v4656, %v5102
      %v5104 = vpop.f32.mrf.mxu0
      %v5105 = vpop.f32.mrf.mxu0
      %5106 = vdwg.mxu0
      %5107 = vmatprep.subr.bf16.mxu0 0
      %5108 = vmatpush1.bf16.msra.mxu0 0
      %5109 = vmatprep.subr.bf16.mxu0 %v4924
      %5110 = vmatpush1.bf16.msra.mxu0 %v4923
      %5111 = vmatprep.subr.bf16.mxu0 %v4916
      %5112 = vmatpush1.bf16.msra.mxu0 %v4915
      %5113 = vmatprep.subr.bf16.mxu0 %v4908
      %5114 = vmatpush1.bf16.msra.mxu0 %v4907
      %5115 = vmatprep.subr.bf16.mxu0 %v4900
      %5116 = vmatpush1.bf16.msra.mxu0 %v4899
      %5117 = vmatprep.subr.bf16.mxu0 %v4892
      %5118 = vmatpush1.bf16.msra.mxu0 %v4891
      %5119 = vmatprep.subr.bf16.mxu0 %v4884
      %5120 = vmatpush1.bf16.msra.mxu0 %v4883
      %5121 = vmatprep.subr.bf16.mxu0 %v4876
      %5122 = vmatpush1.bf16.msra.mxu0 %v4875
      %5123 = vmatprep.subr.bf16.mxu0 0
      %5124 = vmatpush2.bf16.msra.mxu0 0
      %5125 = vmatprep.subr.bf16.mxu0 0
      %5126 = vmatpush2.bf16.msra.mxu0 0
      %5127 = vmatprep.subr.bf16.mxu0 0
      %5128 = vmatpush2.bf16.msra.mxu0 0
      %5129 = vmatprep.subr.bf16.mxu0 0
      %5130 = vmatpush2.bf16.msra.mxu0 0
      %5131 = vmatprep.subr.bf16.mxu0 0
      %5132 = vmatpush2.bf16.msra.mxu0 0
      %5133 = vmatprep.subr.bf16.mxu0 0
      %5134 = vmatpush2.bf16.msra.mxu0 0
      %5135 = vmatprep.subr.bf16.mxu0 0
      %5136 = vmatpush2.bf16.msra.mxu0 0
      %5137 = vmatprep.subr.bf16.mxu0 0
      %5138 = vmatpush2.bf16.msra.mxu0 0
      %5139 = vmatprep.mubr.bf16.mxu0 0
      %5140 = vmatmul.mubr.bf16.gmra.mxu0 %v4982
      %v5141 = vpop.f32.mrf.mxu0
      %v5142 = vadd.f32 %v4695, %v5141
      %v5143 = vpop.f32.mrf.mxu0
      %v5144 = vadd.f32 %v4697, %v5143
      %v5145 = vpop.f32.mrf.mxu0
      %v5146 = vpop.f32.mrf.mxu0
      %5147 = vdwg.mxu0
      %s5148 = scalar_lea.vmem %s2, 8
      %v5149 = vld [vmem:[%s5148] sm:$0xff]
      %5151 = vset.pattern.permute.xlu0 0
      %5152 = vperm.xlu0 %5151, %v5149
      %v5153 = vpop.permute.xlu0 %5152
      %v5155 = vadd.f32 %v5019, %v5153
      %v5156 = vadd.f32 %v5021, %v5153
      %v5157 = vadd.f32 %v5060, %v5153
      %v5158 = vadd.f32 %v5062, %v5153
      %v5159 = vadd.f32 %v5101, %v5153
      %v5160 = vadd.f32 %v5103, %v5153
      %v5161 = vadd.f32 %v5142, %v5153
      %v5162 = vadd.f32 %v5144, %v5153
      %v5163 = vld [vmem:[%s192] sm:$0xff]
      %v5164 = vld [vmem:[%s192 + $0x8] sm:$0xff]
      %v5165 = vld [vmem:[%s192 + $0x10] sm:$0xff]
      %v5166 = vld [vmem:[%s192 + $0x18] sm:$0xff]
      %v5167 = vld [vmem:[%s192 + $0x20] sm:$0xff]
      %v5168 = vld [vmem:[%s192 + $0x28] sm:$0xff]
      %v5169 = vld [vmem:[%s192 + $0x30] sm:$0xff]
      %v5170 = vld [vmem:[%s192 + $0x38] sm:$0xff]
      %v5171 = vadd.f32 %v5155, %v5163
      %v5172 = vadd.f32 %v5156, %v5164
      %v5173 = vadd.f32 %v5157, %v5165
      %v5174 = vadd.f32 %v5158, %v5166
      %v5175 = vadd.f32 %v5159, %v5167
      %v5176 = vadd.f32 %v5160, %v5168
      %v5177 = vadd.f32 %v5161, %v5169
      %v5178 = vadd.f32 %v5162, %v5170
      %v5179 = vmax.f32 %v5171, 0.0
      %v5180 = vmax.f32 %v5172, 0.0
      %v5181 = vmax.f32 %v5173, 0.0
      %v5182 = vmax.f32 %v5174, 0.0
      %v5183 = vmax.f32 %v5175, 0.0
      %v5184 = vmax.f32 %v5176, 0.0
      %v5185 = vmax.f32 %v5177, 0.0
      %v5186 = vmax.f32 %v5178, 0.0
      %5187 = vst [vmem:[%s197] sm:$0xff] %v5179
      %5188 = vst [vmem:[%s197 + $0x8] sm:$0xff] %v5180
      %5189 = vst [vmem:[%s197 + $0x10] sm:$0xff] %v5181
      %5190 = vst [vmem:[%s197 + $0x18] sm:$0xff] %v5182
      %5191 = vst [vmem:[%s197 + $0x20] sm:$0xff] %v5183
      %5192 = vst [vmem:[%s197 + $0x28] sm:$0xff] %v5184
      %5193 = vst [vmem:[%s197 + $0x30] sm:$0xff] %v5185
      %5194 = vst [vmem:[%s197 + $0x38] sm:$0xff] %v5186
      %p5195 = scmp.lt.s32.totalorder %s15, 1
      %s5196 = scalar_select %p5195, %s15, 1
      %s5197 = smul.addr %s5196, 8
      %s5198 = smul.addr %s5197, 8
      %s5199 = scalar_lea.vmem %s4, %s5198
      // Predicated region
      $region37: #{residual_conv_block.1} parent=35 // pred_check
        %p5200 = pneg %p122
      $region38: #{residual_conv_block.1} parent=35 // pred_check_branch
        %5202 = sbr.rel (%p5200) target = $region40
      $region39: #{residual_conv_block.1} parent=35 // pred_region
        _
      $region40: #{residual_conv_block.1} parent=35 // pred_fallthru
        _
    $region36: #{residual_conv_block.1} parent=5 // pred_fallthru
      _
    %p5203 = scmp.le.s32.totalorder 2, %s10
    // Predicated region
    $region41: #{residual_conv_block.1} parent=5 // pred_check
      %p5204 = pneg %p5203
    $region42: #{residual_conv_block.1} parent=5 // pred_check_branch
      %5206 = sbr.rel (%p5204) target = $region44
    $region43: #{residual_conv_block.1} parent=5 // pred_region
      %s5207 = ssub.s32 %s10, 2
      // Predicated region
      $region45: #{residual_conv_block.1} parent=43 // pred_check
        %p5208 = pneg %p128
      $region46: #{residual_conv_block.1} parent=43 // pred_check_branch
        %5210 = sbr.rel (%p5208) target = $region48
      $region47: #{residual_conv_block.1} parent=43 // pred_region
        %p5211 = scmp.lt.s32.totalorder %s16, 1
        %s5212 = scalar_select %p5211, %s16, 1
        %s5213 = smul.addr %s5212, 8
        %s5214 = smul.addr %s5213, 8
        %s5215 = scalar_lea.vmem %s4, %s5214
      $region48: #{residual_conv_block.1} parent=43 // pred_fallthru
        _
    $region44: #{residual_conv_block.1} parent=5 // pred_fallthru
      _
  $region6: #{residual_conv_block.1} parent=0 // loop_footer
    %s14 = sadd.s32 1, %s10
  $region7: #{residual_conv_block.1} parent=0 // loop_footer_branch
    %9 = sbr.rel target = $region3
  $region8: #{residual_conv_block.1} parent=0 // loop_exit
    _

</llo_original>
